<compile_context>
chip_gen: v7x
topology: tpu7x:2x2x1
jax: 0.10.0
libtpu: 0.0.40
codegen_flags: <defaults>
</compile_context>

<pallas_src>
import functools
import math

import jax
import jax.numpy as jnp
from jax.experimental import pallas as pl
from jax.experimental.pallas import tpu as pltpu

LN_EPS = 1e-7  # DeBERTa layer_norm_eps default
# Scoped-VMEM request: above the 16/32 MiB defaults, below v7x's 64 MiB
# physical per TensorCore.  (v5e/v6e have 128 MiB; raise if profiling says so.)
VMEM_LIMIT_BYTES = 48 * 1024 * 1024


def _layer_norm(x, gamma, beta):
    mu = jnp.mean(x, axis=-1, keepdims=True)
    var = jnp.mean((x - mu) ** 2, axis=-1, keepdims=True)
    return (x - mu) * jax.lax.rsqrt(var + LN_EPS) * gamma + beta


def _gelu_tanh(x):
    # hidden_act: tanh-GELU ("gelu_new") — EUP-friendly on TPU.
    # TODO(synk): DeBERTa's default 'gelu' is the exact erf variant.
    c = 0.7978845608028654  # sqrt(2/pi)
    return 0.5 * x * (1.0 + jnp.tanh(c * (x + 0.044715 * x * x * x)))


def _pick_group_size(bw, c, target_rows=512):
    """Choose word-groups per grid step.

    Returns (G, padded_bw).  Prefers a divisor of bw close to target_rows/c;
    otherwise uses target_rows/c groups and pads bw up to a multiple of it so
    an awkward/prime bw never degrades to G=1 (C-row MXU matmuls).
    """
    g_cap = max(1, target_rows // max(c, 1))
    g_cap = min(g_cap, bw)
    best_div = 1
    for g in range(1, g_cap + 1):
        if bw % g == 0:
            best_div = g
    if 2 * best_div >= g_cap:
        return best_div, bw
    padded = ((bw + g_cap - 1) // g_cap) * g_cap
    return g_cap, padded


# --------------------------------------------------------------------------
# Kernel 1: one BertLayer (self-attention + FFN, post-LN) over G word-groups.
# --------------------------------------------------------------------------
def intra_word_layer_kernel(x_ref, mask_ref,
                            bqkv_ref, bo_ref, ln1_g_ref, ln1_b_ref,
                            bi_ref, bo2_ref, ln2_g_ref, ln2_b_ref,
                            wqkv_hbm, wo_hbm, wi_hbm, wo2_hbm,
                            o_ref,
                            wqkv_v, wo_v, wi_v, wo2_v, ctx_v, dma_sem,
                            *, num_heads):
    G, C, H = x_ref.shape
    dh = H // num_heads
    cd = x_ref.dtype  # matmul-operand (compute) dtype: f32 or bf16

    # One-time weight residency: a single VMEM copy of each big matrix, loaded
    # at the first grid step and reused by every later step (no per-operand
    # double buffering of grid-invariant weights).
    @pl.when(pl.program_id(0) == 0)
    def _load_weights():
        copies = [
            pltpu.make_async_copy(wqkv_hbm, wqkv_v, dma_sem.at[0]),
            pltpu.make_async_copy(wo_hbm, wo_v, dma_sem.at[1]),
            pltpu.make_async_copy(wi_hbm, wi_v, dma_sem.at[2]),
            pltpu.make_async_copy(wo2_hbm, wo2_v, dma_sem.at[3]),
        ]
        for cp in copies:
            cp.start()
        for cp in copies:
            cp.wait()

    x = x_ref[...]                                   # (G, C, H), compute dtype
    m = mask_ref[...][:, 0, :].astype(jnp.float32)   # (G, C)
    # Pairwise mask + additive bias built once, in-kernel (hoisted out of the
    # head loop; no (BW, C, C) HBM tensor).
    mask2d = m[:, :, None] * m[:, None, :]           # (G, C, C)
    add_bias = (1.0 - mask2d) * jnp.float32(-1e30)   # 0 where valid, -1e30 else

    x2 = x.reshape(G * C, H)
    x2_f32 = x2.astype(jnp.float32)

    # Fused QKV projection: one (G*C, H) @ (H, 3H) MXU matmul, f32 accumulate.
    # 1/sqrt(dh) is pre-folded into the Q columns of wqkv / bqkv on the host.
    qkv = (jnp.dot(x2, wqkv_v[...], preferred_element_type=jnp.float32)
           + bqkv_ref[...])                          # (G*C, 3H) f32
    qkv = qkv.reshape(G, C, 3 * H).astype(cd)        # single cast, hoisted

    # Per-head scores / softmax / context, each batched over all G groups
    # (3-D dot_general with a leading batch dim).  Contexts are written into a
    # (G*C, H) VMEM scratch so the output projection below is ONE full-K GEMM.
    # TODO(synk): folding heads into the dot_general batch dim would need a
    # (C <-> heads) transpose that Mosaic may not lower; kept as a short
    # unrolled loop with hoisted mask/cast work instead.
    for h in range(num_heads):
        q_h = qkv[..., h * dh:(h + 1) * dh]                      # (G, C, dh)
        k_h = qkv[..., H + h * dh:H + (h + 1) * dh]
        v_h = qkv[..., 2 * H + h * dh:2 * H + (h + 1) * dh]

        s = jnp.einsum('gqd,gkd->gqk', q_h, k_h,
                       preferred_element_type=jnp.float32)       # (G, C, C)
        # XSoftmax: -inf on masked keys, softmax, re-zero masked entries.
        s = s + add_bias
        s = s - jnp.max(s, axis=-1, keepdims=True)
        p = jnp.exp(s)
        p = p * pl.reciprocal(jnp.sum(p, axis=-1, keepdims=True), approx=True)
        p = p * mask2d

        ctx_h = jnp.einsum('gqk,gkd->gqd', p.astype(cd), v_h,
                           preferred_element_type=jnp.float32)   # (G, C, dh)
        ctx_v[:, h * dh:(h + 1) * dh] = ctx_h.reshape(G * C, dh).astype(cd)

    # Single full-K output projection (K = H, not num_heads GEMMs with K = dh).
    attn = (jnp.dot(ctx_v[...], wo_v[...], preferred_element_type=jnp.float32)
            + bo_ref[...])
    h1 = _layer_norm(x2_f32 + attn, ln1_g_ref[...], ln1_b_ref[...])   # f32

    ffn = _gelu_tanh(jnp.dot(h1.astype(cd), wi_v[...],
                             preferred_element_type=jnp.float32) + bi_ref[...])
    ffn_out = (jnp.dot(ffn.astype(cd), wo2_v[...],
                       preferred_element_type=jnp.float32) + bo2_ref[...])
    h2 = _layer_norm(h1 + ffn_out, ln2_g_ref[...], ln2_b_ref[...])

    o_ref[...] = h2.reshape(G, C, H).astype(o_ref.dtype)


def intra_word_encoder_layer(x, mask, params, *, num_heads,
                             compute_dtype=jnp.bfloat16, target_rows=512):
    """x: (BW, C, H) activations (already in compute_dtype); mask: (BW, C)."""
    BW, C, H = x.shape
    I = params['wi'].shape[1]
    dh = H // num_heads
    scale = 1.0 / math.sqrt(dh)

    G, BW_pad = _pick_group_size(BW, C, target_rows)
    if BW_pad != BW:
        # Pad with zero activations / zero mask; padded rows produce finite
        # garbage that is sliced away below.
        x = jnp.pad(x, ((0, BW_pad - BW), (0, 0), (0, 0)))
        mask = jnp.pad(mask, ((0, BW_pad - BW), (0, 0)))

    # Pack / cast weights once per call (in production these would be packed
    # offline).  1/sqrt(dh) is folded into the Q columns here.  Biases and LN
    # params stay f32 (they are added to f32 accumulators).
    wqkv = jnp.concatenate([params['wq'] * scale, params['wk'], params['wv']],
                           axis=1).astype(compute_dtype)               # (H, 3H)
    bqkv = jnp.concatenate([params['bq'] * scale, params['bk'], params['bv']],
                           axis=1).astype(jnp.float32)                 # (1, 3H)
    wo = params['wo'].astype(compute_dtype)
    wi = params['wi'].astype(compute_dtype)
    wo2 = params['wo2'].astype(compute_dtype)

    mask3 = mask.astype(jnp.float32).reshape(BW_pad, 1, C)

    def full2d(shape):
        return pl.BlockSpec(shape, lambda i: (0, 0))

    any_spec = pl.BlockSpec(memory_space=pl.ANY)   # raw HBM ref, DMA'd manually

    in_specs = [
        pl.BlockSpec((G, C, H), lambda i: (i, 0, 0)),   # activations
        pl.BlockSpec((G, 1, C), lambda i: (i, 0, 0)),   # 1-D intra-word mask
        full2d((1, 3 * H)),                             # fused QKV bias
        full2d((1, H)),                                 # bo
        full2d((1, H)), full2d((1, H)),                 # ln1 gamma/beta
        full2d((1, I)),                                 # bi
        full2d((1, H)),                                 # bo2
        full2d((1, H)), full2d((1, H)),                 # ln2 gamma/beta
        any_spec, any_spec, any_spec, any_spec,         # wqkv, wo, wi, wo2 (HBM)
    ]
    out_spec = pl.BlockSpec((G, C, H), lambda i: (i, 0, 0))

    kernel = functools.partial(intra_word_layer_kernel, num_heads=num_heads)
    out = pl.pallas_call(
        kernel,
        out_shape=jax.ShapeDtypeStruct((BW_pad, C, H), compute_dtype),
        grid_spec=pltpu.PrefetchScalarGridSpec(
            num_scalar_prefetch=0, grid=(BW_pad // G,),
            in_specs=in_specs, out_specs=out_spec,
            scratch_shapes=[
                pltpu.VMEM((H, 3 * H), compute_dtype),   # wqkv (single copy)
                pltpu.VMEM((H, H), compute_dtype),       # wo
                pltpu.VMEM((H, I), compute_dtype),       # wi
                pltpu.VMEM((I, H), compute_dtype),       # wo2
                pltpu.VMEM((G * C, H), compute_dtype),   # per-step ctx buffer
                pltpu.SemaphoreType.DMA((4,)),
            ]),
        compiler_params=pltpu.CompilerParams(
            # "arbitrary": the one-time weight load at program_id==0 must be
            # seen by every grid step on the same core (megacore-safe).  The
            # decoder kernel below carries the v7x megacore parallelism.
            dimension_semantics=("arbitrary",),
            vmem_limit_bytes=VMEM_LIMIT_BYTES),
    )(x, mask3,
      bqkv, params['bo'].astype(jnp.float32),
      params['ln1_g'].astype(jnp.float32), params['ln1_b'].astype(jnp.float32),
      params['bi'].astype(jnp.float32), params['bo2'].astype(jnp.float32),
      params['ln2_g'].astype(jnp.float32), params['ln2_b'].astype(jnp.float32),
      wqkv, wo, wi, wo2)
    return out[:BW] if BW_pad != BW else out


# --------------------------------------------------------------------------
# Kernel 2: tied decoder  logits = hidden @ E^T + bias
#   grid = (V-tiles, M-tiles): the E^T tile is held across the inner M sweep,
#   so the (H, V) tied embedding streams from HBM exactly once.
# --------------------------------------------------------------------------
def decoder_kernel(h_ref, w_ref, b_ref, o_ref):
    acc = jnp.dot(h_ref[...], w_ref[...], preferred_element_type=jnp.float32)
    o_ref[...] = (acc + b_ref[...]).astype(o_ref.dtype)


def decoder_matmul(hidden, dec_w_t, dec_b, *, compute_dtype=jnp.bfloat16,
                   out_dtype=jnp.float32, tm=512, tn=1024):
    M, H = hidden.shape
    V = dec_w_t.shape[1]
    TM = min(tm, M)
    TN = min(tn, V)
    hidden = hidden.astype(compute_dtype)      # no-op if kernel 1 emitted bf16
    dec_w_t = dec_w_t.astype(compute_dtype)
    bias = dec_b.reshape(1, V).astype(jnp.float32)
    # TODO(synk): on v7x the tied embedding could be held in fp8 (per-column
    # scales) to halve E^T DMA traffic; not done here (needs accuracy check).
    return pl.pallas_call(
        decoder_kernel,
        out_shape=jax.ShapeDtypeStruct((M, V), out_dtype),
        grid_spec=pltpu.PrefetchScalarGridSpec(
            num_scalar_prefetch=0,
            grid=(pl.cdiv(V, TN), pl.cdiv(M, TM)),       # V outer, M inner
            in_specs=[pl.BlockSpec((TM, H), lambda v, m: (m, 0)),
                      pl.BlockSpec((H, TN), lambda v, m: (0, v)),
                      pl.BlockSpec((1, TN), lambda v, m: (0, v))],
            out_specs=pl.BlockSpec((TM, TN), lambda v, m: (m, v))),
        compiler_params=pltpu.CompilerParams(
            dimension_semantics=("parallel", "parallel"),
            vmem_limit_bytes=VMEM_LIMIT_BYTES),
    )(hidden, dec_w_t, bias)


# --------------------------------------------------------------------------
# Forward pass (glue in plain JAX, hot paths in the two kernels above)
# --------------------------------------------------------------------------
def char_to_word_lm_prediction_head(deberta_output, params, *, num_heads,
                                    residual_word_embedding=False,
                                    label_index=None, rel_embeddings=None,
                                    compute_dtype=jnp.bfloat16,
                                    logits_dtype=jnp.float32,
                                    target_rows=512):
    # TODO(synk): rel_embeddings (DeBERTa disentangled relative attention) is
    # not implemented; only the rel_embeddings=None content-to-content path.
    assert rel_embeddings is None
    B, W, C, H = deberta_output['input_shape']
    word_embeds = deberta_output['word_embeds'].reshape(B * W, 1, H)
    if residual_word_embedding:
        word_embeds = word_embeds + deberta_output['initial_word_embeds'][:, None, :]
    initial_embeds = deberta_output['initial_embeds']
    intra_word_mask = deberta_output['intra_word_mask']

    char_embeds = jnp.concatenate([word_embeds, initial_embeds[:, 1:, :]], axis=1)

    hidden = intra_word_encoder_layer(char_embeds.astype(compute_dtype),
                                      intra_word_mask, params,
                                      num_heads=num_heads,
                                      compute_dtype=compute_dtype,
                                      target_rows=target_rows)
    hidden = hidden.reshape(-1, H)
    if label_index is not None:
        hidden = jnp.take(hidden, label_index, axis=0)

    logits = decoder_matmul(hidden, params['dec_w_t'], params['dec_b'],
                            compute_dtype=compute_dtype, out_dtype=logits_dtype)
    if label_index is None:
        logits = logits.reshape(B, W * C, -1)
    return logits


# --------------------------------------------------------------------------
# Pure-JAX reference (same math) for a sanity check.
# --------------------------------------------------------------------------
def reference_forward(deberta_output, params, *, num_heads):
    B, W, C, H = deberta_output['input_shape']
    we = deberta_output['word_embeds'].reshape(B * W, 1, H)
    x = jnp.concatenate([we, deberta_output['initial_embeds'][:, 1:, :]], axis=1)
    m = deberta_output['intra_word_mask'].astype(jnp.float32)
    mask2d = m[:, :, None] * m[:, None, :]
    dh = H // num_heads

    q = x @ params['wq'] + params['bq']
    k = x @ params['wk'] + params['bk']
    v = x @ params['wv'] + params['bv']

    def split(t):
        return t.reshape(B * W, C, num_heads, dh).transpose(0, 2, 1, 3)

    qh, kh, vh = split(q), split(k), split(v)
    s = jnp.einsum('bhqd,bhkd->bhqk', qh, kh) / math.sqrt(dh)
    s = jnp.where(mask2d[:, None] > 0, s, -1e30)
    p = jax.nn.softmax(s, axis=-1) * mask2d[:, None]
    ctx = jnp.einsum('bhqk,bhkd->bhqd', p, vh).transpose(0, 2, 1, 3).reshape(B * W, C, H)

    attn_out = ctx @ params['wo'] + params['bo']
    h1 = _layer_norm(x + attn_out, params['ln1_g'], params['ln1_b'])
    ffn = _gelu_tanh(h1 @ params['wi'] + params['bi'])
    h2 = _layer_norm(h1 + ffn @ params['wo2'] + params['bo2'],
                     params['ln2_g'], params['ln2_b'])
    logits = h2.reshape(-1, H) @ params['dec_w_t'] + params['dec_b']
    return logits.reshape(B, W * C, -1)


if __name__ == "__main__":
    # Small synthetic config: batch=2, num_word=4, num_char=8, hidden=32,
    # heads=2, intermediate=64, vocab=128, tie_word_embeddings=True.
    # (Real configs keep H and the decoder vocab tile multiples of 128 so all
    # stores are lane-dense; the toy H=32 case just exercises correctness.)
    B, W, C, H = 2, 4, 8, 32
    NUM_HEADS, INTER, VOCAB = 2, 64, 128
    BW = B * W

    key = jax.random.PRNGKey(0)
    ks = jax.random.split(key, 20)

    def init(k, shape, scale=0.02):
        return (scale * jax.random.normal(k, shape)).astype(jnp.float32)

    emb = init(ks[0], (VOCAB, H))               # tied input embedding table
    params = {
        'wq': init(ks[1], (H, H)), 'bq': init(ks[2], (1, H)),
        'wk': init(ks[3], (H, H)), 'bk': init(ks[4], (1, H)),
        'wv': init(ks[5], (H, H)), 'bv': init(ks[6], (1, H)),
        'wo': init(ks[7], (H, H)), 'bo': init(ks[8], (1, H)),
        'ln1_g': jnp.ones((1, H), jnp.float32), 'ln1_b': jnp.zeros((1, H), jnp.float32),
        'wi': init(ks[9], (H, INTER)), 'bi': init(ks[10], (1, INTER)),
        'wo2': init(ks[11], (INTER, H)), 'bo2': init(ks[12], (1, H)),
        'ln2_g': jnp.ones((1, H), jnp.float32), 'ln2_b': jnp.zeros((1, H), jnp.float32),
        'dec_w_t': emb.T,                        # tied decoder weight (H, V)
        'dec_b': jnp.zeros((VOCAB,), jnp.float32),
    }

    lengths = (jnp.arange(BW) % C) + 1           # per-word valid char counts
    intra_word_mask = (jnp.arange(C)[None, :] < lengths[:, None]).astype(jnp.float32)

    deberta_output = {
        'input_shape': (B, W, C, H),
        'word_embeds': jax.random.normal(ks[13], (B, W, H), jnp.float32),
        'initial_embeds': jax.random.normal(ks[14], (BW, C, H), jnp.float32),
        'intra_word_mask': intra_word_mask,
    }

    with jax.default_matmul_precision("float32"):
        ref = jax.block_until_ready(
            reference_forward(deberta_output, params, num_heads=NUM_HEADS))

    # f32 matmul operands: tight check against the pure-JAX reference.
    out_f32 = jax.block_until_ready(
        char_to_word_lm_prediction_head(deberta_output, params,
                                        num_heads=NUM_HEADS,
                                        compute_dtype=jnp.float32))
    assert out_f32.shape == (B, W * C, VOCAB), out_f32.shape
    assert jnp.allclose(out_f32, ref, atol=2e-3, rtol=2e-3), \
        float(jnp.max(jnp.abs(out_f32 - ref)))

    # bf16 matmul operands + bf16 logits writeback (production path,
    # f32 accumulation everywhere): looser check.
    out_bf16 = jax.block_until_ready(
        char_to_word_lm_prediction_head(deberta_output, params,
                                        num_heads=NUM_HEADS,
                                        compute_dtype=jnp.bfloat16,
                                        logits_dtype=jnp.bfloat16))
    assert out_bf16.shape == (B, W * C, VOCAB), out_bf16.shape
    assert jnp.allclose(out_bf16.astype(jnp.float32), ref, atol=5e-2, rtol=5e-2), \
        float(jnp.max(jnp.abs(out_bf16.astype(jnp.float32) - ref)))

    # Padding path: BW=7 (prime) with a small target_rows forces G=3 and a
    # padded group axis of 9; output must still match the reference exactly
    # (padded rows are computed on zeros and sliced away).
    B2, W2 = 1, 7
    BW2 = B2 * W2
    lengths2 = (jnp.arange(BW2) % C) + 1
    mask2 = (jnp.arange(C)[None, :] < lengths2[:, None]).astype(jnp.float32)
    deberta_output2 = {
        'input_shape': (B2, W2, C, H),
        'word_embeds': jax.random.normal(ks[15], (B2, W2, H), jnp.float32),
        'initial_embeds': jax.random.normal(ks[16], (BW2, C, H), jnp.float32),
        'intra_word_mask': mask2,
    }
    with jax.default_matmul_precision("float32"):
        ref2 = jax.block_until_ready(
            reference_forward(deberta_output2, params, num_heads=NUM_HEADS))
    out2 = jax.block_until_ready(
        char_to_word_lm_prediction_head(deberta_output2, params,
                                        num_heads=NUM_HEADS,
                                        compute_dtype=jnp.float32,
                                        target_rows=24))
    assert out2.shape == (B2, W2 * C, VOCAB), out2.shape
    assert jnp.allclose(out2, ref2, atol=2e-3, rtol=2e-3), \
        float(jnp.max(jnp.abs(out2 - ref2)))

    print("KERNEL_OK")
</pallas_src>

<mosaic_0001>
module attributes {stable_mosaic.version = 11 : i64} {
  func.func @intra_word_layer_kernel(%arg0: i32, %arg1: memref<8x8x32xf32, #tpu.memory_space<vmem>>, %arg2: memref<8x1x8xf32, #tpu.memory_space<vmem>>, %arg3: memref<1x96xf32, #tpu.memory_space<vmem>>, %arg4: memref<1x32xf32, #tpu.memory_space<vmem>>, %arg5: memref<1x32xf32, #tpu.memory_space<vmem>>, %arg6: memref<1x32xf32, #tpu.memory_space<vmem>>, %arg7: memref<1x64xf32, #tpu.memory_space<vmem>>, %arg8: memref<1x32xf32, #tpu.memory_space<vmem>>, %arg9: memref<1x32xf32, #tpu.memory_space<vmem>>, %arg10: memref<1x32xf32, #tpu.memory_space<vmem>>, %arg11: memref<32x96xf32, #tpu.memory_space<any>>, %arg12: memref<32x32xf32, #tpu.memory_space<any>>, %arg13: memref<32x64xf32, #tpu.memory_space<any>>, %arg14: memref<64x32xf32, #tpu.memory_space<any>>, %arg15: memref<8x8x32xf32, #tpu.memory_space<vmem>>, %arg16: memref<32x96xf32, #tpu.memory_space<vmem>>, %arg17: memref<32x32xf32, #tpu.memory_space<vmem>>, %arg18: memref<32x64xf32, #tpu.memory_space<vmem>>, %arg19: memref<64x32xf32, #tpu.memory_space<vmem>>, %arg20: memref<64x32xf32, #tpu.memory_space<vmem>>, %arg21: memref<4x!tpu.dma_semaphore, #tpu.memory_space<semaphore_mem>>) attributes {dimension_semantics = [#tpu.dimension_semantics<arbitrary>], iteration_bounds = array<i64: 1>, scalar_prefetch = 0 : i64, scratch_operands = 6 : i64, tpu.core_type = #tpu.core_type<tc>, window_params = [{transform_indices = @transform_0, window_bounds = array<i64: 8, 8, 32>}, {transform_indices = @transform_1, window_bounds = array<i64: 8, 1, 8>}, {pipeline_mode = #tpu.pipeline_mode<synchronous>, transform_indices = @transform_2, window_bounds = array<i64: 1, 96>}, {pipeline_mode = #tpu.pipeline_mode<synchronous>, transform_indices = @transform_3, window_bounds = array<i64: 1, 32>}, {pipeline_mode = #tpu.pipeline_mode<synchronous>, transform_indices = @transform_4, window_bounds = array<i64: 1, 32>}, {pipeline_mode = #tpu.pipeline_mode<synchronous>, transform_indices = @transform_5, window_bounds = array<i64: 1, 32>}, {pipeline_mode = #tpu.pipeline_mode<synchronous>, transform_indices = @transform_6, window_bounds = array<i64: 1, 64>}, {pipeline_mode = #tpu.pipeline_mode<synchronous>, transform_indices = @transform_7, window_bounds = array<i64: 1, 32>}, {pipeline_mode = #tpu.pipeline_mode<synchronous>, transform_indices = @transform_8, window_bounds = array<i64: 1, 32>}, {pipeline_mode = #tpu.pipeline_mode<synchronous>, transform_indices = @transform_9, window_bounds = array<i64: 1, 32>}, {}, {}, {}, {}, {transform_indices = @transform_14, window_bounds = array<i64: 8, 8, 32>}]} {
    %c0_i32 = arith.constant 0 : i32
    %0 = arith.cmpi eq, %arg0, %c0_i32 : i32
    %1 = arith.extui %0 : i1 to i32
    %c0_i32_0 = arith.constant 0 : i32
    %2 = arith.cmpi ne, %1, %c0_i32_0 : i32
    scf.if %2 {
      %c0_i32_65 = arith.constant 0 : i32
      %141 = tpu.memref_slice %arg21[%c0_i32_65] : memref<4x!tpu.dma_semaphore, #tpu.memory_space<semaphore_mem>> -> memref<1x!tpu.dma_semaphore, #tpu.memory_space<semaphore_mem>>
      %142 = tpu.memref_squeeze %141 : memref<1x!tpu.dma_semaphore, #tpu.memory_space<semaphore_mem>> -> memref<!tpu.dma_semaphore, #tpu.memory_space<semaphore_mem>>
      tpu.enqueue_dma source(%arg11 : memref<32x96xf32, #tpu.memory_space<any>>) target(%arg16 : memref<32x96xf32, #tpu.memory_space<vmem>>) target_semaphore(%142 : memref<!tpu.dma_semaphore, #tpu.memory_space<semaphore_mem>>)
      %c1_i32 = arith.constant 1 : i32
      %143 = tpu.memref_slice %arg21[%c1_i32] : memref<4x!tpu.dma_semaphore, #tpu.memory_space<semaphore_mem>> -> memref<1x!tpu.dma_semaphore, #tpu.memory_space<semaphore_mem>>
      %144 = tpu.memref_squeeze %143 : memref<1x!tpu.dma_semaphore, #tpu.memory_space<semaphore_mem>> -> memref<!tpu.dma_semaphore, #tpu.memory_space<semaphore_mem>>
      tpu.enqueue_dma source(%arg12 : memref<32x32xf32, #tpu.memory_space<any>>) target(%arg17 : memref<32x32xf32, #tpu.memory_space<vmem>>) target_semaphore(%144 : memref<!tpu.dma_semaphore, #tpu.memory_space<semaphore_mem>>)
      %c2_i32 = arith.constant 2 : i32
      %145 = tpu.memref_slice %arg21[%c2_i32] : memref<4x!tpu.dma_semaphore, #tpu.memory_space<semaphore_mem>> -> memref<1x!tpu.dma_semaphore, #tpu.memory_space<semaphore_mem>>
      %146 = tpu.memref_squeeze %145 : memref<1x!tpu.dma_semaphore, #tpu.memory_space<semaphore_mem>> -> memref<!tpu.dma_semaphore, #tpu.memory_space<semaphore_mem>>
      tpu.enqueue_dma source(%arg13 : memref<32x64xf32, #tpu.memory_space<any>>) target(%arg18 : memref<32x64xf32, #tpu.memory_space<vmem>>) target_semaphore(%146 : memref<!tpu.dma_semaphore, #tpu.memory_space<semaphore_mem>>)
      %c3_i32 = arith.constant 3 : i32
      %147 = tpu.memref_slice %arg21[%c3_i32] : memref<4x!tpu.dma_semaphore, #tpu.memory_space<semaphore_mem>> -> memref<1x!tpu.dma_semaphore, #tpu.memory_space<semaphore_mem>>
      %148 = tpu.memref_squeeze %147 : memref<1x!tpu.dma_semaphore, #tpu.memory_space<semaphore_mem>> -> memref<!tpu.dma_semaphore, #tpu.memory_space<semaphore_mem>>
      tpu.enqueue_dma source(%arg14 : memref<64x32xf32, #tpu.memory_space<any>>) target(%arg19 : memref<64x32xf32, #tpu.memory_space<vmem>>) target_semaphore(%148 : memref<!tpu.dma_semaphore, #tpu.memory_space<semaphore_mem>>)
      %c0_i32_66 = arith.constant 0 : i32
      %149 = tpu.memref_slice %arg21[%c0_i32_66] : memref<4x!tpu.dma_semaphore, #tpu.memory_space<semaphore_mem>> -> memref<1x!tpu.dma_semaphore, #tpu.memory_space<semaphore_mem>>
      %150 = tpu.memref_squeeze %149 : memref<1x!tpu.dma_semaphore, #tpu.memory_space<semaphore_mem>> -> memref<!tpu.dma_semaphore, #tpu.memory_space<semaphore_mem>>
      tpu.wait_dma2 semaphore(%150 : memref<!tpu.dma_semaphore, #tpu.memory_space<semaphore_mem>>) src(%arg11 : memref<32x96xf32, #tpu.memory_space<any>>) dst(%arg16 : memref<32x96xf32, #tpu.memory_space<vmem>>)
      %c1_i32_67 = arith.constant 1 : i32
      %151 = tpu.memref_slice %arg21[%c1_i32_67] : memref<4x!tpu.dma_semaphore, #tpu.memory_space<semaphore_mem>> -> memref<1x!tpu.dma_semaphore, #tpu.memory_space<semaphore_mem>>
      %152 = tpu.memref_squeeze %151 : memref<1x!tpu.dma_semaphore, #tpu.memory_space<semaphore_mem>> -> memref<!tpu.dma_semaphore, #tpu.memory_space<semaphore_mem>>
      tpu.wait_dma2 semaphore(%152 : memref<!tpu.dma_semaphore, #tpu.memory_space<semaphore_mem>>) src(%arg12 : memref<32x32xf32, #tpu.memory_space<any>>) dst(%arg17 : memref<32x32xf32, #tpu.memory_space<vmem>>)
      %c2_i32_68 = arith.constant 2 : i32
      %153 = tpu.memref_slice %arg21[%c2_i32_68] : memref<4x!tpu.dma_semaphore, #tpu.memory_space<semaphore_mem>> -> memref<1x!tpu.dma_semaphore, #tpu.memory_space<semaphore_mem>>
      %154 = tpu.memref_squeeze %153 : memref<1x!tpu.dma_semaphore, #tpu.memory_space<semaphore_mem>> -> memref<!tpu.dma_semaphore, #tpu.memory_space<semaphore_mem>>
      tpu.wait_dma2 semaphore(%154 : memref<!tpu.dma_semaphore, #tpu.memory_space<semaphore_mem>>) src(%arg13 : memref<32x64xf32, #tpu.memory_space<any>>) dst(%arg18 : memref<32x64xf32, #tpu.memory_space<vmem>>)
      %c3_i32_69 = arith.constant 3 : i32
      %155 = tpu.memref_slice %arg21[%c3_i32_69] : memref<4x!tpu.dma_semaphore, #tpu.memory_space<semaphore_mem>> -> memref<1x!tpu.dma_semaphore, #tpu.memory_space<semaphore_mem>>
      %156 = tpu.memref_squeeze %155 : memref<1x!tpu.dma_semaphore, #tpu.memory_space<semaphore_mem>> -> memref<!tpu.dma_semaphore, #tpu.memory_space<semaphore_mem>>
      tpu.wait_dma2 semaphore(%156 : memref<!tpu.dma_semaphore, #tpu.memory_space<semaphore_mem>>) src(%arg14 : memref<64x32xf32, #tpu.memory_space<any>>) dst(%arg19 : memref<64x32xf32, #tpu.memory_space<vmem>>)
    } else {
    }
    %c0 = arith.constant 0 : index
    %c0_1 = arith.constant 0 : index
    %c0_2 = arith.constant 0 : index
    %3 = vector.load %arg1[%c0, %c0_1, %c0_2] : memref<8x8x32xf32, #tpu.memory_space<vmem>>, vector<8x8x32xf32>
    %c0_3 = arith.constant 0 : index
    %c0_4 = arith.constant 0 : index
    %c0_5 = arith.constant 0 : index
    %4 = vector.load %arg2[%c0_3, %c0_4, %c0_5] : memref<8x1x8xf32, #tpu.memory_space<vmem>>, vector<8x1x8xf32>
    %5 = vector.shape_cast %4 : vector<8x1x8xf32> to vector<8x8xf32>
    %6 = vector.shape_cast %5 : vector<8x8xf32> to vector<8x8x1xf32>
    %7 = vector.shape_cast %5 : vector<8x8xf32> to vector<8x1x8xf32>
    %8 = vector.broadcast %6 : vector<8x8x1xf32> to vector<8x8x8xf32>
    %9 = vector.broadcast %7 : vector<8x1x8xf32> to vector<8x8x8xf32>
    %10 = arith.mulf %8, %9 : vector<8x8x8xf32>
    %cst = arith.constant 1.000000e+00 : f32
    %11 = vector.broadcast %cst : f32 to vector<8x8x8xf32>
    %12 = arith.subf %11, %10 : vector<8x8x8xf32>
    %cst_6 = arith.constant -1.000000e+30 : f32
    %13 = vector.broadcast %cst_6 : f32 to vector<8x8x8xf32>
    %14 = arith.mulf %12, %13 : vector<8x8x8xf32>
    %15 = vector.shape_cast %3 : vector<8x8x32xf32> to vector<64x32xf32>
    %c0_7 = arith.constant 0 : index
    %c0_8 = arith.constant 0 : index
    %16 = vector.load %arg16[%c0_7, %c0_8] : memref<32x96xf32, #tpu.memory_space<vmem>>, vector<32x96xf32>
    %cst_9 = arith.constant dense<0.000000e+00> : vector<64x96xf32>
    %17 = tpu.matmul %15, %16, %cst_9 {dimension_numbers = #tpu.dot_dimension_numbers<[1], [0], [0], [1], [0, 0, 1, 1], [], []>} : vector<64x32xf32>, vector<32x96xf32>, vector<64x96xf32> -> vector<64x96xf32>
    %c0_10 = arith.constant 0 : index
    %c0_11 = arith.constant 0 : index
    %18 = vector.load %arg3[%c0_10, %c0_11] : memref<1x96xf32, #tpu.memory_space<vmem>>, vector<1x96xf32>
    %19 = vector.broadcast %18 : vector<1x96xf32> to vector<64x96xf32>
    %20 = arith.addf %17, %19 : vector<64x96xf32>
    %21 = vector.shape_cast %20 : vector<64x96xf32> to vector<8x8x96xf32>
    %22 = vector.extract_strided_slice %21 {offsets = [0, 0, 0], sizes = [8, 8, 16], strides = [1, 1, 1]} : vector<8x8x96xf32> to vector<8x8x16xf32>
    %23 = vector.extract_strided_slice %21 {offsets = [0, 0, 32], sizes = [8, 8, 16], strides = [1, 1, 1]} : vector<8x8x96xf32> to vector<8x8x16xf32>
    %24 = vector.extract_strided_slice %21 {offsets = [0, 0, 64], sizes = [8, 8, 16], strides = [1, 1, 1]} : vector<8x8x96xf32> to vector<8x8x16xf32>
    "tpu.trace_start"() <{level = 10 : i32, message = "gqd,gkd->gqk"}> : () -> ()
    %cst_12 = arith.constant dense<0.000000e+00> : vector<8x8x8xf32>
    %25 = tpu.matmul %22, %23, %cst_12 {dimension_numbers = #tpu.dot_dimension_numbers<[2], [2], [1], [1], [0, 0, 0, 1, 1, 1], [0], [0]>} : vector<8x8x16xf32>, vector<8x8x16xf32>, vector<8x8x8xf32> -> vector<8x8x8xf32>
    "tpu.trace_stop"() : () -> ()
    %26 = arith.addf %25, %14 : vector<8x8x8xf32>
    %cst_13 = arith.constant dense<0xFF800000> : vector<8x8xf32>
    %27 = vector.multi_reduction <maximumf>, %26, %cst_13 [2] : vector<8x8x8xf32> to vector<8x8xf32>
    %28 = vector.shape_cast %27 : vector<8x8xf32> to vector<8x8x1xf32>
    %29 = vector.broadcast %28 : vector<8x8x1xf32> to vector<8x8x8xf32>
    %30 = arith.subf %26, %29 : vector<8x8x8xf32>
    %31 = math.exp %30 : vector<8x8x8xf32>
    %cst_14 = arith.constant dense<0.000000e+00> : vector<8x8xf32>
    %32 = vector.multi_reduction <add>, %31, %cst_14 [2] : vector<8x8x8xf32> to vector<8x8xf32>
    %33 = vector.shape_cast %32 : vector<8x8xf32> to vector<8x8x1xf32>
    %34 = tpu.reciprocal %33 {approx = true} : vector<8x8x1xf32> -> vector<8x8x1xf32>
    %35 = vector.broadcast %34 : vector<8x8x1xf32> to vector<8x8x8xf32>
    %36 = arith.mulf %31, %35 : vector<8x8x8xf32>
    %37 = arith.mulf %36, %10 : vector<8x8x8xf32>
    "tpu.trace_start"() <{level = 10 : i32, message = "gqk,gkd->gqd"}> : () -> ()
    %cst_15 = arith.constant dense<0.000000e+00> : vector<8x8x16xf32>
    %38 = tpu.matmul %37, %24, %cst_15 {dimension_numbers = #tpu.dot_dimension_numbers<[2], [1], [1], [2], [0, 0, 0, 1, 1, 2], [0], [0]>} : vector<8x8x8xf32>, vector<8x8x16xf32>, vector<8x8x16xf32> -> vector<8x8x16xf32>
    "tpu.trace_stop"() : () -> ()
    %39 = vector.shape_cast %38 : vector<8x8x16xf32> to vector<64x16xf32>
    %c0_16 = arith.constant 0 : index
    %c0_17 = arith.constant 0 : index
    %40 = vector.load %arg20[%c0_16, %c0_17] : memref<64x32xf32, #tpu.memory_space<vmem>>, vector<64x16xf32>
    tpu.vector_store %arg20[%c0_16, %c0_17], %39 {strides = array<i32>} : memref<64x32xf32, #tpu.memory_space<vmem>>, vector<64x16xf32>,
    %41 = vector.extract_strided_slice %21 {offsets = [0, 0, 16], sizes = [8, 8, 16], strides = [1, 1, 1]} : vector<8x8x96xf32> to vector<8x8x16xf32>
    %42 = vector.extract_strided_slice %21 {offsets = [0, 0, 48], sizes = [8, 8, 16], strides = [1, 1, 1]} : vector<8x8x96xf32> to vector<8x8x16xf32>
    %43 = vector.extract_strided_slice %21 {offsets = [0, 0, 80], sizes = [8, 8, 16], strides = [1, 1, 1]} : vector<8x8x96xf32> to vector<8x8x16xf32>
    "tpu.trace_start"() <{level = 10 : i32, message = "gqd,gkd->gqk"}> : () -> ()
    %cst_18 = arith.constant dense<0.000000e+00> : vector<8x8x8xf32>
    %44 = tpu.matmul %41, %42, %cst_18 {dimension_numbers = #tpu.dot_dimension_numbers<[2], [2], [1], [1], [0, 0, 0, 1, 1, 1], [0], [0]>} : vector<8x8x16xf32>, vector<8x8x16xf32>, vector<8x8x8xf32> -> vector<8x8x8xf32>
    "tpu.trace_stop"() : () -> ()
    %45 = arith.addf %44, %14 : vector<8x8x8xf32>
    %cst_19 = arith.constant dense<0xFF800000> : vector<8x8xf32>
    %46 = vector.multi_reduction <maximumf>, %45, %cst_19 [2] : vector<8x8x8xf32> to vector<8x8xf32>
    %47 = vector.shape_cast %46 : vector<8x8xf32> to vector<8x8x1xf32>
    %48 = vector.broadcast %47 : vector<8x8x1xf32> to vector<8x8x8xf32>
    %49 = arith.subf %45, %48 : vector<8x8x8xf32>
    %50 = math.exp %49 : vector<8x8x8xf32>
    %cst_20 = arith.constant dense<0.000000e+00> : vector<8x8xf32>
    %51 = vector.multi_reduction <add>, %50, %cst_20 [2] : vector<8x8x8xf32> to vector<8x8xf32>
    %52 = vector.shape_cast %51 : vector<8x8xf32> to vector<8x8x1xf32>
    %53 = tpu.reciprocal %52 {approx = true} : vector<8x8x1xf32> -> vector<8x8x1xf32>
    %54 = vector.broadcast %53 : vector<8x8x1xf32> to vector<8x8x8xf32>
    %55 = arith.mulf %50, %54 : vector<8x8x8xf32>
    %56 = arith.mulf %55, %10 : vector<8x8x8xf32>
    "tpu.trace_start"() <{level = 10 : i32, message = "gqk,gkd->gqd"}> : () -> ()
    %cst_21 = arith.constant dense<0.000000e+00> : vector<8x8x16xf32>
    %57 = tpu.matmul %56, %43, %cst_21 {dimension_numbers = #tpu.dot_dimension_numbers<[2], [1], [1], [2], [0, 0, 0, 1, 1, 2], [0], [0]>} : vector<8x8x8xf32>, vector<8x8x16xf32>, vector<8x8x16xf32> -> vector<8x8x16xf32>
    "tpu.trace_stop"() : () -> ()
    %58 = vector.shape_cast %57 : vector<8x8x16xf32> to vector<64x16xf32>
    %c0_22 = arith.constant 0 : index
    %c16 = arith.constant 16 : index
    %59 = vector.load %arg20[%c0_22, %c16] : memref<64x32xf32, #tpu.memory_space<vmem>>, vector<64x16xf32>
    tpu.vector_store %arg20[%c0_22, %c16], %58 {strides = array<i32>} : memref<64x32xf32, #tpu.memory_space<vmem>>, vector<64x16xf32>,
    %c0_23 = arith.constant 0 : index
    %c0_24 = arith.constant 0 : index
    %60 = vector.load %arg20[%c0_23, %c0_24] : memref<64x32xf32, #tpu.memory_space<vmem>>, vector<64x32xf32>
    %c0_25 = arith.constant 0 : index
    %c0_26 = arith.constant 0 : index
    %61 = vector.load %arg17[%c0_25, %c0_26] : memref<32x32xf32, #tpu.memory_space<vmem>>, vector<32x32xf32>
    %cst_27 = arith.constant dense<0.000000e+00> : vector<64x32xf32>
    %62 = tpu.matmul %60, %61, %cst_27 {dimension_numbers = #tpu.dot_dimension_numbers<[1], [0], [0], [1], [0, 0, 1, 1], [], []>} : vector<64x32xf32>, vector<32x32xf32>, vector<64x32xf32> -> vector<64x32xf32>
    %c0_28 = arith.constant 0 : index
    %c0_29 = arith.constant 0 : index
    %63 = vector.load %arg4[%c0_28, %c0_29] : memref<1x32xf32, #tpu.memory_space<vmem>>, vector<1x32xf32>
    %64 = vector.broadcast %63 : vector<1x32xf32> to vector<64x32xf32>
    %65 = arith.addf %62, %64 : vector<64x32xf32>
    %66 = arith.addf %15, %65 : vector<64x32xf32>
    %c0_30 = arith.constant 0 : index
    %c0_31 = arith.constant 0 : index
    %67 = vector.load %arg5[%c0_30, %c0_31] : memref<1x32xf32, #tpu.memory_space<vmem>>, vector<1x32xf32>
    %c0_32 = arith.constant 0 : index
    %c0_33 = arith.constant 0 : index
    %68 = vector.load %arg6[%c0_32, %c0_33] : memref<1x32xf32, #tpu.memory_space<vmem>>, vector<1x32xf32>
    %cst_34 = arith.constant dense<0.000000e+00> : vector<64xf32>
    %69 = vector.multi_reduction <add>, %66, %cst_34 [1] : vector<64x32xf32> to vector<64xf32>
    %70 = vector.shape_cast %69 : vector<64xf32> to vector<64x1xf32>
    %cst_35 = arith.constant 3.200000e+01 : f32
    %71 = vector.broadcast %cst_35 : f32 to vector<64x1xf32>
    %72 = arith.divf %70, %71 : vector<64x1xf32>
    %73 = vector.broadcast %72 : vector<64x1xf32> to vector<64x32xf32>
    %74 = arith.subf %66, %73 : vector<64x32xf32>
    %75 = arith.mulf %74, %74 : vector<64x32xf32>
    %cst_36 = arith.constant dense<0.000000e+00> : vector<64xf32>
    %76 = vector.multi_reduction <add>, %75, %cst_36 [1] : vector<64x32xf32> to vector<64xf32>
    %77 = vector.shape_cast %76 : vector<64xf32> to vector<64x1xf32>
    %cst_37 = arith.constant 3.200000e+01 : f32
    %78 = vector.broadcast %cst_37 : f32 to vector<64x1xf32>
    %79 = arith.divf %77, %78 : vector<64x1xf32>
    %80 = vector.broadcast %72 : vector<64x1xf32> to vector<64x32xf32>
    %81 = arith.subf %66, %80 : vector<64x32xf32>
    %cst_38 = arith.constant 1.000000e-07 : f32
    %82 = vector.broadcast %cst_38 : f32 to vector<64x1xf32>
    %83 = arith.addf %79, %82 : vector<64x1xf32>
    %84 = math.rsqrt %83 : vector<64x1xf32>
    %85 = vector.broadcast %84 : vector<64x1xf32> to vector<64x32xf32>
    %86 = arith.mulf %81, %85 : vector<64x32xf32>
    %87 = vector.broadcast %67 : vector<1x32xf32> to vector<64x32xf32>
    %88 = arith.mulf %86, %87 : vector<64x32xf32>
    %89 = vector.broadcast %68 : vector<1x32xf32> to vector<64x32xf32>
    %90 = arith.addf %88, %89 : vector<64x32xf32>
    %c0_39 = arith.constant 0 : index
    %c0_40 = arith.constant 0 : index
    %91 = vector.load %arg18[%c0_39, %c0_40] : memref<32x64xf32, #tpu.memory_space<vmem>>, vector<32x64xf32>
    %cst_41 = arith.constant dense<0.000000e+00> : vector<64x64xf32>
    %92 = tpu.matmul %90, %91, %cst_41 {dimension_numbers = #tpu.dot_dimension_numbers<[1], [0], [0], [1], [0, 0, 1, 1], [], []>} : vector<64x32xf32>, vector<32x64xf32>, vector<64x64xf32> -> vector<64x64xf32>
    %c0_42 = arith.constant 0 : index
    %c0_43 = arith.constant 0 : index
    %93 = vector.load %arg7[%c0_42, %c0_43] : memref<1x64xf32, #tpu.memory_space<vmem>>, vector<1x64xf32>
    %94 = vector.broadcast %93 : vector<1x64xf32> to vector<64x64xf32>
    %95 = arith.addf %92, %94 : vector<64x64xf32>
    %cst_44 = arith.constant 5.000000e-01 : f32
    %96 = vector.broadcast %cst_44 : f32 to vector<64x64xf32>
    %97 = arith.mulf %96, %95 : vector<64x64xf32>
    %cst_45 = arith.constant 4.471500e-02 : f32
    %98 = vector.broadcast %cst_45 : f32 to vector<64x64xf32>
    %99 = arith.mulf %98, %95 : vector<64x64xf32>
    %100 = arith.mulf %99, %95 : vector<64x64xf32>
    %101 = arith.mulf %100, %95 : vector<64x64xf32>
    %102 = arith.addf %95, %101 : vector<64x64xf32>
    %cst_46 = arith.constant 0.797884583 : f32
    %103 = vector.broadcast %cst_46 : f32 to vector<64x64xf32>
    %104 = arith.mulf %103, %102 : vector<64x64xf32>
    %105 = math.tanh %104 : vector<64x64xf32>
    %cst_47 = arith.constant 1.000000e+00 : f32
    %106 = vector.broadcast %cst_47 : f32 to vector<64x64xf32>
    %107 = arith.addf %106, %105 : vector<64x64xf32>
    %108 = arith.mulf %97, %107 : vector<64x64xf32>
    %c0_48 = arith.constant 0 : index
    %c0_49 = arith.constant 0 : index
    %109 = vector.load %arg19[%c0_48, %c0_49] : memref<64x32xf32, #tpu.memory_space<vmem>>, vector<64x32xf32>
    %cst_50 = arith.constant dense<0.000000e+00> : vector<64x32xf32>
    %110 = tpu.matmul %108, %109, %cst_50 {dimension_numbers = #tpu.dot_dimension_numbers<[1], [0], [0], [1], [0, 0, 1, 1], [], []>} : vector<64x64xf32>, vector<64x32xf32>, vector<64x32xf32> -> vector<64x32xf32>
    %c0_51 = arith.constant 0 : index
    %c0_52 = arith.constant 0 : index
    %111 = vector.load %arg8[%c0_51, %c0_52] : memref<1x32xf32, #tpu.memory_space<vmem>>, vector<1x32xf32>
    %112 = vector.broadcast %111 : vector<1x32xf32> to vector<64x32xf32>
    %113 = arith.addf %110, %112 : vector<64x32xf32>
    %114 = arith.addf %90, %113 : vector<64x32xf32>
    %c0_53 = arith.constant 0 : index
    %c0_54 = arith.constant 0 : index
    %115 = vector.load %arg9[%c0_53, %c0_54] : memref<1x32xf32, #tpu.memory_space<vmem>>, vector<1x32xf32>
    %c0_55 = arith.constant 0 : index
    %c0_56 = arith.constant 0 : index
    %116 = vector.load %arg10[%c0_55, %c0_56] : memref<1x32xf32, #tpu.memory_space<vmem>>, vector<1x32xf32>
    %cst_57 = arith.constant dense<0.000000e+00> : vector<64xf32>
    %117 = vector.multi_reduction <add>, %114, %cst_57 [1] : vector<64x32xf32> to vector<64xf32>
    %118 = vector.shape_cast %117 : vector<64xf32> to vector<64x1xf32>
    %cst_58 = arith.constant 3.200000e+01 : f32
    %119 = vector.broadcast %cst_58 : f32 to vector<64x1xf32>
    %120 = arith.divf %118, %119 : vector<64x1xf32>
    %121 = vector.broadcast %120 : vector<64x1xf32> to vector<64x32xf32>
    %122 = arith.subf %114, %121 : vector<64x32xf32>
    %123 = arith.mulf %122, %122 : vector<64x32xf32>
    %cst_59 = arith.constant dense<0.000000e+00> : vector<64xf32>
    %124 = vector.multi_reduction <add>, %123, %cst_59 [1] : vector<64x32xf32> to vector<64xf32>
    %125 = vector.shape_cast %124 : vector<64xf32> to vector<64x1xf32>
    %cst_60 = arith.constant 3.200000e+01 : f32
    %126 = vector.broadcast %cst_60 : f32 to vector<64x1xf32>
    %127 = arith.divf %125, %126 : vector<64x1xf32>
    %128 = vector.broadcast %120 : vector<64x1xf32> to vector<64x32xf32>
    %129 = arith.subf %114, %128 : vector<64x32xf32>
    %cst_61 = arith.constant 1.000000e-07 : f32
    %130 = vector.broadcast %cst_61 : f32 to vector<64x1xf32>
    %131 = arith.addf %127, %130 : vector<64x1xf32>
    %132 = math.rsqrt %131 : vector<64x1xf32>
    %133 = vector.broadcast %132 : vector<64x1xf32> to vector<64x32xf32>
    %134 = arith.mulf %129, %133 : vector<64x32xf32>
    %135 = vector.broadcast %115 : vector<1x32xf32> to vector<64x32xf32>
    %136 = arith.mulf %134, %135 : vector<64x32xf32>
    %137 = vector.broadcast %116 : vector<1x32xf32> to vector<64x32xf32>
    %138 = arith.addf %136, %137 : vector<64x32xf32>
    %139 = vector.shape_cast %138 : vector<64x32xf32> to vector<8x8x32xf32>
    %c0_62 = arith.constant 0 : index
    %c0_63 = arith.constant 0 : index
    %c0_64 = arith.constant 0 : index
    %140 = vector.load %arg15[%c0_62, %c0_63, %c0_64] : memref<8x8x32xf32, #tpu.memory_space<vmem>>, vector<8x8x32xf32>
    tpu.vector_store %arg15[%c0_62, %c0_63, %c0_64], %139 {strides = array<i32>} : memref<8x8x32xf32, #tpu.memory_space<vmem>>, vector<8x8x32xf32>,
    return
  }
  func.func @transform_0(%arg0: i32) -> (i32, i32, i32) {
    %c0_i32 = arith.constant 0 : i32
    %c0_i32_0 = arith.constant 0 : i32
    %c0_i32_1 = arith.constant 0 : i32
    return %arg0, %c0_i32, %c0_i32_0 : i32, i32, i32
  }
  func.func @transform_1(%arg0: i32) -> (i32, i32, i32) {
    %c0_i32 = arith.constant 0 : i32
    %c0_i32_0 = arith.constant 0 : i32
    %c0_i32_1 = arith.constant 0 : i32
    return %arg0, %c0_i32, %c0_i32_0 : i32, i32, i32
  }
  func.func @transform_2(%arg0: i32) -> (i32, i32) {
    %c0_i32 = arith.constant 0 : i32
    %c0_i32_0 = arith.constant 0 : i32
    %c0_i32_1 = arith.constant 0 : i32
    return %c0_i32, %c0_i32_0 : i32, i32
  }
  func.func @transform_3(%arg0: i32) -> (i32, i32) {
    %c0_i32 = arith.constant 0 : i32
    %c0_i32_0 = arith.constant 0 : i32
    %c0_i32_1 = arith.constant 0 : i32
    return %c0_i32, %c0_i32_0 : i32, i32
  }
  func.func @transform_4(%arg0: i32) -> (i32, i32) {
    %c0_i32 = arith.constant 0 : i32
    %c0_i32_0 = arith.constant 0 : i32
    %c0_i32_1 = arith.constant 0 : i32
    return %c0_i32, %c0_i32_0 : i32, i32
  }
  func.func @transform_5(%arg0: i32) -> (i32, i32) {
    %c0_i32 = arith.constant 0 : i32
    %c0_i32_0 = arith.constant 0 : i32
    %c0_i32_1 = arith.constant 0 : i32
    return %c0_i32, %c0_i32_0 : i32, i32
  }
  func.func @transform_6(%arg0: i32) -> (i32, i32) {
    %c0_i32 = arith.constant 0 : i32
    %c0_i32_0 = arith.constant 0 : i32
    %c0_i32_1 = arith.constant 0 : i32
    return %c0_i32, %c0_i32_0 : i32, i32
  }
  func.func @transform_7(%arg0: i32) -> (i32, i32) {
    %c0_i32 = arith.constant 0 : i32
    %c0_i32_0 = arith.constant 0 : i32
    %c0_i32_1 = arith.constant 0 : i32
    return %c0_i32, %c0_i32_0 : i32, i32
  }
  func.func @transform_8(%arg0: i32) -> (i32, i32) {
    %c0_i32 = arith.constant 0 : i32
    %c0_i32_0 = arith.constant 0 : i32
    %c0_i32_1 = arith.constant 0 : i32
    return %c0_i32, %c0_i32_0 : i32, i32
  }
  func.func @transform_9(%arg0: i32) -> (i32, i32) {
    %c0_i32 = arith.constant 0 : i32
    %c0_i32_0 = arith.constant 0 : i32
    %c0_i32_1 = arith.constant 0 : i32
    return %c0_i32, %c0_i32_0 : i32, i32
  }
  func.func @transform_14(%arg0: i32) -> (i32, i32, i32) {
    %c0_i32 = arith.constant 0 : i32
    %c0_i32_0 = arith.constant 0 : i32
    %c0_i32_1 = arith.constant 0 : i32
    return %arg0, %c0_i32, %c0_i32_0 : i32, i32, i32
  }
}

</mosaic_0001>

<llo_original>
// kernel: tpu_custom_call.1
$region0: #{tpu_custom_call.1}
  #allocation0 [shape = 'u32[]', space=smem, size = 0x4, offset = 0x4, fixed_abs, tag = 'smem constant byte address 0x4 - core index']
  #allocation1 [shape = 'u32[144,128]{1,0:T(1,128)}', space=vmem, size = 0x12000, scoped, tag = 'internal scratch']
  #allocation2 [shape = 'f32[32,96]{1,0:T(8,128)}', space=vmem, size = 0x4000, scoped, tag = 'scratch operand']
  #allocation3 [shape = 'f32[32,32]{1,0:T(8,128)}', space=vmem, size = 0x4000, scoped, tag = 'scratch operand']
  #allocation4 [shape = 'f32[32,64]{1,0:T(8,128)}', space=vmem, size = 0x4000, scoped, tag = 'scratch operand']
  #allocation5 [shape = 'f32[64,32]{1,0:T(8,128)}', space=vmem, size = 0x8000, scoped, tag = 'scratch operand']
  #allocation6 [shape = 'f32[64,32]{1,0:T(8,128)}', space=vmem, size = 0x8000, scoped, tag = 'scratch operand']
  #allocation7 [shape = 's32[4]{0}', space=sflag, size = 0x10, scoped, tag = 'scratch operand']
  #allocation12 [shape = 's32[]', space=sflag, size = 0x4, offset = 0, fixed_abs, tag = 'sflag constant byte address 0x0 - dummy sync flag']
  #allocation13 [shape = 's32[]', space=sflag, size = 0x4, offset = 0, fixed_abs, tag = 'sflag constant byte address 0x0 - dummy sync flag']
  #allocation14 [shape = 's32[]', space=sflag, size = 0x4, offset = 0, fixed_abs, tag = 'sflag constant byte address 0x0 - dummy sync flag']
  #allocation15 [shape = 'u32[]', space=smem, size = 0x4, offset = 0x44, fixed_abs, tag = 'smem constant byte address 0x44 - assertion arg 0']
  #allocation16 [shape = 'u32[]', space=smem, size = 0x4, offset = 0x48, fixed_abs, tag = 'smem constant byte address 0x48 - assertion arg 1']
  #allocation17 [shape = 's32[]', space=sflag, size = 0x4, offset = 0, fixed_abs, tag = 'sflag constant byte address 0x0 - dummy sync flag']
  #allocation18 [shape = 's32[]', space=sflag, size = 0x4, offset = 0, fixed_abs, tag = 'sflag constant byte address 0x0 - dummy sync flag']
  #allocation19 [shape = 's32[]', space=sflag, size = 0x4, offset = 0, fixed_abs, tag = 'sflag constant byte address 0x0 - dummy sync flag']
  %s0 = inlined_call_operand.vmem [shape: f32[8,8,32], index: 0, kind: input, shape index: {}]
  %s1 = inlined_call_operand.hbm [shape: f32[8,1,8], index: 1, kind: input, shape index: {}]
  %s2 = inlined_call_operand.vmem [shape: f32[1,96], index: 2, kind: input, shape index: {}]
  %s3 = inlined_call_operand.vmem [shape: f32[1,32], index: 3, kind: input, shape index: {}]
  %s4 = inlined_call_operand.vmem [shape: f32[1,32], index: 4, kind: input, shape index: {}]
  %s5 = inlined_call_operand.vmem [shape: f32[1,32], index: 5, kind: input, shape index: {}]
  %s6 = inlined_call_operand.vmem [shape: f32[1,64], index: 6, kind: input, shape index: {}]
  %s7 = inlined_call_operand.vmem [shape: f32[1,32], index: 7, kind: input, shape index: {}]
  %s8 = inlined_call_operand.vmem [shape: f32[1,32], index: 8, kind: input, shape index: {}]
  %s9 = inlined_call_operand.vmem [shape: f32[1,32], index: 9, kind: input, shape index: {}]
  %s10 = inlined_call_operand.vmem [shape: f32[32,96], index: 10, kind: input, shape index: {}]
  %s11 = inlined_call_operand.hbm [shape: f32[32,32], index: 11, kind: input, shape index: {}]
  %s12 = inlined_call_operand.hbm [shape: f32[32,64], index: 12, kind: input, shape index: {}]
  %s13 = inlined_call_operand.vmem [shape: f32[64,32], index: 13, kind: input, shape index: {}]
  %s14 = inlined_call_operand.hbm [shape: f32[8,8,32], index: 14, kind: output, shape index: {}]
  %s15 = sld [smem:[#allocation0]]
  $region134: #{tpu_custom_call.1} parent=0
    _
  %s17 = ssub.s32 1, %s15
  %s18 = scalar_select 0, %s17, %s15
  $region1: #{tpu_custom_call.1} parent=0
    #allocation8 [shape = 'u8[4096]{0}', space=vmem, size = 0x1000, scoped, tag = 'input window, operand 1, single buffered']
    #allocation9 [shape = 's32[1]{0}', space=sflag, size = 0x4, scoped, tag = 'scoped memory for tpu_custom_call.1']
    #allocation10 [shape = 's32[1]{0}', space=sflag, size = 0x4, scoped, tag = 'scoped memory for tpu_custom_call.1']
    #allocation11 [shape = 'u8[32768]{0}', space=vmem, size = 0x8000, scoped, tag = 'output window, operand 0, single buffered']
    %19 = vsyncpa [#allocation9], 0
    %20 = vsyncpa [#allocation10], 0
    // Predicated region
    $region2: #{tpu_custom_call.1} parent=1 // pred_check
      _
    $region3: #{tpu_custom_call.1} parent=1 // pred_check_branch
      %22 = sbr.rel (0) target = $region5
    $region4: #{tpu_custom_call.1} parent=1 // pred_region
      _
    $region5: #{tpu_custom_call.1} parent=1 // pred_fallthru
      _
    // Predicated region
    $region6: #{tpu_custom_call.1} parent=1 // pred_check
      _
    $region7: #{tpu_custom_call.1} parent=1 // pred_check_branch
      %24 = sbr.rel (0) target = $region9
    $region8: #{tpu_custom_call.1} parent=1 // pred_region
      %s26 = ssub.s32 128, 128
      %27 = vsyncadd [#allocation9], %s26
      %s28 = sshll.u32 [#allocation8], 4
      %s29 = int_to_ptr.vmem [resolvable:$true] %s28
      %34 = dma.hbm_to_vmem [thread:$0]  %s1, 128, %s29, [#allocation9], 16, 16, 1
    $region9: #{tpu_custom_call.1} parent=1 // pred_fallthru
      _
    // Predicated region
    $region10: #{tpu_custom_call.1} parent=1 // pred_check
      _
    $region11: #{tpu_custom_call.1} parent=1 // pred_check_branch
      %36 = sbr.rel (0) target = $region13
    $region12: #{tpu_custom_call.1} parent=1 // pred_region
      _
    $region13: #{tpu_custom_call.1} parent=1 // pred_fallthru
      _
    // Predicated region
    $region14: #{tpu_custom_call.1} parent=1 // pred_check
      _
    $region15: #{tpu_custom_call.1} parent=1 // pred_check_branch
      %38 = sbr.rel (0) target = $region17
    $region16: #{tpu_custom_call.1} parent=1 // pred_region
      _
    $region17: #{tpu_custom_call.1} parent=1 // pred_fallthru
      _
    // Predicated region
    $region18: #{tpu_custom_call.1} parent=1 // pred_check
      _
    $region19: #{tpu_custom_call.1} parent=1 // pred_check_branch
      %40 = sbr.rel (0) target = $region21
    $region20: #{tpu_custom_call.1} parent=1 // pred_region
      _
    $region21: #{tpu_custom_call.1} parent=1 // pred_fallthru
      _
    // Predicated region
    $region22: #{tpu_custom_call.1} parent=1 // pred_check
      _
    $region23: #{tpu_custom_call.1} parent=1 // pred_check_branch
      %42 = sbr.rel (0) target = $region25
    $region24: #{tpu_custom_call.1} parent=1 // pred_region
      _
    $region25: #{tpu_custom_call.1} parent=1 // pred_fallthru
      _
    // Predicated region
    $region26: #{tpu_custom_call.1} parent=1 // pred_check
      _
    $region27: #{tpu_custom_call.1} parent=1 // pred_check_branch
      %44 = sbr.rel (0) target = $region29
    $region28: #{tpu_custom_call.1} parent=1 // pred_region
      _
    $region29: #{tpu_custom_call.1} parent=1 // pred_fallthru
      _
    // Predicated region
    $region30: #{tpu_custom_call.1} parent=1 // pred_check
      _
    $region31: #{tpu_custom_call.1} parent=1 // pred_check_branch
      %46 = sbr.rel (0) target = $region33
    $region32: #{tpu_custom_call.1} parent=1 // pred_region
      _
    $region33: #{tpu_custom_call.1} parent=1 // pred_fallthru
      _
    // Predicated region
    $region34: #{tpu_custom_call.1} parent=1 // pred_check
      _
    $region35: #{tpu_custom_call.1} parent=1 // pred_check_branch
      %48 = sbr.rel (0) target = $region37
    $region36: #{tpu_custom_call.1} parent=1 // pred_region
      _
    $region37: #{tpu_custom_call.1} parent=1 // pred_fallthru
      _
    // Predicated region
    $region38: #{tpu_custom_call.1} parent=1 // pred_check
      _
    $region39: #{tpu_custom_call.1} parent=1 // pred_check_branch
      %50 = sbr.rel (0) target = $region41
    $region40: #{tpu_custom_call.1} parent=1 // pred_region
      _
    $region41: #{tpu_custom_call.1} parent=1 // pred_fallthru
      _
    // Predicated region
    $region42: #{tpu_custom_call.1} parent=1 // pred_check
      _
    $region43: #{tpu_custom_call.1} parent=1 // pred_check_branch
      %52 = sbr.rel (0) target = $region45
    $region44: #{tpu_custom_call.1} parent=1 // pred_region
      %53 = dma.done [#allocation9], 128
    $region45: #{tpu_custom_call.1} parent=1 // pred_fallthru
      _
    %p54 = scmp.eq.s32.totalorder 0, 0
    // Predicated region
    $region46: #{tpu_custom_call.1} parent=1 // pred_check
      %p55 = pneg %p54
    $region47: #{tpu_custom_call.1} parent=1 // pred_check_branch
      %57 = sbr.rel (%p55) target = $region49
    $region48: #{tpu_custom_call.1} parent=1 // pred_region
      %p59 = scmp.lt.u32.totalorder 32, 8
      %p60 = pneg %p59
      // Predicated region
      $region50: #{tpu_custom_call.1} parent=48 // pred_check
        _
      $region51: #{tpu_custom_call.1} parent=48 // pred_check_branch
        %62 = sbr.rel (%p59) target = $region53
      $region52: #{tpu_custom_call.1} parent=48 // pred_region
        %s77 = sand.u32 32, 7
        %p78 = scmp.eq.s32.totalorder %s77, 0
        // Predicated region
        $region65: #{tpu_custom_call.1} parent=52 // pred_check
          %p79 = pneg %p78
        $region66: #{tpu_custom_call.1} parent=52 // pred_check_branch
          %81 = sbr.rel (%p79) target = $region68
        $region67: #{tpu_custom_call.1} parent=52 // pred_region
          loop: start=0, step=1, limit=1
          $region69: #{tpu_custom_call.1} parent=67 // loop_pre_header
            _
          $region70: #{tpu_custom_call.1} parent=67 // loop_header
            %s83 = sphi 0, %s87
            %p84 = scmp.ge.s32.totalorder %s83, 1
            %s88 = sphi %s10, %s10
            %s89 = sphi [#allocation2], [#allocation2]
          $region71: #{tpu_custom_call.1} parent=67 // loop_header_branch
            %86 = sbr.rel (%p84) target = $region75
          $region72: #{tpu_custom_call.1} parent=67 // loop_body
            %v90 = vld [vmem:[%s88] sm:$0xff]
            %91 = vst [vmem:[%s89] sm:$0xff] %v90
            %v92 = vld [vmem:[%s88 + $0x8] sm:$0xff]
            %93 = vst [vmem:[%s89 + $0x8] sm:$0xff] %v92
            %v94 = vld [vmem:[%s88 + $0x10] sm:$0xff]
            %95 = vst [vmem:[%s89 + $0x10] sm:$0xff] %v94
            %v96 = vld [vmem:[%s88 + $0x18] sm:$0xff]
            %97 = vst [vmem:[%s89 + $0x18] sm:$0xff] %v96
          $region73: #{tpu_custom_call.1} parent=67 // loop_footer
            %s87 = sadd.s32 1, %s83
          $region74: #{tpu_custom_call.1} parent=67 // loop_footer_branch
            %82 = sbr.rel target = $region70
          $region75: #{tpu_custom_call.1} parent=67 // loop_exit
            _
        $region68: #{tpu_custom_call.1} parent=52 // pred_fallthru
          _
        %p98 = pneg %p78
        // Predicated region
        $region76: #{tpu_custom_call.1} parent=52 // pred_check
          _
        $region77: #{tpu_custom_call.1} parent=52 // pred_check_branch
          %100 = sbr.rel (%p78) target = $region79
        $region78: #{tpu_custom_call.1} parent=52 // pred_region
          %s101 = sand.u32 32, 7
        $region79: #{tpu_custom_call.1} parent=52 // pred_fallthru
          _
      $region53: #{tpu_custom_call.1} parent=48 // pred_fallthru
        _
      // Predicated region
      $region54: #{tpu_custom_call.1} parent=48 // pred_check
        %p63 = pneg %p59
      $region55: #{tpu_custom_call.1} parent=48 // pred_check_branch
        %65 = sbr.rel (%p63) target = $region57
      $region56: #{tpu_custom_call.1} parent=48 // pred_region
        %s66 = sshllo.u32 0, 32
        loop: start=0, step=1, limit=1
        $region58: #{tpu_custom_call.1} parent=56 // loop_pre_header
          _
        $region59: #{tpu_custom_call.1} parent=56 // loop_header
          %s68 = sphi 0, %s72
          %p69 = scmp.ge.s32.totalorder %s68, 1
          %s73 = sphi %s10, %s10
          %s74 = sphi [#allocation2], [#allocation2]
        $region60: #{tpu_custom_call.1} parent=56 // loop_header_branch
          %71 = sbr.rel (%p69) target = $region64
        $region61: #{tpu_custom_call.1} parent=56 // loop_body
          %v75 = vld [vmem:[%s73] sm:%s66]
          %76 = vst [vmem:[%s74] sm:%s66] %v75
        $region62: #{tpu_custom_call.1} parent=56 // loop_footer
          %s72 = sadd.s32 1, %s68
        $region63: #{tpu_custom_call.1} parent=56 // loop_footer_branch
          %67 = sbr.rel target = $region59
        $region64: #{tpu_custom_call.1} parent=56 // loop_exit
          _
      $region57: #{tpu_custom_call.1} parent=48 // pred_fallthru
        _
      // Predicated region
      $region80: #{tpu_custom_call.1} parent=48 // pred_check
        _
      $region81: #{tpu_custom_call.1} parent=48 // pred_check_branch
        %104 = sbr.rel (0) target = $region83
      $region82: #{tpu_custom_call.1} parent=48 // pred_region
        %105 = vsyncadd [#allocation7], 512
      $region83: #{tpu_custom_call.1} parent=48 // pred_fallthru
        _
      %s106 = scalar_lea.sflag [#allocation7], 1
      // Predicated region
      $region84: #{tpu_custom_call.1} parent=48 // pred_check
        _
      $region85: #{tpu_custom_call.1} parent=48 // pred_check_branch
        %108 = sbr.rel target = $region87
      $region86: #{tpu_custom_call.1} parent=48 // pred_region
        %109 = sst [smem:[#allocation15]] [#allocation14]
        %110 = sst [smem:[#allocation16]] [#allocation13]
      $region87: #{tpu_custom_call.1} parent=48 // pred_fallthru
        _
      %112 = shalt.err (0)
      %s114 = sshll.u32 [#allocation3], 4
      %s115 = int_to_ptr.vmem [resolvable:$true] %s114
      %117 = dma.hbm_to_vmem [thread:$0]  %s11, 512, %s115, %s106
      %s118 = scalar_lea.sflag [#allocation7], 2
      // Predicated region
      $region88: #{tpu_custom_call.1} parent=48 // pred_check
        _
      $region89: #{tpu_custom_call.1} parent=48 // pred_check_branch
        %120 = sbr.rel target = $region91
      $region90: #{tpu_custom_call.1} parent=48 // pred_region
        %121 = sst [smem:[#allocation15]] [#allocation18]
        %122 = sst [smem:[#allocation16]] [#allocation17]
      $region91: #{tpu_custom_call.1} parent=48 // pred_fallthru
        _
      %124 = shalt.err (0)
      %s126 = sshll.u32 [#allocation4], 4
      %s127 = int_to_ptr.vmem [resolvable:$true] %s126
      %129 = dma.hbm_to_vmem [thread:$0]  %s12, 512, %s127, %s118
      %s130 = scalar_lea.sflag [#allocation7], 3
      %p132 = scmp.lt.u32.totalorder 64, 8
      %p133 = pneg %p132
      // Predicated region
      $region92: #{tpu_custom_call.1} parent=48 // pred_check
        _
      $region93: #{tpu_custom_call.1} parent=48 // pred_check_branch
        %135 = sbr.rel (%p132) target = $region95
      $region94: #{tpu_custom_call.1} parent=48 // pred_region
        %s150 = sand.u32 64, 7
        %p151 = scmp.eq.s32.totalorder %s150, 0
        // Predicated region
        $region107: #{tpu_custom_call.1} parent=94 // pred_check
          %p152 = pneg %p151
        $region108: #{tpu_custom_call.1} parent=94 // pred_check_branch
          %154 = sbr.rel (%p152) target = $region110
        $region109: #{tpu_custom_call.1} parent=94 // pred_region
          loop: start=0, step=1, limit=1
          $region111: #{tpu_custom_call.1} parent=109 // loop_pre_header
            _
          $region112: #{tpu_custom_call.1} parent=109 // loop_header
            %s156 = sphi 0, %s160
            %p157 = scmp.ge.s32.totalorder %s156, 1
            %s161 = sphi %s13, %s13
            %s162 = sphi [#allocation5], [#allocation5]
          $region113: #{tpu_custom_call.1} parent=109 // loop_header_branch
            %159 = sbr.rel (%p157) target = $region117
          $region114: #{tpu_custom_call.1} parent=109 // loop_body
            %v163 = vld [vmem:[%s161] sm:$0xff]
            %164 = vst [vmem:[%s162] sm:$0xff] %v163
            %v165 = vld [vmem:[%s161 + $0x8] sm:$0xff]
            %166 = vst [vmem:[%s162 + $0x8] sm:$0xff] %v165
            %v167 = vld [vmem:[%s161 + $0x10] sm:$0xff]
            %168 = vst [vmem:[%s162 + $0x10] sm:$0xff] %v167
            %v169 = vld [vmem:[%s161 + $0x18] sm:$0xff]
            %170 = vst [vmem:[%s162 + $0x18] sm:$0xff] %v169
            %v171 = vld [vmem:[%s161 + $0x20] sm:$0xff]
            %172 = vst [vmem:[%s162 + $0x20] sm:$0xff] %v171
            %v173 = vld [vmem:[%s161 + $0x28] sm:$0xff]
            %174 = vst [vmem:[%s162 + $0x28] sm:$0xff] %v173
            %v175 = vld [vmem:[%s161 + $0x30] sm:$0xff]
            %176 = vst [vmem:[%s162 + $0x30] sm:$0xff] %v175
            %v177 = vld [vmem:[%s161 + $0x38] sm:$0xff]
            %178 = vst [vmem:[%s162 + $0x38] sm:$0xff] %v177
          $region115: #{tpu_custom_call.1} parent=109 // loop_footer
            %s160 = sadd.s32 1, %s156
          $region116: #{tpu_custom_call.1} parent=109 // loop_footer_branch
            %155 = sbr.rel target = $region112
          $region117: #{tpu_custom_call.1} parent=109 // loop_exit
            _
        $region110: #{tpu_custom_call.1} parent=94 // pred_fallthru
          _
        %p179 = pneg %p151
        // Predicated region
        $region118: #{tpu_custom_call.1} parent=94 // pred_check
          _
        $region119: #{tpu_custom_call.1} parent=94 // pred_check_branch
          %181 = sbr.rel (%p151) target = $region121
        $region120: #{tpu_custom_call.1} parent=94 // pred_region
          %s182 = sand.u32 64, 7
        $region121: #{tpu_custom_call.1} parent=94 // pred_fallthru
          _
      $region95: #{tpu_custom_call.1} parent=48 // pred_fallthru
        _
      // Predicated region
      $region96: #{tpu_custom_call.1} parent=48 // pred_check
        %p136 = pneg %p132
      $region97: #{tpu_custom_call.1} parent=48 // pred_check_branch
        %138 = sbr.rel (%p136) target = $region99
      $region98: #{tpu_custom_call.1} parent=48 // pred_region
        %s139 = sshllo.u32 0, 64
        loop: start=0, step=1, limit=1
        $region100: #{tpu_custom_call.1} parent=98 // loop_pre_header
          _
        $region101: #{tpu_custom_call.1} parent=98 // loop_header
          %s141 = sphi 0, %s145
          %p142 = scmp.ge.s32.totalorder %s141, 1
          %s146 = sphi %s13, %s13
          %s147 = sphi [#allocation5], [#allocation5]
        $region102: #{tpu_custom_call.1} parent=98 // loop_header_branch
          %144 = sbr.rel (%p142) target = $region106
        $region103: #{tpu_custom_call.1} parent=98 // loop_body
          %v148 = vld [vmem:[%s146] sm:%s139]
          %149 = vst [vmem:[%s147] sm:%s139] %v148
        $region104: #{tpu_custom_call.1} parent=98 // loop_footer
          %s145 = sadd.s32 1, %s141
        $region105: #{tpu_custom_call.1} parent=98 // loop_footer_branch
          %140 = sbr.rel target = $region101
        $region106: #{tpu_custom_call.1} parent=98 // loop_exit
          _
      $region99: #{tpu_custom_call.1} parent=48 // pred_fallthru
        _
      // Predicated region
      $region122: #{tpu_custom_call.1} parent=48 // pred_check
        _
      $region123: #{tpu_custom_call.1} parent=48 // pred_check_branch
        %185 = sbr.rel (0) target = $region125
      $region124: #{tpu_custom_call.1} parent=48 // pred_region
        %186 = vsyncadd %s130, 1024
      $region125: #{tpu_custom_call.1} parent=48 // pred_fallthru
        _
      %s187 = smul.u32 32, 1
      %s188 = sshll.u32 %s187, 4
      %189 = dma.done [#allocation7], %s188
      %s190 = sshll.u32 %s187, 4
      %191 = dma.done %s106, %s190
      %s192 = sshll.u32 %s187, 4
      %193 = dma.done %s118, %s192
      %s194 = smul.u32 64, 1
      %s195 = sshll.u32 %s194, 4
      %196 = dma.done %s130, %s195
    $region49: #{tpu_custom_call.1} parent=1 // pred_fallthru
      _
    %v197 = vld [vmem:[%s0] sm:$0xff]
    %v198 = vld [vmem:[%s0 + $0x8] sm:$0xff]
    %v199 = vld [vmem:[%s0 + $0x10] sm:$0xff]
    %v200 = vld [vmem:[%s0 + $0x18] sm:$0xff]
    %v201 = vld [vmem:[%s0 + $0x20] sm:$0xff]
    %v202 = vld [vmem:[%s0 + $0x28] sm:$0xff]
    %v203 = vld [vmem:[%s0 + $0x30] sm:$0xff]
    %v204 = vld [vmem:[%s0 + $0x38] sm:$0xff]
    %v205 = vld [vmem:[#allocation8] sm:$0x1]
    %v206 = vld [vmem:[#allocation8 + $0x1] sm:$0x1]
    %v207 = vld [vmem:[#allocation8 + $0x2] sm:$0x1]
    %v208 = vld [vmem:[#allocation8 + $0x3] sm:$0x1]
    %v209 = vld [vmem:[#allocation8 + $0x4] sm:$0x1]
    %v210 = vld [vmem:[#allocation8 + $0x5] sm:$0x1]
    %v211 = vld [vmem:[#allocation8 + $0x6] sm:$0x1]
    %v212 = vld [vmem:[#allocation8 + $0x7] sm:$0x1]
    %v213 = vlaneseq
    %v214 = vshrl.u32 %v213, 7
    %v215 = vsub.s32 0, %v214
    %v216 = vrot.slane %v205, %v215
    %218 = vbcast.lane.b32.xlu0 %v216, 256
    %v219 = vpop.permute.xlu0 %218
    %v220 = vlaneseq
    %v221 = vshrl.u32 %v220, 7
    %v222 = vsub.s32 0, %v221
    %v223 = vrot.slane %v206, %v222
    %225 = vbcast.lane.b32.xlu0 %v223, 256
    %v226 = vpop.permute.xlu0 %225
    %v227 = vlaneseq
    %v228 = vshrl.u32 %v227, 7
    %v229 = vsub.s32 0, %v228
    %v230 = vrot.slane %v207, %v229
    %232 = vbcast.lane.b32.xlu0 %v230, 256
    %v233 = vpop.permute.xlu0 %232
    %v234 = vlaneseq
    %v235 = vshrl.u32 %v234, 7
    %v236 = vsub.s32 0, %v235
    %v237 = vrot.slane %v208, %v236
    %239 = vbcast.lane.b32.xlu0 %v237, 256
    %v240 = vpop.permute.xlu0 %239
    %v241 = vlaneseq
    %v242 = vshrl.u32 %v241, 7
    %v243 = vsub.s32 0, %v242
    %v244 = vrot.slane %v209, %v243
    %246 = vbcast.lane.b32.xlu0 %v244, 256
    %v247 = vpop.permute.xlu0 %246
    %v248 = vlaneseq
    %v249 = vshrl.u32 %v248, 7
    %v250 = vsub.s32 0, %v249
    %v251 = vrot.slane %v210, %v250
    %253 = vbcast.lane.b32.xlu0 %v251, 256
    %v254 = vpop.permute.xlu0 %253
    %v255 = vlaneseq
    %v256 = vshrl.u32 %v255, 7
    %v257 = vsub.s32 0, %v256
    %v258 = vrot.slane %v211, %v257
    %260 = vbcast.lane.b32.xlu0 %v258, 256
    %v261 = vpop.permute.xlu0 %260
    %v262 = vlaneseq
    %v263 = vshrl.u32 %v262, 7
    %v264 = vsub.s32 0, %v263
    %v265 = vrot.slane %v212, %v264
    %267 = vbcast.lane.b32.xlu0 %v265, 256
    %v268 = vpop.permute.xlu0 %267
    %v277 = vlaneseq
    %v278 = vshrl.u32 %v277, 7
    %v279 = vsub.s32 0, %v278
    %v280 = vrot.slane %v205, %v279
    %v281 = vlaneseq
    %v282 = vshrl.u32 %v281, 7
    %v283 = vsub.s32 0, %v282
    %v284 = vrot.slane %v206, %v283
    %v285 = vlaneseq
    %v286 = vshrl.u32 %v285, 7
    %v287 = vsub.s32 0, %v286
    %v288 = vrot.slane %v207, %v287
    %v289 = vlaneseq
    %v290 = vshrl.u32 %v289, 7
    %v291 = vsub.s32 0, %v290
    %v292 = vrot.slane %v208, %v291
    %v293 = vlaneseq
    %v294 = vshrl.u32 %v293, 7
    %v295 = vsub.s32 0, %v294
    %v296 = vrot.slane %v209, %v295
    %v297 = vlaneseq
    %v298 = vshrl.u32 %v297, 7
    %v299 = vsub.s32 0, %v298
    %v300 = vrot.slane %v210, %v299
    %v301 = vlaneseq
    %v302 = vshrl.u32 %v301, 7
    %v303 = vsub.s32 0, %v302
    %v304 = vrot.slane %v211, %v303
    %v305 = vlaneseq
    %v306 = vshrl.u32 %v305, 7
    %v307 = vsub.s32 0, %v306
    %v308 = vrot.slane %v212, %v307
    %v317 = vmul.f32 %v219, %v280
    %v318 = vmul.f32 %v226, %v284
    %v319 = vmul.f32 %v233, %v288
    %v320 = vmul.f32 %v240, %v292
    %v321 = vmul.f32 %v247, %v296
    %v322 = vmul.f32 %v254, %v300
    %v323 = vmul.f32 %v261, %v304
    %v324 = vmul.f32 %v268, %v308
    %v325 = vsub.f32 1.0, %v317
    %v326 = vsub.f32 1.0, %v318
    %v327 = vsub.f32 1.0, %v319
    %v328 = vsub.f32 1.0, %v320
    %v329 = vsub.f32 1.0, %v321
    %v330 = vsub.f32 1.0, %v322
    %v331 = vsub.f32 1.0, %v323
    %v332 = vsub.f32 1.0, %v324
    %v333 = vmul.f32 %v325, -1e+30
    %v334 = vmul.f32 %v326, -1e+30
    %v335 = vmul.f32 %v327, -1e+30
    %v336 = vmul.f32 %v328, -1e+30
    %v337 = vmul.f32 %v329, -1e+30
    %v338 = vmul.f32 %v330, -1e+30
    %v339 = vmul.f32 %v331, -1e+30
    %v340 = vmul.f32 %v332, -1e+30
    %v341 = vld [vmem:[#allocation2] sm:$0xff]
    %v342 = vld [vmem:[#allocation2 + $0x8] sm:$0xff]
    %v343 = vld [vmem:[#allocation2 + $0x10] sm:$0xff]
    %v344 = vld [vmem:[#allocation2 + $0x18] sm:$0xff]
    %v345 = vld [vmem:[%s2] sm:$0x1]
    %v347 = vlaneseq
    %v348 = vshrl.u32 %v347, 7
    %v349 = vsub.s32 0, %v348
    %v350 = vrot.slane %v345, %v349
    %vm352 = vcmask 261120
    %v354 = vsel %vm352, %v197, 0
    %v357 = vsel %vm352, %v198, 0
    %v360 = vsel %vm352, %v199, 0
    %v363 = vsel %vm352, %v200, 0
    %v366 = vsel %vm352, %v201, 0
    %v369 = vsel %vm352, %v202, 0
    %v372 = vsel %vm352, %v203, 0
    %v375 = vsel %vm352, %v204, 0
    %377 = vmatprep.subr.mxu0 0.0
    %378 = vmatpush1.msra.mxu0 %v341
    %379 = vmatprep.subr.mxu0 0.0
    %380 = vmatpush1.msra.mxu0 %v342
    %381 = vmatprep.subr.mxu0 0.0
    %382 = vmatpush1.msra.mxu0 %v343
    %383 = vmatprep.subr.mxu0 0.0
    %384 = vmatpush1.msra.mxu0 %v344
    %385 = vmatprep.subr.mxu0 0.0
    %386 = vmatpush1.msra.mxu0 0.0
    %387 = vmatprep.subr.mxu0 0.0
    %388 = vmatpush1.msra.mxu0 0.0
    %389 = vmatprep.subr.mxu0 0.0
    %390 = vmatpush1.msra.mxu0 0.0
    %391 = vmatprep.subr.mxu0 0.0
    %392 = vmatpush1.msra.mxu0 0.0
    %393 = vmatprep.subr.mxu0 0.0
    %394 = vmatpush1.msra.mxu0 0.0
    %395 = vmatprep.subr.mxu0 0.0
    %396 = vmatpush1.msra.mxu0 0.0
    %397 = vmatprep.subr.mxu0 0.0
    %398 = vmatpush1.msra.mxu0 0.0
    %399 = vmatprep.subr.mxu0 0.0
    %400 = vmatpush1.msra.mxu0 0.0
    %401 = vmatprep.subr.mxu0 0.0
    %402 = vmatpush1.msra.mxu0 0.0
    %403 = vmatprep.subr.mxu0 0.0
    %404 = vmatpush1.msra.mxu0 0.0
    %405 = vmatprep.subr.mxu0 0.0
    %406 = vmatpush1.msra.mxu0 0.0
    %407 = vmatprep.subr.mxu0 0.0
    %408 = vmatpush1.msra.mxu0 0.0
    %409 = vmatprep.subr.mxu0 0.0
    %410 = vmatpush1.msra.mxu0 0.0
    %411 = vmatprep.subr.mxu0 0.0
    %412 = vmatpush1.msra.mxu0 0.0
    %413 = vmatprep.subr.mxu0 0.0
    %414 = vmatpush1.msra.mxu0 0.0
    %415 = vmatprep.subr.mxu0 0.0
    %416 = vmatpush1.msra.mxu0 0.0
    %417 = vmatprep.subr.mxu0 0.0
    %418 = vmatpush1.msra.mxu0 0.0
    %419 = vmatprep.subr.mxu0 0.0
    %420 = vmatpush1.msra.mxu0 0.0
    %421 = vmatprep.subr.mxu0 0.0
    %422 = vmatpush1.msra.mxu0 0.0
    %423 = vmatprep.subr.mxu0 0.0
    %424 = vmatpush1.msra.mxu0 0.0
    %425 = vmatprep.subr.mxu0 0.0
    %426 = vmatpush1.msra.mxu0 0.0
    %427 = vmatprep.subr.mxu0 0.0
    %428 = vmatpush1.msra.mxu0 0.0
    %429 = vmatprep.subr.mxu0 0.0
    %430 = vmatpush1.msra.mxu0 0.0
    %431 = vmatprep.subr.mxu0 0.0
    %432 = vmatpush1.msra.mxu0 0.0
    %433 = vmatprep.subr.mxu0 0.0
    %434 = vmatpush1.msra.mxu0 0.0
    %435 = vmatprep.subr.mxu0 0.0
    %436 = vmatpush1.msra.mxu0 0.0
    %437 = vmatprep.subr.mxu0 0.0
    %438 = vmatpush1.msra.mxu0 0.0
    %439 = vmatprep.subr.mxu0 0.0
    %440 = vmatpush1.msra.mxu0 0.0
    %441 = vmatprep.mubr.f32.mxu0 0.0
    %442 = vmatmul.mubr.f32.gmra.mrb[0].mxu0 %v354
    %v443 = vpop.f32.mrb[0].mxu0
    %v444 = vadd.f32 %v350, %v443
    %v445 = vpop.f32.mrb[0].mxu0
    %446 = vmatprep.mubr.f32.mxu0 0.0
    %447 = vmatmul.mubr.f32.gmra.mrb[0].mxu0 %v357
    %v448 = vpop.f32.mrb[0].mxu0
    %v449 = vadd.f32 %v350, %v448
    %v450 = vpop.f32.mrb[0].mxu0
    %451 = vmatprep.mubr.f32.mxu0 0.0
    %452 = vmatmul.mubr.f32.gmra.mrb[0].mxu0 %v360
    %v453 = vpop.f32.mrb[0].mxu0
    %v454 = vadd.f32 %v350, %v453
    %v455 = vpop.f32.mrb[0].mxu0
    %456 = vmatprep.mubr.f32.mxu0 0.0
    %457 = vmatmul.mubr.f32.gmra.mrb[0].mxu0 %v363
    %v458 = vpop.f32.mrb[0].mxu0
    %v459 = vadd.f32 %v350, %v458
    %v460 = vpop.f32.mrb[0].mxu0
    %461 = vmatprep.mubr.f32.mxu0 0.0
    %462 = vmatmul.mubr.f32.gmra.mrb[0].mxu0 %v366
    %v463 = vpop.f32.mrb[0].mxu0
    %v464 = vadd.f32 %v350, %v463
    %v465 = vpop.f32.mrb[0].mxu0
    %466 = vmatprep.mubr.f32.mxu0 0.0
    %467 = vmatmul.mubr.f32.gmra.mrb[0].mxu0 %v369
    %v468 = vpop.f32.mrb[0].mxu0
    %v469 = vadd.f32 %v350, %v468
    %v470 = vpop.f32.mrb[0].mxu0
    %471 = vmatprep.mubr.f32.mxu0 0.0
    %472 = vmatmul.mubr.f32.gmra.mrb[0].mxu0 %v372
    %v473 = vpop.f32.mrb[0].mxu0
    %v474 = vadd.f32 %v350, %v473
    %v475 = vpop.f32.mrb[0].mxu0
    %476 = vmatprep.mubr.f32.mxu0 0.0
    %477 = vmatmul.mubr.f32.gmra.mrb[0].mxu0 %v375
    %v478 = vpop.f32.mrb[0].mxu0
    %v479 = vadd.f32 %v350, %v478
    %v480 = vpop.f32.mrb[0].mxu0
    %481 = vdwg.mxu0
    %483 = vrot.lane.b32.xlu0 %v444, 96
    %v484 = vpop.permute.xlu0 %483
    %vm485 = vcmask 130048
    %v486 = vsel %vm485, %v444, 0
    %v488 = vsel %vm485, %v484, 0
    %490 = vmatprep.subr.mxu0 0.0
    %491 = vmatpush1.xpose.msra.mxu0 %v488
    %492 = vmatprep.subr.mxu0 0.0
    %493 = vmatpush1.xpose.msra.mxu0 0.0
    %494 = vmatprep.subr.mxu0 0.0
    %495 = vmatpush1.xpose.msra.mxu0 0.0
    %496 = vmatprep.subr.mxu0 0.0
    %497 = vmatpush1.xpose.msra.mxu0 0.0
    %498 = vmatprep.subr.mxu0 0.0
    %499 = vmatpush1.xpose.msra.mxu0 0.0
    %500 = vmatprep.subr.mxu0 0.0
    %501 = vmatpush1.xpose.msra.mxu0 0.0
    %502 = vmatprep.subr.mxu0 0.0
    %503 = vmatpush1.xpose.msra.mxu0 0.0
    %504 = vmatprep.subr.mxu0 0.0
    %505 = vmatpush1.xpose.msra.mxu0 0.0
    %506 = vmatprep.subr.mxu0 0.0
    %507 = vmatpush1.xpose.msra.mxu0 0.0
    %508 = vmatprep.subr.mxu0 0.0
    %509 = vmatpush1.xpose.msra.mxu0 0.0
    %510 = vmatprep.subr.mxu0 0.0
    %511 = vmatpush1.xpose.msra.mxu0 0.0
    %512 = vmatprep.subr.mxu0 0.0
    %513 = vmatpush1.xpose.msra.mxu0 0.0
    %514 = vmatprep.subr.mxu0 0.0
    %515 = vmatpush1.xpose.msra.mxu0 0.0
    %516 = vmatprep.subr.mxu0 0.0
    %517 = vmatpush1.xpose.msra.mxu0 0.0
    %518 = vmatprep.subr.mxu0 0.0
    %519 = vmatpush1.xpose.msra.mxu0 0.0
    %520 = vmatprep.subr.mxu0 0.0
    %521 = vmatpush1.xpose.msra.mxu0 0.0
    %522 = vmatprep.subr.mxu0 0.0
    %523 = vmatpush1.xpose.msra.mxu0 0.0
    %524 = vmatprep.subr.mxu0 0.0
    %525 = vmatpush1.xpose.msra.mxu0 0.0
    %526 = vmatprep.subr.mxu0 0.0
    %527 = vmatpush1.xpose.msra.mxu0 0.0
    %528 = vmatprep.subr.mxu0 0.0
    %529 = vmatpush1.xpose.msra.mxu0 0.0
    %530 = vmatprep.subr.mxu0 0.0
    %531 = vmatpush1.xpose.msra.mxu0 0.0
    %532 = vmatprep.subr.mxu0 0.0
    %533 = vmatpush1.xpose.msra.mxu0 0.0
    %534 = vmatprep.subr.mxu0 0.0
    %535 = vmatpush1.xpose.msra.mxu0 0.0
    %536 = vmatprep.subr.mxu0 0.0
    %537 = vmatpush1.xpose.msra.mxu0 0.0
    %538 = vmatprep.subr.mxu0 0.0
    %539 = vmatpush1.xpose.msra.mxu0 0.0
    %540 = vmatprep.subr.mxu0 0.0
    %541 = vmatpush1.xpose.msra.mxu0 0.0
    %542 = vmatprep.subr.mxu0 0.0
    %543 = vmatpush1.xpose.msra.mxu0 0.0
    %544 = vmatprep.subr.mxu0 0.0
    %545 = vmatpush1.xpose.msra.mxu0 0.0
    %546 = vmatprep.subr.mxu0 0.0
    %547 = vmatpush1.xpose.msra.mxu0 0.0
    %548 = vmatprep.subr.mxu0 0.0
    %549 = vmatpush1.xpose.msra.mxu0 0.0
    %550 = vmatprep.subr.mxu0 0.0
    %551 = vmatpush1.xpose.msra.mxu0 0.0
    %552 = vmatprep.subr.mxu0 0.0
    %553 = vmatpush1.xpose.msra.mxu0 0.0
    %554 = vmatprep.mubr.f32.mxu0 0.0
    %555 = vmatmul.mubr.f32.gmra.mrb[0].mxu0 %v486
    %v556 = vpop.f32.mrb[0].mxu0
    %v557 = vadd.f32 %v333, %v556
    %v558 = vpop.f32.mrb[0].mxu0
    %559 = vdwg.mxu0
    %561 = vrot.lane.b32.xlu0 %v449, 96
    %v562 = vpop.permute.xlu0 %561
    %v563 = vsel %vm485, %v449, 0
    %v565 = vsel %vm485, %v562, 0
    %567 = vmatprep.subr.mxu0 0.0
    %568 = vmatpush1.xpose.msra.mxu0 %v565
    %569 = vmatprep.subr.mxu0 0.0
    %570 = vmatpush1.xpose.msra.mxu0 0.0
    %571 = vmatprep.subr.mxu0 0.0
    %572 = vmatpush1.xpose.msra.mxu0 0.0
    %573 = vmatprep.subr.mxu0 0.0
    %574 = vmatpush1.xpose.msra.mxu0 0.0
    %575 = vmatprep.subr.mxu0 0.0
    %576 = vmatpush1.xpose.msra.mxu0 0.0
    %577 = vmatprep.subr.mxu0 0.0
    %578 = vmatpush1.xpose.msra.mxu0 0.0
    %579 = vmatprep.subr.mxu0 0.0
    %580 = vmatpush1.xpose.msra.mxu0 0.0
    %581 = vmatprep.subr.mxu0 0.0
    %582 = vmatpush1.xpose.msra.mxu0 0.0
    %583 = vmatprep.subr.mxu0 0.0
    %584 = vmatpush1.xpose.msra.mxu0 0.0
    %585 = vmatprep.subr.mxu0 0.0
    %586 = vmatpush1.xpose.msra.mxu0 0.0
    %587 = vmatprep.subr.mxu0 0.0
    %588 = vmatpush1.xpose.msra.mxu0 0.0
    %589 = vmatprep.subr.mxu0 0.0
    %590 = vmatpush1.xpose.msra.mxu0 0.0
    %591 = vmatprep.subr.mxu0 0.0
    %592 = vmatpush1.xpose.msra.mxu0 0.0
    %593 = vmatprep.subr.mxu0 0.0
    %594 = vmatpush1.xpose.msra.mxu0 0.0
    %595 = vmatprep.subr.mxu0 0.0
    %596 = vmatpush1.xpose.msra.mxu0 0.0
    %597 = vmatprep.subr.mxu0 0.0
    %598 = vmatpush1.xpose.msra.mxu0 0.0
    %599 = vmatprep.subr.mxu0 0.0
    %600 = vmatpush1.xpose.msra.mxu0 0.0
    %601 = vmatprep.subr.mxu0 0.0
    %602 = vmatpush1.xpose.msra.mxu0 0.0
    %603 = vmatprep.subr.mxu0 0.0
    %604 = vmatpush1.xpose.msra.mxu0 0.0
    %605 = vmatprep.subr.mxu0 0.0
    %606 = vmatpush1.xpose.msra.mxu0 0.0
    %607 = vmatprep.subr.mxu0 0.0
    %608 = vmatpush1.xpose.msra.mxu0 0.0
    %609 = vmatprep.subr.mxu0 0.0
    %610 = vmatpush1.xpose.msra.mxu0 0.0
    %611 = vmatprep.subr.mxu0 0.0
    %612 = vmatpush1.xpose.msra.mxu0 0.0
    %613 = vmatprep.subr.mxu0 0.0
    %614 = vmatpush1.xpose.msra.mxu0 0.0
    %615 = vmatprep.subr.mxu0 0.0
    %616 = vmatpush1.xpose.msra.mxu0 0.0
    %617 = vmatprep.subr.mxu0 0.0
    %618 = vmatpush1.xpose.msra.mxu0 0.0
    %619 = vmatprep.subr.mxu0 0.0
    %620 = vmatpush1.xpose.msra.mxu0 0.0
    %621 = vmatprep.subr.mxu0 0.0
    %622 = vmatpush1.xpose.msra.mxu0 0.0
    %623 = vmatprep.subr.mxu0 0.0
    %624 = vmatpush1.xpose.msra.mxu0 0.0
    %625 = vmatprep.subr.mxu0 0.0
    %626 = vmatpush1.xpose.msra.mxu0 0.0
    %627 = vmatprep.subr.mxu0 0.0
    %628 = vmatpush1.xpose.msra.mxu0 0.0
    %629 = vmatprep.subr.mxu0 0.0
    %630 = vmatpush1.xpose.msra.mxu0 0.0
    %631 = vmatprep.mubr.f32.mxu0 0.0
    %632 = vmatmul.mubr.f32.gmra.mrb[0].mxu0 %v563
    %v633 = vpop.f32.mrb[0].mxu0
    %v634 = vadd.f32 %v334, %v633
    %v635 = vpop.f32.mrb[0].mxu0
    %636 = vdwg.mxu0
    %638 = vrot.lane.b32.xlu0 %v454, 96
    %v639 = vpop.permute.xlu0 %638
    %v640 = vsel %vm485, %v454, 0
    %v642 = vsel %vm485, %v639, 0
    %644 = vmatprep.subr.mxu0 0.0
    %645 = vmatpush1.xpose.msra.mxu0 %v642
    %646 = vmatprep.subr.mxu0 0.0
    %647 = vmatpush1.xpose.msra.mxu0 0.0
    %648 = vmatprep.subr.mxu0 0.0
    %649 = vmatpush1.xpose.msra.mxu0 0.0
    %650 = vmatprep.subr.mxu0 0.0
    %651 = vmatpush1.xpose.msra.mxu0 0.0
    %652 = vmatprep.subr.mxu0 0.0
    %653 = vmatpush1.xpose.msra.mxu0 0.0
    %654 = vmatprep.subr.mxu0 0.0
    %655 = vmatpush1.xpose.msra.mxu0 0.0
    %656 = vmatprep.subr.mxu0 0.0
    %657 = vmatpush1.xpose.msra.mxu0 0.0
    %658 = vmatprep.subr.mxu0 0.0
    %659 = vmatpush1.xpose.msra.mxu0 0.0
    %660 = vmatprep.subr.mxu0 0.0
    %661 = vmatpush1.xpose.msra.mxu0 0.0
    %662 = vmatprep.subr.mxu0 0.0
    %663 = vmatpush1.xpose.msra.mxu0 0.0
    %664 = vmatprep.subr.mxu0 0.0
    %665 = vmatpush1.xpose.msra.mxu0 0.0
    %666 = vmatprep.subr.mxu0 0.0
    %667 = vmatpush1.xpose.msra.mxu0 0.0
    %668 = vmatprep.subr.mxu0 0.0
    %669 = vmatpush1.xpose.msra.mxu0 0.0
    %670 = vmatprep.subr.mxu0 0.0
    %671 = vmatpush1.xpose.msra.mxu0 0.0
    %672 = vmatprep.subr.mxu0 0.0
    %673 = vmatpush1.xpose.msra.mxu0 0.0
    %674 = vmatprep.subr.mxu0 0.0
    %675 = vmatpush1.xpose.msra.mxu0 0.0
    %676 = vmatprep.subr.mxu0 0.0
    %677 = vmatpush1.xpose.msra.mxu0 0.0
    %678 = vmatprep.subr.mxu0 0.0
    %679 = vmatpush1.xpose.msra.mxu0 0.0
    %680 = vmatprep.subr.mxu0 0.0
    %681 = vmatpush1.xpose.msra.mxu0 0.0
    %682 = vmatprep.subr.mxu0 0.0
    %683 = vmatpush1.xpose.msra.mxu0 0.0
    %684 = vmatprep.subr.mxu0 0.0
    %685 = vmatpush1.xpose.msra.mxu0 0.0
    %686 = vmatprep.subr.mxu0 0.0
    %687 = vmatpush1.xpose.msra.mxu0 0.0
    %688 = vmatprep.subr.mxu0 0.0
    %689 = vmatpush1.xpose.msra.mxu0 0.0
    %690 = vmatprep.subr.mxu0 0.0
    %691 = vmatpush1.xpose.msra.mxu0 0.0
    %692 = vmatprep.subr.mxu0 0.0
    %693 = vmatpush1.xpose.msra.mxu0 0.0
    %694 = vmatprep.subr.mxu0 0.0
    %695 = vmatpush1.xpose.msra.mxu0 0.0
    %696 = vmatprep.subr.mxu0 0.0
    %697 = vmatpush1.xpose.msra.mxu0 0.0
    %698 = vmatprep.subr.mxu0 0.0
    %699 = vmatpush1.xpose.msra.mxu0 0.0
    %700 = vmatprep.subr.mxu0 0.0
    %701 = vmatpush1.xpose.msra.mxu0 0.0
    %702 = vmatprep.subr.mxu0 0.0
    %703 = vmatpush1.xpose.msra.mxu0 0.0
    %704 = vmatprep.subr.mxu0 0.0
    %705 = vmatpush1.xpose.msra.mxu0 0.0
    %706 = vmatprep.subr.mxu0 0.0
    %707 = vmatpush1.xpose.msra.mxu0 0.0
    %708 = vmatprep.mubr.f32.mxu0 0.0
    %709 = vmatmul.mubr.f32.gmra.mrb[0].mxu0 %v640
    %v710 = vpop.f32.mrb[0].mxu0
    %v711 = vadd.f32 %v335, %v710
    %v712 = vpop.f32.mrb[0].mxu0
    %713 = vdwg.mxu0
    %715 = vrot.lane.b32.xlu0 %v459, 96
    %v716 = vpop.permute.xlu0 %715
    %v717 = vsel %vm485, %v459, 0
    %v719 = vsel %vm485, %v716, 0
    %721 = vmatprep.subr.mxu0 0.0
    %722 = vmatpush1.xpose.msra.mxu0 %v719
    %723 = vmatprep.subr.mxu0 0.0
    %724 = vmatpush1.xpose.msra.mxu0 0.0
    %725 = vmatprep.subr.mxu0 0.0
    %726 = vmatpush1.xpose.msra.mxu0 0.0
    %727 = vmatprep.subr.mxu0 0.0
    %728 = vmatpush1.xpose.msra.mxu0 0.0
    %729 = vmatprep.subr.mxu0 0.0
    %730 = vmatpush1.xpose.msra.mxu0 0.0
    %731 = vmatprep.subr.mxu0 0.0
    %732 = vmatpush1.xpose.msra.mxu0 0.0
    %733 = vmatprep.subr.mxu0 0.0
    %734 = vmatpush1.xpose.msra.mxu0 0.0
    %735 = vmatprep.subr.mxu0 0.0
    %736 = vmatpush1.xpose.msra.mxu0 0.0
    %737 = vmatprep.subr.mxu0 0.0
    %738 = vmatpush1.xpose.msra.mxu0 0.0
    %739 = vmatprep.subr.mxu0 0.0
    %740 = vmatpush1.xpose.msra.mxu0 0.0
    %741 = vmatprep.subr.mxu0 0.0
    %742 = vmatpush1.xpose.msra.mxu0 0.0
    %743 = vmatprep.subr.mxu0 0.0
    %744 = vmatpush1.xpose.msra.mxu0 0.0
    %745 = vmatprep.subr.mxu0 0.0
    %746 = vmatpush1.xpose.msra.mxu0 0.0
    %747 = vmatprep.subr.mxu0 0.0
    %748 = vmatpush1.xpose.msra.mxu0 0.0
    %749 = vmatprep.subr.mxu0 0.0
    %750 = vmatpush1.xpose.msra.mxu0 0.0
    %751 = vmatprep.subr.mxu0 0.0
    %752 = vmatpush1.xpose.msra.mxu0 0.0
    %753 = vmatprep.subr.mxu0 0.0
    %754 = vmatpush1.xpose.msra.mxu0 0.0
    %755 = vmatprep.subr.mxu0 0.0
    %756 = vmatpush1.xpose.msra.mxu0 0.0
    %757 = vmatprep.subr.mxu0 0.0
    %758 = vmatpush1.xpose.msra.mxu0 0.0
    %759 = vmatprep.subr.mxu0 0.0
    %760 = vmatpush1.xpose.msra.mxu0 0.0
    %761 = vmatprep.subr.mxu0 0.0
    %762 = vmatpush1.xpose.msra.mxu0 0.0
    %763 = vmatprep.subr.mxu0 0.0
    %764 = vmatpush1.xpose.msra.mxu0 0.0
    %765 = vmatprep.subr.mxu0 0.0
    %766 = vmatpush1.xpose.msra.mxu0 0.0
    %767 = vmatprep.subr.mxu0 0.0
    %768 = vmatpush1.xpose.msra.mxu0 0.0
    %769 = vmatprep.subr.mxu0 0.0
    %770 = vmatpush1.xpose.msra.mxu0 0.0
    %771 = vmatprep.subr.mxu0 0.0
    %772 = vmatpush1.xpose.msra.mxu0 0.0
    %773 = vmatprep.subr.mxu0 0.0
    %774 = vmatpush1.xpose.msra.mxu0 0.0
    %775 = vmatprep.subr.mxu0 0.0
    %776 = vmatpush1.xpose.msra.mxu0 0.0
    %777 = vmatprep.subr.mxu0 0.0
    %778 = vmatpush1.xpose.msra.mxu0 0.0
    %779 = vmatprep.subr.mxu0 0.0
    %780 = vmatpush1.xpose.msra.mxu0 0.0
    %781 = vmatprep.subr.mxu0 0.0
    %782 = vmatpush1.xpose.msra.mxu0 0.0
    %783 = vmatprep.subr.mxu0 0.0
    %784 = vmatpush1.xpose.msra.mxu0 0.0
    %785 = vmatprep.mubr.f32.mxu0 0.0
    %786 = vmatmul.mubr.f32.gmra.mrb[0].mxu0 %v717
    %v787 = vpop.f32.mrb[0].mxu0
    %v788 = vadd.f32 %v336, %v787
    %v789 = vpop.f32.mrb[0].mxu0
    %790 = vdwg.mxu0
    %792 = vrot.lane.b32.xlu0 %v464, 96
    %v793 = vpop.permute.xlu0 %792
    %v794 = vsel %vm485, %v464, 0
    %v796 = vsel %vm485, %v793, 0
    %798 = vmatprep.subr.mxu0 0.0
    %799 = vmatpush1.xpose.msra.mxu0 %v796
    %800 = vmatprep.subr.mxu0 0.0
    %801 = vmatpush1.xpose.msra.mxu0 0.0
    %802 = vmatprep.subr.mxu0 0.0
    %803 = vmatpush1.xpose.msra.mxu0 0.0
    %804 = vmatprep.subr.mxu0 0.0
    %805 = vmatpush1.xpose.msra.mxu0 0.0
    %806 = vmatprep.subr.mxu0 0.0
    %807 = vmatpush1.xpose.msra.mxu0 0.0
    %808 = vmatprep.subr.mxu0 0.0
    %809 = vmatpush1.xpose.msra.mxu0 0.0
    %810 = vmatprep.subr.mxu0 0.0
    %811 = vmatpush1.xpose.msra.mxu0 0.0
    %812 = vmatprep.subr.mxu0 0.0
    %813 = vmatpush1.xpose.msra.mxu0 0.0
    %814 = vmatprep.subr.mxu0 0.0
    %815 = vmatpush1.xpose.msra.mxu0 0.0
    %816 = vmatprep.subr.mxu0 0.0
    %817 = vmatpush1.xpose.msra.mxu0 0.0
    %818 = vmatprep.subr.mxu0 0.0
    %819 = vmatpush1.xpose.msra.mxu0 0.0
    %820 = vmatprep.subr.mxu0 0.0
    %821 = vmatpush1.xpose.msra.mxu0 0.0
    %822 = vmatprep.subr.mxu0 0.0
    %823 = vmatpush1.xpose.msra.mxu0 0.0
    %824 = vmatprep.subr.mxu0 0.0
    %825 = vmatpush1.xpose.msra.mxu0 0.0
    %826 = vmatprep.subr.mxu0 0.0
    %827 = vmatpush1.xpose.msra.mxu0 0.0
    %828 = vmatprep.subr.mxu0 0.0
    %829 = vmatpush1.xpose.msra.mxu0 0.0
    %830 = vmatprep.subr.mxu0 0.0
    %831 = vmatpush1.xpose.msra.mxu0 0.0
    %832 = vmatprep.subr.mxu0 0.0
    %833 = vmatpush1.xpose.msra.mxu0 0.0
    %834 = vmatprep.subr.mxu0 0.0
    %835 = vmatpush1.xpose.msra.mxu0 0.0
    %836 = vmatprep.subr.mxu0 0.0
    %837 = vmatpush1.xpose.msra.mxu0 0.0
    %838 = vmatprep.subr.mxu0 0.0
    %839 = vmatpush1.xpose.msra.mxu0 0.0
    %840 = vmatprep.subr.mxu0 0.0
    %841 = vmatpush1.xpose.msra.mxu0 0.0
    %842 = vmatprep.subr.mxu0 0.0
    %843 = vmatpush1.xpose.msra.mxu0 0.0
    %844 = vmatprep.subr.mxu0 0.0
    %845 = vmatpush1.xpose.msra.mxu0 0.0
    %846 = vmatprep.subr.mxu0 0.0
    %847 = vmatpush1.xpose.msra.mxu0 0.0
    %848 = vmatprep.subr.mxu0 0.0
    %849 = vmatpush1.xpose.msra.mxu0 0.0
    %850 = vmatprep.subr.mxu0 0.0
    %851 = vmatpush1.xpose.msra.mxu0 0.0
    %852 = vmatprep.subr.mxu0 0.0
    %853 = vmatpush1.xpose.msra.mxu0 0.0
    %854 = vmatprep.subr.mxu0 0.0
    %855 = vmatpush1.xpose.msra.mxu0 0.0
    %856 = vmatprep.subr.mxu0 0.0
    %857 = vmatpush1.xpose.msra.mxu0 0.0
    %858 = vmatprep.subr.mxu0 0.0
    %859 = vmatpush1.xpose.msra.mxu0 0.0
    %860 = vmatprep.subr.mxu0 0.0
    %861 = vmatpush1.xpose.msra.mxu0 0.0
    %862 = vmatprep.mubr.f32.mxu0 0.0
    %863 = vmatmul.mubr.f32.gmra.mrb[0].mxu0 %v794
    %v864 = vpop.f32.mrb[0].mxu0
    %v865 = vadd.f32 %v337, %v864
    %v866 = vpop.f32.mrb[0].mxu0
    %867 = vdwg.mxu0
    %869 = vrot.lane.b32.xlu0 %v469, 96
    %v870 = vpop.permute.xlu0 %869
    %v871 = vsel %vm485, %v469, 0
    %v873 = vsel %vm485, %v870, 0
    %875 = vmatprep.subr.mxu0 0.0
    %876 = vmatpush1.xpose.msra.mxu0 %v873
    %877 = vmatprep.subr.mxu0 0.0
    %878 = vmatpush1.xpose.msra.mxu0 0.0
    %879 = vmatprep.subr.mxu0 0.0
    %880 = vmatpush1.xpose.msra.mxu0 0.0
    %881 = vmatprep.subr.mxu0 0.0
    %882 = vmatpush1.xpose.msra.mxu0 0.0
    %883 = vmatprep.subr.mxu0 0.0
    %884 = vmatpush1.xpose.msra.mxu0 0.0
    %885 = vmatprep.subr.mxu0 0.0
    %886 = vmatpush1.xpose.msra.mxu0 0.0
    %887 = vmatprep.subr.mxu0 0.0
    %888 = vmatpush1.xpose.msra.mxu0 0.0
    %889 = vmatprep.subr.mxu0 0.0
    %890 = vmatpush1.xpose.msra.mxu0 0.0
    %891 = vmatprep.subr.mxu0 0.0
    %892 = vmatpush1.xpose.msra.mxu0 0.0
    %893 = vmatprep.subr.mxu0 0.0
    %894 = vmatpush1.xpose.msra.mxu0 0.0
    %895 = vmatprep.subr.mxu0 0.0
    %896 = vmatpush1.xpose.msra.mxu0 0.0
    %897 = vmatprep.subr.mxu0 0.0
    %898 = vmatpush1.xpose.msra.mxu0 0.0
    %899 = vmatprep.subr.mxu0 0.0
    %900 = vmatpush1.xpose.msra.mxu0 0.0
    %901 = vmatprep.subr.mxu0 0.0
    %902 = vmatpush1.xpose.msra.mxu0 0.0
    %903 = vmatprep.subr.mxu0 0.0
    %904 = vmatpush1.xpose.msra.mxu0 0.0
    %905 = vmatprep.subr.mxu0 0.0
    %906 = vmatpush1.xpose.msra.mxu0 0.0
    %907 = vmatprep.subr.mxu0 0.0
    %908 = vmatpush1.xpose.msra.mxu0 0.0
    %909 = vmatprep.subr.mxu0 0.0
    %910 = vmatpush1.xpose.msra.mxu0 0.0
    %911 = vmatprep.subr.mxu0 0.0
    %912 = vmatpush1.xpose.msra.mxu0 0.0
    %913 = vmatprep.subr.mxu0 0.0
    %914 = vmatpush1.xpose.msra.mxu0 0.0
    %915 = vmatprep.subr.mxu0 0.0
    %916 = vmatpush1.xpose.msra.mxu0 0.0
    %917 = vmatprep.subr.mxu0 0.0
    %918 = vmatpush1.xpose.msra.mxu0 0.0
    %919 = vmatprep.subr.mxu0 0.0
    %920 = vmatpush1.xpose.msra.mxu0 0.0
    %921 = vmatprep.subr.mxu0 0.0
    %922 = vmatpush1.xpose.msra.mxu0 0.0
    %923 = vmatprep.subr.mxu0 0.0
    %924 = vmatpush1.xpose.msra.mxu0 0.0
    %925 = vmatprep.subr.mxu0 0.0
    %926 = vmatpush1.xpose.msra.mxu0 0.0
    %927 = vmatprep.subr.mxu0 0.0
    %928 = vmatpush1.xpose.msra.mxu0 0.0
    %929 = vmatprep.subr.mxu0 0.0
    %930 = vmatpush1.xpose.msra.mxu0 0.0
    %931 = vmatprep.subr.mxu0 0.0
    %932 = vmatpush1.xpose.msra.mxu0 0.0
    %933 = vmatprep.subr.mxu0 0.0
    %934 = vmatpush1.xpose.msra.mxu0 0.0
    %935 = vmatprep.subr.mxu0 0.0
    %936 = vmatpush1.xpose.msra.mxu0 0.0
    %937 = vmatprep.subr.mxu0 0.0
    %938 = vmatpush1.xpose.msra.mxu0 0.0
    %939 = vmatprep.mubr.f32.mxu0 0.0
    %940 = vmatmul.mubr.f32.gmra.mrb[0].mxu0 %v871
    %v941 = vpop.f32.mrb[0].mxu0
    %v942 = vadd.f32 %v338, %v941
    %v943 = vpop.f32.mrb[0].mxu0
    %944 = vdwg.mxu0
    %946 = vrot.lane.b32.xlu0 %v474, 96
    %v947 = vpop.permute.xlu0 %946
    %v948 = vsel %vm485, %v474, 0
    %v950 = vsel %vm485, %v947, 0
    %952 = vmatprep.subr.mxu0 0.0
    %953 = vmatpush1.xpose.msra.mxu0 %v950
    %954 = vmatprep.subr.mxu0 0.0
    %955 = vmatpush1.xpose.msra.mxu0 0.0
    %956 = vmatprep.subr.mxu0 0.0
    %957 = vmatpush1.xpose.msra.mxu0 0.0
    %958 = vmatprep.subr.mxu0 0.0
    %959 = vmatpush1.xpose.msra.mxu0 0.0
    %960 = vmatprep.subr.mxu0 0.0
    %961 = vmatpush1.xpose.msra.mxu0 0.0
    %962 = vmatprep.subr.mxu0 0.0
    %963 = vmatpush1.xpose.msra.mxu0 0.0
    %964 = vmatprep.subr.mxu0 0.0
    %965 = vmatpush1.xpose.msra.mxu0 0.0
    %966 = vmatprep.subr.mxu0 0.0
    %967 = vmatpush1.xpose.msra.mxu0 0.0
    %968 = vmatprep.subr.mxu0 0.0
    %969 = vmatpush1.xpose.msra.mxu0 0.0
    %970 = vmatprep.subr.mxu0 0.0
    %971 = vmatpush1.xpose.msra.mxu0 0.0
    %972 = vmatprep.subr.mxu0 0.0
    %973 = vmatpush1.xpose.msra.mxu0 0.0
    %974 = vmatprep.subr.mxu0 0.0
    %975 = vmatpush1.xpose.msra.mxu0 0.0
    %976 = vmatprep.subr.mxu0 0.0
    %977 = vmatpush1.xpose.msra.mxu0 0.0
    %978 = vmatprep.subr.mxu0 0.0
    %979 = vmatpush1.xpose.msra.mxu0 0.0
    %980 = vmatprep.subr.mxu0 0.0
    %981 = vmatpush1.xpose.msra.mxu0 0.0
    %982 = vmatprep.subr.mxu0 0.0
    %983 = vmatpush1.xpose.msra.mxu0 0.0
    %984 = vmatprep.subr.mxu0 0.0
    %985 = vmatpush1.xpose.msra.mxu0 0.0
    %986 = vmatprep.subr.mxu0 0.0
    %987 = vmatpush1.xpose.msra.mxu0 0.0
    %988 = vmatprep.subr.mxu0 0.0
    %989 = vmatpush1.xpose.msra.mxu0 0.0
    %990 = vmatprep.subr.mxu0 0.0
    %991 = vmatpush1.xpose.msra.mxu0 0.0
    %992 = vmatprep.subr.mxu0 0.0
    %993 = vmatpush1.xpose.msra.mxu0 0.0
    %994 = vmatprep.subr.mxu0 0.0
    %995 = vmatpush1.xpose.msra.mxu0 0.0
    %996 = vmatprep.subr.mxu0 0.0
    %997 = vmatpush1.xpose.msra.mxu0 0.0
    %998 = vmatprep.subr.mxu0 0.0
    %999 = vmatpush1.xpose.msra.mxu0 0.0
    %1000 = vmatprep.subr.mxu0 0.0
    %1001 = vmatpush1.xpose.msra.mxu0 0.0
    %1002 = vmatprep.subr.mxu0 0.0
    %1003 = vmatpush1.xpose.msra.mxu0 0.0
    %1004 = vmatprep.subr.mxu0 0.0
    %1005 = vmatpush1.xpose.msra.mxu0 0.0
    %1006 = vmatprep.subr.mxu0 0.0
    %1007 = vmatpush1.xpose.msra.mxu0 0.0
    %1008 = vmatprep.subr.mxu0 0.0
    %1009 = vmatpush1.xpose.msra.mxu0 0.0
    %1010 = vmatprep.subr.mxu0 0.0
    %1011 = vmatpush1.xpose.msra.mxu0 0.0
    %1012 = vmatprep.subr.mxu0 0.0
    %1013 = vmatpush1.xpose.msra.mxu0 0.0
    %1014 = vmatprep.subr.mxu0 0.0
    %1015 = vmatpush1.xpose.msra.mxu0 0.0
    %1016 = vmatprep.mubr.f32.mxu0 0.0
    %1017 = vmatmul.mubr.f32.gmra.mrb[0].mxu0 %v948
    %v1018 = vpop.f32.mrb[0].mxu0
    %v1019 = vadd.f32 %v339, %v1018
    %v1020 = vpop.f32.mrb[0].mxu0
    %1021 = vdwg.mxu0
    %1023 = vrot.lane.b32.xlu0 %v479, 96
    %v1024 = vpop.permute.xlu0 %1023
    %v1025 = vsel %vm485, %v479, 0
    %v1027 = vsel %vm485, %v1024, 0
    %1029 = vmatprep.subr.mxu0 0.0
    %1030 = vmatpush1.xpose.msra.mxu0 %v1027
    %1031 = vmatprep.subr.mxu0 0.0
    %1032 = vmatpush1.xpose.msra.mxu0 0.0
    %1033 = vmatprep.subr.mxu0 0.0
    %1034 = vmatpush1.xpose.msra.mxu0 0.0
    %1035 = vmatprep.subr.mxu0 0.0
    %1036 = vmatpush1.xpose.msra.mxu0 0.0
    %1037 = vmatprep.subr.mxu0 0.0
    %1038 = vmatpush1.xpose.msra.mxu0 0.0
    %1039 = vmatprep.subr.mxu0 0.0
    %1040 = vmatpush1.xpose.msra.mxu0 0.0
    %1041 = vmatprep.subr.mxu0 0.0
    %1042 = vmatpush1.xpose.msra.mxu0 0.0
    %1043 = vmatprep.subr.mxu0 0.0
    %1044 = vmatpush1.xpose.msra.mxu0 0.0
    %1045 = vmatprep.subr.mxu0 0.0
    %1046 = vmatpush1.xpose.msra.mxu0 0.0
    %1047 = vmatprep.subr.mxu0 0.0
    %1048 = vmatpush1.xpose.msra.mxu0 0.0
    %1049 = vmatprep.subr.mxu0 0.0
    %1050 = vmatpush1.xpose.msra.mxu0 0.0
    %1051 = vmatprep.subr.mxu0 0.0
    %1052 = vmatpush1.xpose.msra.mxu0 0.0
    %1053 = vmatprep.subr.mxu0 0.0
    %1054 = vmatpush1.xpose.msra.mxu0 0.0
    %1055 = vmatprep.subr.mxu0 0.0
    %1056 = vmatpush1.xpose.msra.mxu0 0.0
    %1057 = vmatprep.subr.mxu0 0.0
    %1058 = vmatpush1.xpose.msra.mxu0 0.0
    %1059 = vmatprep.subr.mxu0 0.0
    %1060 = vmatpush1.xpose.msra.mxu0 0.0
    %1061 = vmatprep.subr.mxu0 0.0
    %1062 = vmatpush1.xpose.msra.mxu0 0.0
    %1063 = vmatprep.subr.mxu0 0.0
    %1064 = vmatpush1.xpose.msra.mxu0 0.0
    %1065 = vmatprep.subr.mxu0 0.0
    %1066 = vmatpush1.xpose.msra.mxu0 0.0
    %1067 = vmatprep.subr.mxu0 0.0
    %1068 = vmatpush1.xpose.msra.mxu0 0.0
    %1069 = vmatprep.subr.mxu0 0.0
    %1070 = vmatpush1.xpose.msra.mxu0 0.0
    %1071 = vmatprep.subr.mxu0 0.0
    %1072 = vmatpush1.xpose.msra.mxu0 0.0
    %1073 = vmatprep.subr.mxu0 0.0
    %1074 = vmatpush1.xpose.msra.mxu0 0.0
    %1075 = vmatprep.subr.mxu0 0.0
    %1076 = vmatpush1.xpose.msra.mxu0 0.0
    %1077 = vmatprep.subr.mxu0 0.0
    %1078 = vmatpush1.xpose.msra.mxu0 0.0
    %1079 = vmatprep.subr.mxu0 0.0
    %1080 = vmatpush1.xpose.msra.mxu0 0.0
    %1081 = vmatprep.subr.mxu0 0.0
    %1082 = vmatpush1.xpose.msra.mxu0 0.0
    %1083 = vmatprep.subr.mxu0 0.0
    %1084 = vmatpush1.xpose.msra.mxu0 0.0
    %1085 = vmatprep.subr.mxu0 0.0
    %1086 = vmatpush1.xpose.msra.mxu0 0.0
    %1087 = vmatprep.subr.mxu0 0.0
    %1088 = vmatpush1.xpose.msra.mxu0 0.0
    %1089 = vmatprep.subr.mxu0 0.0
    %1090 = vmatpush1.xpose.msra.mxu0 0.0
    %1091 = vmatprep.subr.mxu0 0.0
    %1092 = vmatpush1.xpose.msra.mxu0 0.0
    %1093 = vmatprep.mubr.f32.mxu0 0.0
    %1094 = vmatmul.mubr.f32.gmra.mrb[0].mxu0 %v1025
    %v1095 = vpop.f32.mrb[0].mxu0
    %v1096 = vadd.f32 %v340, %v1095
    %v1097 = vpop.f32.mrb[0].mxu0
    %1098 = vdwg.mxu0
    %vm1099 = vcmask 64512
    %v1100 = vsel %vm1099, %v557, -inf
    %1101 = vmax.xlane.f32.xlu0 %v1100
    %v1102 = vpop.xlane.xlu0 %1101
    %v1103 = vsel %vm1099, %v634, -inf
    %1104 = vmax.xlane.f32.xlu0 %v1103
    %v1105 = vpop.xlane.xlu0 %1104
    %v1106 = vsel %vm1099, %v711, -inf
    %1107 = vmax.xlane.f32.xlu0 %v1106
    %v1108 = vpop.xlane.xlu0 %1107
    %v1109 = vsel %vm1099, %v788, -inf
    %1110 = vmax.xlane.f32.xlu0 %v1109
    %v1111 = vpop.xlane.xlu0 %1110
    %v1112 = vsel %vm1099, %v865, -inf
    %1113 = vmax.xlane.f32.xlu0 %v1112
    %v1114 = vpop.xlane.xlu0 %1113
    %v1115 = vsel %vm1099, %v942, -inf
    %1116 = vmax.xlane.f32.xlu0 %v1115
    %v1117 = vpop.xlane.xlu0 %1116
    %v1118 = vsel %vm1099, %v1019, -inf
    %1119 = vmax.xlane.f32.xlu0 %v1118
    %v1120 = vpop.xlane.xlu0 %1119
    %v1121 = vsel %vm1099, %v1096, -inf
    %1122 = vmax.xlane.f32.xlu0 %v1121
    %v1123 = vpop.xlane.xlu0 %1122
    %v1124 = vsub.f32 %v557, %v1102
    %v1125 = vsub.f32 %v634, %v1105
    %v1126 = vsub.f32 %v711, %v1108
    %v1127 = vsub.f32 %v788, %v1111
    %v1128 = vsub.f32 %v865, %v1114
    %v1129 = vsub.f32 %v942, %v1117
    %v1130 = vsub.f32 %v1019, %v1120
    %v1131 = vsub.f32 %v1096, %v1123
    %v1132 = vmul.f32 %v1124, 1.442695
    %v1133 = vpow.pop %v1132
    %v1134 = vmul.f32 %v1125, 1.442695
    %v1135 = vpow.pop %v1134
    %v1136 = vmul.f32 %v1126, 1.442695
    %v1137 = vpow.pop %v1136
    %v1138 = vmul.f32 %v1127, 1.442695
    %v1139 = vpow.pop %v1138
    %v1140 = vmul.f32 %v1128, 1.442695
    %v1141 = vpow.pop %v1140
    %v1142 = vmul.f32 %v1129, 1.442695
    %v1143 = vpow.pop %v1142
    %v1144 = vmul.f32 %v1130, 1.442695
    %v1145 = vpow.pop %v1144
    %v1146 = vmul.f32 %v1131, 1.442695
    %v1147 = vpow.pop %v1146
    %v1148 = vsel %vm1099, %v1133, 0.0
    %1149 = vadd.xlane.f32.xlu0 %v1148
    %v1150 = vpop.xlane.xlu0 %1149
    %v1151 = vsel %vm1099, %v1135, 0.0
    %1152 = vadd.xlane.f32.xlu0 %v1151
    %v1153 = vpop.xlane.xlu0 %1152
    %v1154 = vsel %vm1099, %v1137, 0.0
    %1155 = vadd.xlane.f32.xlu0 %v1154
    %v1156 = vpop.xlane.xlu0 %1155
    %v1157 = vsel %vm1099, %v1139, 0.0
    %1158 = vadd.xlane.f32.xlu0 %v1157
    %v1159 = vpop.xlane.xlu0 %1158
    %v1160 = vsel %vm1099, %v1141, 0.0
    %1161 = vadd.xlane.f32.xlu0 %v1160
    %v1162 = vpop.xlane.xlu0 %1161
    %v1163 = vsel %vm1099, %v1143, 0.0
    %1164 = vadd.xlane.f32.xlu0 %v1163
    %v1165 = vpop.xlane.xlu0 %1164
    %v1166 = vsel %vm1099, %v1145, 0.0
    %1167 = vadd.xlane.f32.xlu0 %v1166
    %v1168 = vpop.xlane.xlu0 %1167
    %v1169 = vsel %vm1099, %v1147, 0.0
    %1170 = vadd.xlane.f32.xlu0 %v1169
    %v1171 = vpop.xlane.xlu0 %1170
    %v1172 = vrcp.pop %v1150
    %v1173 = vrcp.pop %v1153
    %v1174 = vrcp.pop %v1156
    %v1175 = vrcp.pop %v1159
    %v1176 = vrcp.pop %v1162
    %v1177 = vrcp.pop %v1165
    %v1178 = vrcp.pop %v1168
    %v1179 = vrcp.pop %v1171
    %v1180 = vmul.f32 %v1133, %v1172
    %v1181 = vmul.f32 %v1135, %v1173
    %v1182 = vmul.f32 %v1137, %v1174
    %v1183 = vmul.f32 %v1139, %v1175
    %v1184 = vmul.f32 %v1141, %v1176
    %v1185 = vmul.f32 %v1143, %v1177
    %v1186 = vmul.f32 %v1145, %v1178
    %v1187 = vmul.f32 %v1147, %v1179
    %v1188 = vmul.f32 %v1180, %v317
    %v1189 = vmul.f32 %v1181, %v318
    %v1190 = vmul.f32 %v1182, %v319
    %v1191 = vmul.f32 %v1183, %v320
    %v1192 = vmul.f32 %v1184, %v321
    %v1193 = vmul.f32 %v1185, %v322
    %v1194 = vmul.f32 %v1186, %v323
    %v1195 = vmul.f32 %v1187, %v324
    %1196 = vrot.lane.b32.xlu0 %v444, 64
    %v1197 = vpop.permute.xlu0 %1196
    %v1200 = vsel %vm1099, %v1188, 0
    %1202 = vmatprep.subr.mxu0 0.0
    %1203 = vmatpush1.msra.mxu0 %v1197
    %1204 = vmatprep.subr.mxu0 0.0
    %1205 = vmatpush1.msra.mxu0 0.0
    %1206 = vmatprep.subr.mxu0 0.0
    %1207 = vmatpush1.msra.mxu0 0.0
    %1208 = vmatprep.subr.mxu0 0.0
    %1209 = vmatpush1.msra.mxu0 0.0
    %1210 = vmatprep.subr.mxu0 0.0
    %1211 = vmatpush1.msra.mxu0 0.0
    %1212 = vmatprep.subr.mxu0 0.0
    %1213 = vmatpush1.msra.mxu0 0.0
    %1214 = vmatprep.subr.mxu0 0.0
    %1215 = vmatpush1.msra.mxu0 0.0
    %1216 = vmatprep.subr.mxu0 0.0
    %1217 = vmatpush1.msra.mxu0 0.0
    %1218 = vmatprep.subr.mxu0 0.0
    %1219 = vmatpush1.msra.mxu0 0.0
    %1220 = vmatprep.subr.mxu0 0.0
    %1221 = vmatpush1.msra.mxu0 0.0
    %1222 = vmatprep.subr.mxu0 0.0
    %1223 = vmatpush1.msra.mxu0 0.0
    %1224 = vmatprep.subr.mxu0 0.0
    %1225 = vmatpush1.msra.mxu0 0.0
    %1226 = vmatprep.subr.mxu0 0.0
    %1227 = vmatpush1.msra.mxu0 0.0
    %1228 = vmatprep.subr.mxu0 0.0
    %1229 = vmatpush1.msra.mxu0 0.0
    %1230 = vmatprep.subr.mxu0 0.0
    %1231 = vmatpush1.msra.mxu0 0.0
    %1232 = vmatprep.subr.mxu0 0.0
    %1233 = vmatpush1.msra.mxu0 0.0
    %1234 = vmatprep.subr.mxu0 0.0
    %1235 = vmatpush1.msra.mxu0 0.0
    %1236 = vmatprep.subr.mxu0 0.0
    %1237 = vmatpush1.msra.mxu0 0.0
    %1238 = vmatprep.subr.mxu0 0.0
    %1239 = vmatpush1.msra.mxu0 0.0
    %1240 = vmatprep.subr.mxu0 0.0
    %1241 = vmatpush1.msra.mxu0 0.0
    %1242 = vmatprep.subr.mxu0 0.0
    %1243 = vmatpush1.msra.mxu0 0.0
    %1244 = vmatprep.subr.mxu0 0.0
    %1245 = vmatpush1.msra.mxu0 0.0
    %1246 = vmatprep.subr.mxu0 0.0
    %1247 = vmatpush1.msra.mxu0 0.0
    %1248 = vmatprep.subr.mxu0 0.0
    %1249 = vmatpush1.msra.mxu0 0.0
    %1250 = vmatprep.subr.mxu0 0.0
    %1251 = vmatpush1.msra.mxu0 0.0
    %1252 = vmatprep.subr.mxu0 0.0
    %1253 = vmatpush1.msra.mxu0 0.0
    %1254 = vmatprep.subr.mxu0 0.0
    %1255 = vmatpush1.msra.mxu0 0.0
    %1256 = vmatprep.subr.mxu0 0.0
    %1257 = vmatpush1.msra.mxu0 0.0
    %1258 = vmatprep.subr.mxu0 0.0
    %1259 = vmatpush1.msra.mxu0 0.0
    %1260 = vmatprep.subr.mxu0 0.0
    %1261 = vmatpush1.msra.mxu0 0.0
    %1262 = vmatprep.subr.mxu0 0.0
    %1263 = vmatpush1.msra.mxu0 0.0
    %1264 = vmatprep.subr.mxu0 0.0
    %1265 = vmatpush1.msra.mxu0 0.0
    %1266 = vmatprep.mubr.f32.mxu0 0.0
    %1267 = vmatmul.mubr.f32.gmra.mrb[0].mxu0 %v1200
    %v1268 = vpop.f32.mrb[0].mxu0
    %v1269 = vadd.f32 0.0, %v1268
    %v1270 = vpop.f32.mrb[0].mxu0
    %1271 = vdwg.mxu0
    %1272 = vrot.lane.b32.xlu0 %v449, 64
    %v1273 = vpop.permute.xlu0 %1272
    %v1276 = vsel %vm1099, %v1189, 0
    %1278 = vmatprep.subr.mxu0 0.0
    %1279 = vmatpush1.msra.mxu0 %v1273
    %1280 = vmatprep.subr.mxu0 0.0
    %1281 = vmatpush1.msra.mxu0 0.0
    %1282 = vmatprep.subr.mxu0 0.0
    %1283 = vmatpush1.msra.mxu0 0.0
    %1284 = vmatprep.subr.mxu0 0.0
    %1285 = vmatpush1.msra.mxu0 0.0
    %1286 = vmatprep.subr.mxu0 0.0
    %1287 = vmatpush1.msra.mxu0 0.0
    %1288 = vmatprep.subr.mxu0 0.0
    %1289 = vmatpush1.msra.mxu0 0.0
    %1290 = vmatprep.subr.mxu0 0.0
    %1291 = vmatpush1.msra.mxu0 0.0
    %1292 = vmatprep.subr.mxu0 0.0
    %1293 = vmatpush1.msra.mxu0 0.0
    %1294 = vmatprep.subr.mxu0 0.0
    %1295 = vmatpush1.msra.mxu0 0.0
    %1296 = vmatprep.subr.mxu0 0.0
    %1297 = vmatpush1.msra.mxu0 0.0
    %1298 = vmatprep.subr.mxu0 0.0
    %1299 = vmatpush1.msra.mxu0 0.0
    %1300 = vmatprep.subr.mxu0 0.0
    %1301 = vmatpush1.msra.mxu0 0.0
    %1302 = vmatprep.subr.mxu0 0.0
    %1303 = vmatpush1.msra.mxu0 0.0
    %1304 = vmatprep.subr.mxu0 0.0
    %1305 = vmatpush1.msra.mxu0 0.0
    %1306 = vmatprep.subr.mxu0 0.0
    %1307 = vmatpush1.msra.mxu0 0.0
    %1308 = vmatprep.subr.mxu0 0.0
    %1309 = vmatpush1.msra.mxu0 0.0
    %1310 = vmatprep.subr.mxu0 0.0
    %1311 = vmatpush1.msra.mxu0 0.0
    %1312 = vmatprep.subr.mxu0 0.0
    %1313 = vmatpush1.msra.mxu0 0.0
    %1314 = vmatprep.subr.mxu0 0.0
    %1315 = vmatpush1.msra.mxu0 0.0
    %1316 = vmatprep.subr.mxu0 0.0
    %1317 = vmatpush1.msra.mxu0 0.0
    %1318 = vmatprep.subr.mxu0 0.0
    %1319 = vmatpush1.msra.mxu0 0.0
    %1320 = vmatprep.subr.mxu0 0.0
    %1321 = vmatpush1.msra.mxu0 0.0
    %1322 = vmatprep.subr.mxu0 0.0
    %1323 = vmatpush1.msra.mxu0 0.0
    %1324 = vmatprep.subr.mxu0 0.0
    %1325 = vmatpush1.msra.mxu0 0.0
    %1326 = vmatprep.subr.mxu0 0.0
    %1327 = vmatpush1.msra.mxu0 0.0
    %1328 = vmatprep.subr.mxu0 0.0
    %1329 = vmatpush1.msra.mxu0 0.0
    %1330 = vmatprep.subr.mxu0 0.0
    %1331 = vmatpush1.msra.mxu0 0.0
    %1332 = vmatprep.subr.mxu0 0.0
    %1333 = vmatpush1.msra.mxu0 0.0
    %1334 = vmatprep.subr.mxu0 0.0
    %1335 = vmatpush1.msra.mxu0 0.0
    %1336 = vmatprep.subr.mxu0 0.0
    %1337 = vmatpush1.msra.mxu0 0.0
    %1338 = vmatprep.subr.mxu0 0.0
    %1339 = vmatpush1.msra.mxu0 0.0
    %1340 = vmatprep.subr.mxu0 0.0
    %1341 = vmatpush1.msra.mxu0 0.0
    %1342 = vmatprep.mubr.f32.mxu0 0.0
    %1343 = vmatmul.mubr.f32.gmra.mrb[0].mxu0 %v1276
    %v1344 = vpop.f32.mrb[0].mxu0
    %v1345 = vadd.f32 0.0, %v1344
    %v1346 = vpop.f32.mrb[0].mxu0
    %1347 = vdwg.mxu0
    %1348 = vrot.lane.b32.xlu0 %v454, 64
    %v1349 = vpop.permute.xlu0 %1348
    %v1352 = vsel %vm1099, %v1190, 0
    %1354 = vmatprep.subr.mxu0 0.0
    %1355 = vmatpush1.msra.mxu0 %v1349
    %1356 = vmatprep.subr.mxu0 0.0
    %1357 = vmatpush1.msra.mxu0 0.0
    %1358 = vmatprep.subr.mxu0 0.0
    %1359 = vmatpush1.msra.mxu0 0.0
    %1360 = vmatprep.subr.mxu0 0.0
    %1361 = vmatpush1.msra.mxu0 0.0
    %1362 = vmatprep.subr.mxu0 0.0
    %1363 = vmatpush1.msra.mxu0 0.0
    %1364 = vmatprep.subr.mxu0 0.0
    %1365 = vmatpush1.msra.mxu0 0.0
    %1366 = vmatprep.subr.mxu0 0.0
    %1367 = vmatpush1.msra.mxu0 0.0
    %1368 = vmatprep.subr.mxu0 0.0
    %1369 = vmatpush1.msra.mxu0 0.0
    %1370 = vmatprep.subr.mxu0 0.0
    %1371 = vmatpush1.msra.mxu0 0.0
    %1372 = vmatprep.subr.mxu0 0.0
    %1373 = vmatpush1.msra.mxu0 0.0
    %1374 = vmatprep.subr.mxu0 0.0
    %1375 = vmatpush1.msra.mxu0 0.0
    %1376 = vmatprep.subr.mxu0 0.0
    %1377 = vmatpush1.msra.mxu0 0.0
    %1378 = vmatprep.subr.mxu0 0.0
    %1379 = vmatpush1.msra.mxu0 0.0
    %1380 = vmatprep.subr.mxu0 0.0
    %1381 = vmatpush1.msra.mxu0 0.0
    %1382 = vmatprep.subr.mxu0 0.0
    %1383 = vmatpush1.msra.mxu0 0.0
    %1384 = vmatprep.subr.mxu0 0.0
    %1385 = vmatpush1.msra.mxu0 0.0
    %1386 = vmatprep.subr.mxu0 0.0
    %1387 = vmatpush1.msra.mxu0 0.0
    %1388 = vmatprep.subr.mxu0 0.0
    %1389 = vmatpush1.msra.mxu0 0.0
    %1390 = vmatprep.subr.mxu0 0.0
    %1391 = vmatpush1.msra.mxu0 0.0
    %1392 = vmatprep.subr.mxu0 0.0
    %1393 = vmatpush1.msra.mxu0 0.0
    %1394 = vmatprep.subr.mxu0 0.0
    %1395 = vmatpush1.msra.mxu0 0.0
    %1396 = vmatprep.subr.mxu0 0.0
    %1397 = vmatpush1.msra.mxu0 0.0
    %1398 = vmatprep.subr.mxu0 0.0
    %1399 = vmatpush1.msra.mxu0 0.0
    %1400 = vmatprep.subr.mxu0 0.0
    %1401 = vmatpush1.msra.mxu0 0.0
    %1402 = vmatprep.subr.mxu0 0.0
    %1403 = vmatpush1.msra.mxu0 0.0
    %1404 = vmatprep.subr.mxu0 0.0
    %1405 = vmatpush1.msra.mxu0 0.0
    %1406 = vmatprep.subr.mxu0 0.0
    %1407 = vmatpush1.msra.mxu0 0.0
    %1408 = vmatprep.subr.mxu0 0.0
    %1409 = vmatpush1.msra.mxu0 0.0
    %1410 = vmatprep.subr.mxu0 0.0
    %1411 = vmatpush1.msra.mxu0 0.0
    %1412 = vmatprep.subr.mxu0 0.0
    %1413 = vmatpush1.msra.mxu0 0.0
    %1414 = vmatprep.subr.mxu0 0.0
    %1415 = vmatpush1.msra.mxu0 0.0
    %1416 = vmatprep.subr.mxu0 0.0
    %1417 = vmatpush1.msra.mxu0 0.0
    %1418 = vmatprep.mubr.f32.mxu0 0.0
    %1419 = vmatmul.mubr.f32.gmra.mrb[0].mxu0 %v1352
    %v1420 = vpop.f32.mrb[0].mxu0
    %v1421 = vadd.f32 0.0, %v1420
    %v1422 = vpop.f32.mrb[0].mxu0
    %1423 = vdwg.mxu0
    %1424 = vrot.lane.b32.xlu0 %v459, 64
    %v1425 = vpop.permute.xlu0 %1424
    %v1428 = vsel %vm1099, %v1191, 0
    %1430 = vmatprep.subr.mxu0 0.0
    %1431 = vmatpush1.msra.mxu0 %v1425
    %1432 = vmatprep.subr.mxu0 0.0
    %1433 = vmatpush1.msra.mxu0 0.0
    %1434 = vmatprep.subr.mxu0 0.0
    %1435 = vmatpush1.msra.mxu0 0.0
    %1436 = vmatprep.subr.mxu0 0.0
    %1437 = vmatpush1.msra.mxu0 0.0
    %1438 = vmatprep.subr.mxu0 0.0
    %1439 = vmatpush1.msra.mxu0 0.0
    %1440 = vmatprep.subr.mxu0 0.0
    %1441 = vmatpush1.msra.mxu0 0.0
    %1442 = vmatprep.subr.mxu0 0.0
    %1443 = vmatpush1.msra.mxu0 0.0
    %1444 = vmatprep.subr.mxu0 0.0
    %1445 = vmatpush1.msra.mxu0 0.0
    %1446 = vmatprep.subr.mxu0 0.0
    %1447 = vmatpush1.msra.mxu0 0.0
    %1448 = vmatprep.subr.mxu0 0.0
    %1449 = vmatpush1.msra.mxu0 0.0
    %1450 = vmatprep.subr.mxu0 0.0
    %1451 = vmatpush1.msra.mxu0 0.0
    %1452 = vmatprep.subr.mxu0 0.0
    %1453 = vmatpush1.msra.mxu0 0.0
    %1454 = vmatprep.subr.mxu0 0.0
    %1455 = vmatpush1.msra.mxu0 0.0
    %1456 = vmatprep.subr.mxu0 0.0
    %1457 = vmatpush1.msra.mxu0 0.0
    %1458 = vmatprep.subr.mxu0 0.0
    %1459 = vmatpush1.msra.mxu0 0.0
    %1460 = vmatprep.subr.mxu0 0.0
    %1461 = vmatpush1.msra.mxu0 0.0
    %1462 = vmatprep.subr.mxu0 0.0
    %1463 = vmatpush1.msra.mxu0 0.0
    %1464 = vmatprep.subr.mxu0 0.0
    %1465 = vmatpush1.msra.mxu0 0.0
    %1466 = vmatprep.subr.mxu0 0.0
    %1467 = vmatpush1.msra.mxu0 0.0
    %1468 = vmatprep.subr.mxu0 0.0
    %1469 = vmatpush1.msra.mxu0 0.0
    %1470 = vmatprep.subr.mxu0 0.0
    %1471 = vmatpush1.msra.mxu0 0.0
    %1472 = vmatprep.subr.mxu0 0.0
    %1473 = vmatpush1.msra.mxu0 0.0
    %1474 = vmatprep.subr.mxu0 0.0
    %1475 = vmatpush1.msra.mxu0 0.0
    %1476 = vmatprep.subr.mxu0 0.0
    %1477 = vmatpush1.msra.mxu0 0.0
    %1478 = vmatprep.subr.mxu0 0.0
    %1479 = vmatpush1.msra.mxu0 0.0
    %1480 = vmatprep.subr.mxu0 0.0
    %1481 = vmatpush1.msra.mxu0 0.0
    %1482 = vmatprep.subr.mxu0 0.0
    %1483 = vmatpush1.msra.mxu0 0.0
    %1484 = vmatprep.subr.mxu0 0.0
    %1485 = vmatpush1.msra.mxu0 0.0
    %1486 = vmatprep.subr.mxu0 0.0
    %1487 = vmatpush1.msra.mxu0 0.0
    %1488 = vmatprep.subr.mxu0 0.0
    %1489 = vmatpush1.msra.mxu0 0.0
    %1490 = vmatprep.subr.mxu0 0.0
    %1491 = vmatpush1.msra.mxu0 0.0
    %1492 = vmatprep.subr.mxu0 0.0
    %1493 = vmatpush1.msra.mxu0 0.0
    %1494 = vmatprep.mubr.f32.mxu0 0.0
    %1495 = vmatmul.mubr.f32.gmra.mrb[0].mxu0 %v1428
    %v1496 = vpop.f32.mrb[0].mxu0
    %v1497 = vadd.f32 0.0, %v1496
    %v1498 = vpop.f32.mrb[0].mxu0
    %1499 = vdwg.mxu0
    %1500 = vrot.lane.b32.xlu0 %v464, 64
    %v1501 = vpop.permute.xlu0 %1500
    %v1504 = vsel %vm1099, %v1192, 0
    %1506 = vmatprep.subr.mxu0 0.0
    %1507 = vmatpush1.msra.mxu0 %v1501
    %1508 = vmatprep.subr.mxu0 0.0
    %1509 = vmatpush1.msra.mxu0 0.0
    %1510 = vmatprep.subr.mxu0 0.0
    %1511 = vmatpush1.msra.mxu0 0.0
    %1512 = vmatprep.subr.mxu0 0.0
    %1513 = vmatpush1.msra.mxu0 0.0
    %1514 = vmatprep.subr.mxu0 0.0
    %1515 = vmatpush1.msra.mxu0 0.0
    %1516 = vmatprep.subr.mxu0 0.0
    %1517 = vmatpush1.msra.mxu0 0.0
    %1518 = vmatprep.subr.mxu0 0.0
    %1519 = vmatpush1.msra.mxu0 0.0
    %1520 = vmatprep.subr.mxu0 0.0
    %1521 = vmatpush1.msra.mxu0 0.0
    %1522 = vmatprep.subr.mxu0 0.0
    %1523 = vmatpush1.msra.mxu0 0.0
    %1524 = vmatprep.subr.mxu0 0.0
    %1525 = vmatpush1.msra.mxu0 0.0
    %1526 = vmatprep.subr.mxu0 0.0
    %1527 = vmatpush1.msra.mxu0 0.0
    %1528 = vmatprep.subr.mxu0 0.0
    %1529 = vmatpush1.msra.mxu0 0.0
    %1530 = vmatprep.subr.mxu0 0.0
    %1531 = vmatpush1.msra.mxu0 0.0
    %1532 = vmatprep.subr.mxu0 0.0
    %1533 = vmatpush1.msra.mxu0 0.0
    %1534 = vmatprep.subr.mxu0 0.0
    %1535 = vmatpush1.msra.mxu0 0.0
    %1536 = vmatprep.subr.mxu0 0.0
    %1537 = vmatpush1.msra.mxu0 0.0
    %1538 = vmatprep.subr.mxu0 0.0
    %1539 = vmatpush1.msra.mxu0 0.0
    %1540 = vmatprep.subr.mxu0 0.0
    %1541 = vmatpush1.msra.mxu0 0.0
    %1542 = vmatprep.subr.mxu0 0.0
    %1543 = vmatpush1.msra.mxu0 0.0
    %1544 = vmatprep.subr.mxu0 0.0
    %1545 = vmatpush1.msra.mxu0 0.0
    %1546 = vmatprep.subr.mxu0 0.0
    %1547 = vmatpush1.msra.mxu0 0.0
    %1548 = vmatprep.subr.mxu0 0.0
    %1549 = vmatpush1.msra.mxu0 0.0
    %1550 = vmatprep.subr.mxu0 0.0
    %1551 = vmatpush1.msra.mxu0 0.0
    %1552 = vmatprep.subr.mxu0 0.0
    %1553 = vmatpush1.msra.mxu0 0.0
    %1554 = vmatprep.subr.mxu0 0.0
    %1555 = vmatpush1.msra.mxu0 0.0
    %1556 = vmatprep.subr.mxu0 0.0
    %1557 = vmatpush1.msra.mxu0 0.0
    %1558 = vmatprep.subr.mxu0 0.0
    %1559 = vmatpush1.msra.mxu0 0.0
    %1560 = vmatprep.subr.mxu0 0.0
    %1561 = vmatpush1.msra.mxu0 0.0
    %1562 = vmatprep.subr.mxu0 0.0
    %1563 = vmatpush1.msra.mxu0 0.0
    %1564 = vmatprep.subr.mxu0 0.0
    %1565 = vmatpush1.msra.mxu0 0.0
    %1566 = vmatprep.subr.mxu0 0.0
    %1567 = vmatpush1.msra.mxu0 0.0
    %1568 = vmatprep.subr.mxu0 0.0
    %1569 = vmatpush1.msra.mxu0 0.0
    %1570 = vmatprep.mubr.f32.mxu0 0.0
    %1571 = vmatmul.mubr.f32.gmra.mrb[0].mxu0 %v1504
    %v1572 = vpop.f32.mrb[0].mxu0
    %v1573 = vadd.f32 0.0, %v1572
    %v1574 = vpop.f32.mrb[0].mxu0
    %1575 = vdwg.mxu0
    %1576 = vrot.lane.b32.xlu0 %v469, 64
    %v1577 = vpop.permute.xlu0 %1576
    %v1580 = vsel %vm1099, %v1193, 0
    %1582 = vmatprep.subr.mxu0 0.0
    %1583 = vmatpush1.msra.mxu0 %v1577
    %1584 = vmatprep.subr.mxu0 0.0
    %1585 = vmatpush1.msra.mxu0 0.0
    %1586 = vmatprep.subr.mxu0 0.0
    %1587 = vmatpush1.msra.mxu0 0.0
    %1588 = vmatprep.subr.mxu0 0.0
    %1589 = vmatpush1.msra.mxu0 0.0
    %1590 = vmatprep.subr.mxu0 0.0
    %1591 = vmatpush1.msra.mxu0 0.0
    %1592 = vmatprep.subr.mxu0 0.0
    %1593 = vmatpush1.msra.mxu0 0.0
    %1594 = vmatprep.subr.mxu0 0.0
    %1595 = vmatpush1.msra.mxu0 0.0
    %1596 = vmatprep.subr.mxu0 0.0
    %1597 = vmatpush1.msra.mxu0 0.0
    %1598 = vmatprep.subr.mxu0 0.0
    %1599 = vmatpush1.msra.mxu0 0.0
    %1600 = vmatprep.subr.mxu0 0.0
    %1601 = vmatpush1.msra.mxu0 0.0
    %1602 = vmatprep.subr.mxu0 0.0
    %1603 = vmatpush1.msra.mxu0 0.0
    %1604 = vmatprep.subr.mxu0 0.0
    %1605 = vmatpush1.msra.mxu0 0.0
    %1606 = vmatprep.subr.mxu0 0.0
    %1607 = vmatpush1.msra.mxu0 0.0
    %1608 = vmatprep.subr.mxu0 0.0
    %1609 = vmatpush1.msra.mxu0 0.0
    %1610 = vmatprep.subr.mxu0 0.0
    %1611 = vmatpush1.msra.mxu0 0.0
    %1612 = vmatprep.subr.mxu0 0.0
    %1613 = vmatpush1.msra.mxu0 0.0
    %1614 = vmatprep.subr.mxu0 0.0
    %1615 = vmatpush1.msra.mxu0 0.0
    %1616 = vmatprep.subr.mxu0 0.0
    %1617 = vmatpush1.msra.mxu0 0.0
    %1618 = vmatprep.subr.mxu0 0.0
    %1619 = vmatpush1.msra.mxu0 0.0
    %1620 = vmatprep.subr.mxu0 0.0
    %1621 = vmatpush1.msra.mxu0 0.0
    %1622 = vmatprep.subr.mxu0 0.0
    %1623 = vmatpush1.msra.mxu0 0.0
    %1624 = vmatprep.subr.mxu0 0.0
    %1625 = vmatpush1.msra.mxu0 0.0
    %1626 = vmatprep.subr.mxu0 0.0
    %1627 = vmatpush1.msra.mxu0 0.0
    %1628 = vmatprep.subr.mxu0 0.0
    %1629 = vmatpush1.msra.mxu0 0.0
    %1630 = vmatprep.subr.mxu0 0.0
    %1631 = vmatpush1.msra.mxu0 0.0
    %1632 = vmatprep.subr.mxu0 0.0
    %1633 = vmatpush1.msra.mxu0 0.0
    %1634 = vmatprep.subr.mxu0 0.0
    %1635 = vmatpush1.msra.mxu0 0.0
    %1636 = vmatprep.subr.mxu0 0.0
    %1637 = vmatpush1.msra.mxu0 0.0
    %1638 = vmatprep.subr.mxu0 0.0
    %1639 = vmatpush1.msra.mxu0 0.0
    %1640 = vmatprep.subr.mxu0 0.0
    %1641 = vmatpush1.msra.mxu0 0.0
    %1642 = vmatprep.subr.mxu0 0.0
    %1643 = vmatpush1.msra.mxu0 0.0
    %1644 = vmatprep.subr.mxu0 0.0
    %1645 = vmatpush1.msra.mxu0 0.0
    %1646 = vmatprep.mubr.f32.mxu0 0.0
    %1647 = vmatmul.mubr.f32.gmra.mrb[0].mxu0 %v1580
    %v1648 = vpop.f32.mrb[0].mxu0
    %v1649 = vadd.f32 0.0, %v1648
    %v1650 = vpop.f32.mrb[0].mxu0
    %1651 = vdwg.mxu0
    %1652 = vrot.lane.b32.xlu0 %v474, 64
    %v1653 = vpop.permute.xlu0 %1652
    %v1656 = vsel %vm1099, %v1194, 0
    %1658 = vmatprep.subr.mxu0 0.0
    %1659 = vmatpush1.msra.mxu0 %v1653
    %1660 = vmatprep.subr.mxu0 0.0
    %1661 = vmatpush1.msra.mxu0 0.0
    %1662 = vmatprep.subr.mxu0 0.0
    %1663 = vmatpush1.msra.mxu0 0.0
    %1664 = vmatprep.subr.mxu0 0.0
    %1665 = vmatpush1.msra.mxu0 0.0
    %1666 = vmatprep.subr.mxu0 0.0
    %1667 = vmatpush1.msra.mxu0 0.0
    %1668 = vmatprep.subr.mxu0 0.0
    %1669 = vmatpush1.msra.mxu0 0.0
    %1670 = vmatprep.subr.mxu0 0.0
    %1671 = vmatpush1.msra.mxu0 0.0
    %1672 = vmatprep.subr.mxu0 0.0
    %1673 = vmatpush1.msra.mxu0 0.0
    %1674 = vmatprep.subr.mxu0 0.0
    %1675 = vmatpush1.msra.mxu0 0.0
    %1676 = vmatprep.subr.mxu0 0.0
    %1677 = vmatpush1.msra.mxu0 0.0
    %1678 = vmatprep.subr.mxu0 0.0
    %1679 = vmatpush1.msra.mxu0 0.0
    %1680 = vmatprep.subr.mxu0 0.0
    %1681 = vmatpush1.msra.mxu0 0.0
    %1682 = vmatprep.subr.mxu0 0.0
    %1683 = vmatpush1.msra.mxu0 0.0
    %1684 = vmatprep.subr.mxu0 0.0
    %1685 = vmatpush1.msra.mxu0 0.0
    %1686 = vmatprep.subr.mxu0 0.0
    %1687 = vmatpush1.msra.mxu0 0.0
    %1688 = vmatprep.subr.mxu0 0.0
    %1689 = vmatpush1.msra.mxu0 0.0
    %1690 = vmatprep.subr.mxu0 0.0
    %1691 = vmatpush1.msra.mxu0 0.0
    %1692 = vmatprep.subr.mxu0 0.0
    %1693 = vmatpush1.msra.mxu0 0.0
    %1694 = vmatprep.subr.mxu0 0.0
    %1695 = vmatpush1.msra.mxu0 0.0
    %1696 = vmatprep.subr.mxu0 0.0
    %1697 = vmatpush1.msra.mxu0 0.0
    %1698 = vmatprep.subr.mxu0 0.0
    %1699 = vmatpush1.msra.mxu0 0.0
    %1700 = vmatprep.subr.mxu0 0.0
    %1701 = vmatpush1.msra.mxu0 0.0
    %1702 = vmatprep.subr.mxu0 0.0
    %1703 = vmatpush1.msra.mxu0 0.0
    %1704 = vmatprep.subr.mxu0 0.0
    %1705 = vmatpush1.msra.mxu0 0.0
    %1706 = vmatprep.subr.mxu0 0.0
    %1707 = vmatpush1.msra.mxu0 0.0
    %1708 = vmatprep.subr.mxu0 0.0
    %1709 = vmatpush1.msra.mxu0 0.0
    %1710 = vmatprep.subr.mxu0 0.0
    %1711 = vmatpush1.msra.mxu0 0.0
    %1712 = vmatprep.subr.mxu0 0.0
    %1713 = vmatpush1.msra.mxu0 0.0
    %1714 = vmatprep.subr.mxu0 0.0
    %1715 = vmatpush1.msra.mxu0 0.0
    %1716 = vmatprep.subr.mxu0 0.0
    %1717 = vmatpush1.msra.mxu0 0.0
    %1718 = vmatprep.subr.mxu0 0.0
    %1719 = vmatpush1.msra.mxu0 0.0
    %1720 = vmatprep.subr.mxu0 0.0
    %1721 = vmatpush1.msra.mxu0 0.0
    %1722 = vmatprep.mubr.f32.mxu0 0.0
    %1723 = vmatmul.mubr.f32.gmra.mrb[0].mxu0 %v1656
    %v1724 = vpop.f32.mrb[0].mxu0
    %v1725 = vadd.f32 0.0, %v1724
    %v1726 = vpop.f32.mrb[0].mxu0
    %1727 = vdwg.mxu0
    %1728 = vrot.lane.b32.xlu0 %v479, 64
    %v1729 = vpop.permute.xlu0 %1728
    %v1732 = vsel %vm1099, %v1195, 0
    %1734 = vmatprep.subr.mxu0 0.0
    %1735 = vmatpush1.msra.mxu0 %v1729
    %1736 = vmatprep.subr.mxu0 0.0
    %1737 = vmatpush1.msra.mxu0 0.0
    %1738 = vmatprep.subr.mxu0 0.0
    %1739 = vmatpush1.msra.mxu0 0.0
    %1740 = vmatprep.subr.mxu0 0.0
    %1741 = vmatpush1.msra.mxu0 0.0
    %1742 = vmatprep.subr.mxu0 0.0
    %1743 = vmatpush1.msra.mxu0 0.0
    %1744 = vmatprep.subr.mxu0 0.0
    %1745 = vmatpush1.msra.mxu0 0.0
    %1746 = vmatprep.subr.mxu0 0.0
    %1747 = vmatpush1.msra.mxu0 0.0
    %1748 = vmatprep.subr.mxu0 0.0
    %1749 = vmatpush1.msra.mxu0 0.0
    %1750 = vmatprep.subr.mxu0 0.0
    %1751 = vmatpush1.msra.mxu0 0.0
    %1752 = vmatprep.subr.mxu0 0.0
    %1753 = vmatpush1.msra.mxu0 0.0
    %1754 = vmatprep.subr.mxu0 0.0
    %1755 = vmatpush1.msra.mxu0 0.0
    %1756 = vmatprep.subr.mxu0 0.0
    %1757 = vmatpush1.msra.mxu0 0.0
    %1758 = vmatprep.subr.mxu0 0.0
    %1759 = vmatpush1.msra.mxu0 0.0
    %1760 = vmatprep.subr.mxu0 0.0
    %1761 = vmatpush1.msra.mxu0 0.0
    %1762 = vmatprep.subr.mxu0 0.0
    %1763 = vmatpush1.msra.mxu0 0.0
    %1764 = vmatprep.subr.mxu0 0.0
    %1765 = vmatpush1.msra.mxu0 0.0
    %1766 = vmatprep.subr.mxu0 0.0
    %1767 = vmatpush1.msra.mxu0 0.0
    %1768 = vmatprep.subr.mxu0 0.0
    %1769 = vmatpush1.msra.mxu0 0.0
    %1770 = vmatprep.subr.mxu0 0.0
    %1771 = vmatpush1.msra.mxu0 0.0
    %1772 = vmatprep.subr.mxu0 0.0
    %1773 = vmatpush1.msra.mxu0 0.0
    %1774 = vmatprep.subr.mxu0 0.0
    %1775 = vmatpush1.msra.mxu0 0.0
    %1776 = vmatprep.subr.mxu0 0.0
    %1777 = vmatpush1.msra.mxu0 0.0
    %1778 = vmatprep.subr.mxu0 0.0
    %1779 = vmatpush1.msra.mxu0 0.0
    %1780 = vmatprep.subr.mxu0 0.0
    %1781 = vmatpush1.msra.mxu0 0.0
    %1782 = vmatprep.subr.mxu0 0.0
    %1783 = vmatpush1.msra.mxu0 0.0
    %1784 = vmatprep.subr.mxu0 0.0
    %1785 = vmatpush1.msra.mxu0 0.0
    %1786 = vmatprep.subr.mxu0 0.0
    %1787 = vmatpush1.msra.mxu0 0.0
    %1788 = vmatprep.subr.mxu0 0.0
    %1789 = vmatpush1.msra.mxu0 0.0
    %1790 = vmatprep.subr.mxu0 0.0
    %1791 = vmatpush1.msra.mxu0 0.0
    %1792 = vmatprep.subr.mxu0 0.0
    %1793 = vmatpush1.msra.mxu0 0.0
    %1794 = vmatprep.subr.mxu0 0.0
    %1795 = vmatpush1.msra.mxu0 0.0
    %1796 = vmatprep.subr.mxu0 0.0
    %1797 = vmatpush1.msra.mxu0 0.0
    %1798 = vmatprep.mubr.f32.mxu0 0.0
    %1799 = vmatmul.mubr.f32.gmra.mrb[0].mxu0 %v1732
    %v1800 = vpop.f32.mrb[0].mxu0
    %v1801 = vadd.f32 0.0, %v1800
    %v1802 = vpop.f32.mrb[0].mxu0
    %1803 = vdwg.mxu0
    %1804 = vst.msk [vmem:[#allocation6] sm:$0xff] %vm485, %v1269
    %1805 = vst.msk [vmem:[#allocation6 + $0x8] sm:$0xff] %vm485, %v1345
    %1806 = vst.msk [vmem:[#allocation6 + $0x10] sm:$0xff] %vm485, %v1421
    %1807 = vst.msk [vmem:[#allocation6 + $0x18] sm:$0xff] %vm485, %v1497
    %1808 = vst.msk [vmem:[#allocation6 + $0x20] sm:$0xff] %vm485, %v1573
    %1809 = vst.msk [vmem:[#allocation6 + $0x28] sm:$0xff] %vm485, %v1649
    %1810 = vst.msk [vmem:[#allocation6 + $0x30] sm:$0xff] %vm485, %v1725
    %1811 = vst.msk [vmem:[#allocation6 + $0x38] sm:$0xff] %vm485, %v1801
    %1812 = vrot.lane.b32.xlu0 %v444, 112
    %v1813 = vpop.permute.xlu0 %1812
    %1814 = vrot.lane.b32.xlu0 %v444, 80
    %v1815 = vpop.permute.xlu0 %1814
    %v1816 = vsel %vm485, %v1813, 0
    %v1818 = vsel %vm485, %v1815, 0
    %1820 = vmatprep.subr.mxu0 0.0
    %1821 = vmatpush1.xpose.msra.mxu0 %v1818
    %1822 = vmatprep.subr.mxu0 0.0
    %1823 = vmatpush1.xpose.msra.mxu0 0.0
    %1824 = vmatprep.subr.mxu0 0.0
    %1825 = vmatpush1.xpose.msra.mxu0 0.0
    %1826 = vmatprep.subr.mxu0 0.0
    %1827 = vmatpush1.xpose.msra.mxu0 0.0
    %1828 = vmatprep.subr.mxu0 0.0
    %1829 = vmatpush1.xpose.msra.mxu0 0.0
    %1830 = vmatprep.subr.mxu0 0.0
    %1831 = vmatpush1.xpose.msra.mxu0 0.0
    %1832 = vmatprep.subr.mxu0 0.0
    %1833 = vmatpush1.xpose.msra.mxu0 0.0
    %1834 = vmatprep.subr.mxu0 0.0
    %1835 = vmatpush1.xpose.msra.mxu0 0.0
    %1836 = vmatprep.subr.mxu0 0.0
    %1837 = vmatpush1.xpose.msra.mxu0 0.0
    %1838 = vmatprep.subr.mxu0 0.0
    %1839 = vmatpush1.xpose.msra.mxu0 0.0
    %1840 = vmatprep.subr.mxu0 0.0
    %1841 = vmatpush1.xpose.msra.mxu0 0.0
    %1842 = vmatprep.subr.mxu0 0.0
    %1843 = vmatpush1.xpose.msra.mxu0 0.0
    %1844 = vmatprep.subr.mxu0 0.0
    %1845 = vmatpush1.xpose.msra.mxu0 0.0
    %1846 = vmatprep.subr.mxu0 0.0
    %1847 = vmatpush1.xpose.msra.mxu0 0.0
    %1848 = vmatprep.subr.mxu0 0.0
    %1849 = vmatpush1.xpose.msra.mxu0 0.0
    %1850 = vmatprep.subr.mxu0 0.0
    %1851 = vmatpush1.xpose.msra.mxu0 0.0
    %1852 = vmatprep.subr.mxu0 0.0
    %1853 = vmatpush1.xpose.msra.mxu0 0.0
    %1854 = vmatprep.subr.mxu0 0.0
    %1855 = vmatpush1.xpose.msra.mxu0 0.0
    %1856 = vmatprep.subr.mxu0 0.0
    %1857 = vmatpush1.xpose.msra.mxu0 0.0
    %1858 = vmatprep.subr.mxu0 0.0
    %1859 = vmatpush1.xpose.msra.mxu0 0.0
    %1860 = vmatprep.subr.mxu0 0.0
    %1861 = vmatpush1.xpose.msra.mxu0 0.0
    %1862 = vmatprep.subr.mxu0 0.0
    %1863 = vmatpush1.xpose.msra.mxu0 0.0
    %1864 = vmatprep.subr.mxu0 0.0
    %1865 = vmatpush1.xpose.msra.mxu0 0.0
    %1866 = vmatprep.subr.mxu0 0.0
    %1867 = vmatpush1.xpose.msra.mxu0 0.0
    %1868 = vmatprep.subr.mxu0 0.0
    %1869 = vmatpush1.xpose.msra.mxu0 0.0
    %1870 = vmatprep.subr.mxu0 0.0
    %1871 = vmatpush1.xpose.msra.mxu0 0.0
    %1872 = vmatprep.subr.mxu0 0.0
    %1873 = vmatpush1.xpose.msra.mxu0 0.0
    %1874 = vmatprep.subr.mxu0 0.0
    %1875 = vmatpush1.xpose.msra.mxu0 0.0
    %1876 = vmatprep.subr.mxu0 0.0
    %1877 = vmatpush1.xpose.msra.mxu0 0.0
    %1878 = vmatprep.subr.mxu0 0.0
    %1879 = vmatpush1.xpose.msra.mxu0 0.0
    %1880 = vmatprep.subr.mxu0 0.0
    %1881 = vmatpush1.xpose.msra.mxu0 0.0
    %1882 = vmatprep.subr.mxu0 0.0
    %1883 = vmatpush1.xpose.msra.mxu0 0.0
    %1884 = vmatprep.mubr.f32.mxu0 0.0
    %1885 = vmatmul.mubr.f32.gmra.mrb[0].mxu0 %v1816
    %v1886 = vpop.f32.mrb[0].mxu0
    %v1887 = vadd.f32 %v333, %v1886
    %v1888 = vpop.f32.mrb[0].mxu0
    %1889 = vdwg.mxu0
    %1890 = vrot.lane.b32.xlu0 %v449, 112
    %v1891 = vpop.permute.xlu0 %1890
    %1892 = vrot.lane.b32.xlu0 %v449, 80
    %v1893 = vpop.permute.xlu0 %1892
    %v1894 = vsel %vm485, %v1891, 0
    %v1896 = vsel %vm485, %v1893, 0
    %1898 = vmatprep.subr.mxu0 0.0
    %1899 = vmatpush1.xpose.msra.mxu0 %v1896
    %1900 = vmatprep.subr.mxu0 0.0
    %1901 = vmatpush1.xpose.msra.mxu0 0.0
    %1902 = vmatprep.subr.mxu0 0.0
    %1903 = vmatpush1.xpose.msra.mxu0 0.0
    %1904 = vmatprep.subr.mxu0 0.0
    %1905 = vmatpush1.xpose.msra.mxu0 0.0
    %1906 = vmatprep.subr.mxu0 0.0
    %1907 = vmatpush1.xpose.msra.mxu0 0.0
    %1908 = vmatprep.subr.mxu0 0.0
    %1909 = vmatpush1.xpose.msra.mxu0 0.0
    %1910 = vmatprep.subr.mxu0 0.0
    %1911 = vmatpush1.xpose.msra.mxu0 0.0
    %1912 = vmatprep.subr.mxu0 0.0
    %1913 = vmatpush1.xpose.msra.mxu0 0.0
    %1914 = vmatprep.subr.mxu0 0.0
    %1915 = vmatpush1.xpose.msra.mxu0 0.0
    %1916 = vmatprep.subr.mxu0 0.0
    %1917 = vmatpush1.xpose.msra.mxu0 0.0
    %1918 = vmatprep.subr.mxu0 0.0
    %1919 = vmatpush1.xpose.msra.mxu0 0.0
    %1920 = vmatprep.subr.mxu0 0.0
    %1921 = vmatpush1.xpose.msra.mxu0 0.0
    %1922 = vmatprep.subr.mxu0 0.0
    %1923 = vmatpush1.xpose.msra.mxu0 0.0
    %1924 = vmatprep.subr.mxu0 0.0
    %1925 = vmatpush1.xpose.msra.mxu0 0.0
    %1926 = vmatprep.subr.mxu0 0.0
    %1927 = vmatpush1.xpose.msra.mxu0 0.0
    %1928 = vmatprep.subr.mxu0 0.0
    %1929 = vmatpush1.xpose.msra.mxu0 0.0
    %1930 = vmatprep.subr.mxu0 0.0
    %1931 = vmatpush1.xpose.msra.mxu0 0.0
    %1932 = vmatprep.subr.mxu0 0.0
    %1933 = vmatpush1.xpose.msra.mxu0 0.0
    %1934 = vmatprep.subr.mxu0 0.0
    %1935 = vmatpush1.xpose.msra.mxu0 0.0
    %1936 = vmatprep.subr.mxu0 0.0
    %1937 = vmatpush1.xpose.msra.mxu0 0.0
    %1938 = vmatprep.subr.mxu0 0.0
    %1939 = vmatpush1.xpose.msra.mxu0 0.0
    %1940 = vmatprep.subr.mxu0 0.0
    %1941 = vmatpush1.xpose.msra.mxu0 0.0
    %1942 = vmatprep.subr.mxu0 0.0
    %1943 = vmatpush1.xpose.msra.mxu0 0.0
    %1944 = vmatprep.subr.mxu0 0.0
    %1945 = vmatpush1.xpose.msra.mxu0 0.0
    %1946 = vmatprep.subr.mxu0 0.0
    %1947 = vmatpush1.xpose.msra.mxu0 0.0
    %1948 = vmatprep.subr.mxu0 0.0
    %1949 = vmatpush1.xpose.msra.mxu0 0.0
    %1950 = vmatprep.subr.mxu0 0.0
    %1951 = vmatpush1.xpose.msra.mxu0 0.0
    %1952 = vmatprep.subr.mxu0 0.0
    %1953 = vmatpush1.xpose.msra.mxu0 0.0
    %1954 = vmatprep.subr.mxu0 0.0
    %1955 = vmatpush1.xpose.msra.mxu0 0.0
    %1956 = vmatprep.subr.mxu0 0.0
    %1957 = vmatpush1.xpose.msra.mxu0 0.0
    %1958 = vmatprep.subr.mxu0 0.0
    %1959 = vmatpush1.xpose.msra.mxu0 0.0
    %1960 = vmatprep.subr.mxu0 0.0
    %1961 = vmatpush1.xpose.msra.mxu0 0.0
    %1962 = vmatprep.mubr.f32.mxu0 0.0
    %1963 = vmatmul.mubr.f32.gmra.mrb[0].mxu0 %v1894
    %v1964 = vpop.f32.mrb[0].mxu0
    %v1965 = vadd.f32 %v334, %v1964
    %v1966 = vpop.f32.mrb[0].mxu0
    %1967 = vdwg.mxu0
    %1968 = vrot.lane.b32.xlu0 %v454, 112
    %v1969 = vpop.permute.xlu0 %1968
    %1970 = vrot.lane.b32.xlu0 %v454, 80
    %v1971 = vpop.permute.xlu0 %1970
    %v1972 = vsel %vm485, %v1969, 0
    %v1974 = vsel %vm485, %v1971, 0
    %1976 = vmatprep.subr.mxu0 0.0
    %1977 = vmatpush1.xpose.msra.mxu0 %v1974
    %1978 = vmatprep.subr.mxu0 0.0
    %1979 = vmatpush1.xpose.msra.mxu0 0.0
    %1980 = vmatprep.subr.mxu0 0.0
    %1981 = vmatpush1.xpose.msra.mxu0 0.0
    %1982 = vmatprep.subr.mxu0 0.0
    %1983 = vmatpush1.xpose.msra.mxu0 0.0
    %1984 = vmatprep.subr.mxu0 0.0
    %1985 = vmatpush1.xpose.msra.mxu0 0.0
    %1986 = vmatprep.subr.mxu0 0.0
    %1987 = vmatpush1.xpose.msra.mxu0 0.0
    %1988 = vmatprep.subr.mxu0 0.0
    %1989 = vmatpush1.xpose.msra.mxu0 0.0
    %1990 = vmatprep.subr.mxu0 0.0
    %1991 = vmatpush1.xpose.msra.mxu0 0.0
    %1992 = vmatprep.subr.mxu0 0.0
    %1993 = vmatpush1.xpose.msra.mxu0 0.0
    %1994 = vmatprep.subr.mxu0 0.0
    %1995 = vmatpush1.xpose.msra.mxu0 0.0
    %1996 = vmatprep.subr.mxu0 0.0
    %1997 = vmatpush1.xpose.msra.mxu0 0.0
    %1998 = vmatprep.subr.mxu0 0.0
    %1999 = vmatpush1.xpose.msra.mxu0 0.0
    %2000 = vmatprep.subr.mxu0 0.0
    %2001 = vmatpush1.xpose.msra.mxu0 0.0
    %2002 = vmatprep.subr.mxu0 0.0
    %2003 = vmatpush1.xpose.msra.mxu0 0.0
    %2004 = vmatprep.subr.mxu0 0.0
    %2005 = vmatpush1.xpose.msra.mxu0 0.0
    %2006 = vmatprep.subr.mxu0 0.0
    %2007 = vmatpush1.xpose.msra.mxu0 0.0
    %2008 = vmatprep.subr.mxu0 0.0
    %2009 = vmatpush1.xpose.msra.mxu0 0.0
    %2010 = vmatprep.subr.mxu0 0.0
    %2011 = vmatpush1.xpose.msra.mxu0 0.0
    %2012 = vmatprep.subr.mxu0 0.0
    %2013 = vmatpush1.xpose.msra.mxu0 0.0
    %2014 = vmatprep.subr.mxu0 0.0
    %2015 = vmatpush1.xpose.msra.mxu0 0.0
    %2016 = vmatprep.subr.mxu0 0.0
    %2017 = vmatpush1.xpose.msra.mxu0 0.0
    %2018 = vmatprep.subr.mxu0 0.0
    %2019 = vmatpush1.xpose.msra.mxu0 0.0
    %2020 = vmatprep.subr.mxu0 0.0
    %2021 = vmatpush1.xpose.msra.mxu0 0.0
    %2022 = vmatprep.subr.mxu0 0.0
    %2023 = vmatpush1.xpose.msra.mxu0 0.0
    %2024 = vmatprep.subr.mxu0 0.0
    %2025 = vmatpush1.xpose.msra.mxu0 0.0
    %2026 = vmatprep.subr.mxu0 0.0
    %2027 = vmatpush1.xpose.msra.mxu0 0.0
    %2028 = vmatprep.subr.mxu0 0.0
    %2029 = vmatpush1.xpose.msra.mxu0 0.0
    %2030 = vmatprep.subr.mxu0 0.0
    %2031 = vmatpush1.xpose.msra.mxu0 0.0
    %2032 = vmatprep.subr.mxu0 0.0
    %2033 = vmatpush1.xpose.msra.mxu0 0.0
    %2034 = vmatprep.subr.mxu0 0.0
    %2035 = vmatpush1.xpose.msra.mxu0 0.0
    %2036 = vmatprep.subr.mxu0 0.0
    %2037 = vmatpush1.xpose.msra.mxu0 0.0
    %2038 = vmatprep.subr.mxu0 0.0
    %2039 = vmatpush1.xpose.msra.mxu0 0.0
    %2040 = vmatprep.mubr.f32.mxu0 0.0
    %2041 = vmatmul.mubr.f32.gmra.mrb[0].mxu0 %v1972
    %v2042 = vpop.f32.mrb[0].mxu0
    %v2043 = vadd.f32 %v335, %v2042
    %v2044 = vpop.f32.mrb[0].mxu0
    %2045 = vdwg.mxu0
    %2046 = vrot.lane.b32.xlu0 %v459, 112
    %v2047 = vpop.permute.xlu0 %2046
    %2048 = vrot.lane.b32.xlu0 %v459, 80
    %v2049 = vpop.permute.xlu0 %2048
    %v2050 = vsel %vm485, %v2047, 0
    %v2052 = vsel %vm485, %v2049, 0
    %2054 = vmatprep.subr.mxu0 0.0
    %2055 = vmatpush1.xpose.msra.mxu0 %v2052
    %2056 = vmatprep.subr.mxu0 0.0
    %2057 = vmatpush1.xpose.msra.mxu0 0.0
    %2058 = vmatprep.subr.mxu0 0.0
    %2059 = vmatpush1.xpose.msra.mxu0 0.0
    %2060 = vmatprep.subr.mxu0 0.0
    %2061 = vmatpush1.xpose.msra.mxu0 0.0
    %2062 = vmatprep.subr.mxu0 0.0
    %2063 = vmatpush1.xpose.msra.mxu0 0.0
    %2064 = vmatprep.subr.mxu0 0.0
    %2065 = vmatpush1.xpose.msra.mxu0 0.0
    %2066 = vmatprep.subr.mxu0 0.0
    %2067 = vmatpush1.xpose.msra.mxu0 0.0
    %2068 = vmatprep.subr.mxu0 0.0
    %2069 = vmatpush1.xpose.msra.mxu0 0.0
    %2070 = vmatprep.subr.mxu0 0.0
    %2071 = vmatpush1.xpose.msra.mxu0 0.0
    %2072 = vmatprep.subr.mxu0 0.0
    %2073 = vmatpush1.xpose.msra.mxu0 0.0
    %2074 = vmatprep.subr.mxu0 0.0
    %2075 = vmatpush1.xpose.msra.mxu0 0.0
    %2076 = vmatprep.subr.mxu0 0.0
    %2077 = vmatpush1.xpose.msra.mxu0 0.0
    %2078 = vmatprep.subr.mxu0 0.0
    %2079 = vmatpush1.xpose.msra.mxu0 0.0
    %2080 = vmatprep.subr.mxu0 0.0
    %2081 = vmatpush1.xpose.msra.mxu0 0.0
    %2082 = vmatprep.subr.mxu0 0.0
    %2083 = vmatpush1.xpose.msra.mxu0 0.0
    %2084 = vmatprep.subr.mxu0 0.0
    %2085 = vmatpush1.xpose.msra.mxu0 0.0
    %2086 = vmatprep.subr.mxu0 0.0
    %2087 = vmatpush1.xpose.msra.mxu0 0.0
    %2088 = vmatprep.subr.mxu0 0.0
    %2089 = vmatpush1.xpose.msra.mxu0 0.0
    %2090 = vmatprep.subr.mxu0 0.0
    %2091 = vmatpush1.xpose.msra.mxu0 0.0
    %2092 = vmatprep.subr.mxu0 0.0
    %2093 = vmatpush1.xpose.msra.mxu0 0.0
    %2094 = vmatprep.subr.mxu0 0.0
    %2095 = vmatpush1.xpose.msra.mxu0 0.0
    %2096 = vmatprep.subr.mxu0 0.0
    %2097 = vmatpush1.xpose.msra.mxu0 0.0
    %2098 = vmatprep.subr.mxu0 0.0
    %2099 = vmatpush1.xpose.msra.mxu0 0.0
    %2100 = vmatprep.subr.mxu0 0.0
    %2101 = vmatpush1.xpose.msra.mxu0 0.0
    %2102 = vmatprep.subr.mxu0 0.0
    %2103 = vmatpush1.xpose.msra.mxu0 0.0
    %2104 = vmatprep.subr.mxu0 0.0
    %2105 = vmatpush1.xpose.msra.mxu0 0.0
    %2106 = vmatprep.subr.mxu0 0.0
    %2107 = vmatpush1.xpose.msra.mxu0 0.0
    %2108 = vmatprep.subr.mxu0 0.0
    %2109 = vmatpush1.xpose.msra.mxu0 0.0
    %2110 = vmatprep.subr.mxu0 0.0
    %2111 = vmatpush1.xpose.msra.mxu0 0.0
    %2112 = vmatprep.subr.mxu0 0.0
    %2113 = vmatpush1.xpose.msra.mxu0 0.0
    %2114 = vmatprep.subr.mxu0 0.0
    %2115 = vmatpush1.xpose.msra.mxu0 0.0
    %2116 = vmatprep.subr.mxu0 0.0
    %2117 = vmatpush1.xpose.msra.mxu0 0.0
    %2118 = vmatprep.mubr.f32.mxu0 0.0
    %2119 = vmatmul.mubr.f32.gmra.mrb[0].mxu0 %v2050
    %v2120 = vpop.f32.mrb[0].mxu0
    %v2121 = vadd.f32 %v336, %v2120
    %v2122 = vpop.f32.mrb[0].mxu0
    %2123 = vdwg.mxu0
    %2124 = vrot.lane.b32.xlu0 %v464, 112
    %v2125 = vpop.permute.xlu0 %2124
    %2126 = vrot.lane.b32.xlu0 %v464, 80
    %v2127 = vpop.permute.xlu0 %2126
    %v2128 = vsel %vm485, %v2125, 0
    %v2130 = vsel %vm485, %v2127, 0
    %2132 = vmatprep.subr.mxu0 0.0
    %2133 = vmatpush1.xpose.msra.mxu0 %v2130
    %2134 = vmatprep.subr.mxu0 0.0
    %2135 = vmatpush1.xpose.msra.mxu0 0.0
    %2136 = vmatprep.subr.mxu0 0.0
    %2137 = vmatpush1.xpose.msra.mxu0 0.0
    %2138 = vmatprep.subr.mxu0 0.0
    %2139 = vmatpush1.xpose.msra.mxu0 0.0
    %2140 = vmatprep.subr.mxu0 0.0
    %2141 = vmatpush1.xpose.msra.mxu0 0.0
    %2142 = vmatprep.subr.mxu0 0.0
    %2143 = vmatpush1.xpose.msra.mxu0 0.0
    %2144 = vmatprep.subr.mxu0 0.0
    %2145 = vmatpush1.xpose.msra.mxu0 0.0
    %2146 = vmatprep.subr.mxu0 0.0
    %2147 = vmatpush1.xpose.msra.mxu0 0.0
    %2148 = vmatprep.subr.mxu0 0.0
    %2149 = vmatpush1.xpose.msra.mxu0 0.0
    %2150 = vmatprep.subr.mxu0 0.0
    %2151 = vmatpush1.xpose.msra.mxu0 0.0
    %2152 = vmatprep.subr.mxu0 0.0
    %2153 = vmatpush1.xpose.msra.mxu0 0.0
    %2154 = vmatprep.subr.mxu0 0.0
    %2155 = vmatpush1.xpose.msra.mxu0 0.0
    %2156 = vmatprep.subr.mxu0 0.0
    %2157 = vmatpush1.xpose.msra.mxu0 0.0
    %2158 = vmatprep.subr.mxu0 0.0
    %2159 = vmatpush1.xpose.msra.mxu0 0.0
    %2160 = vmatprep.subr.mxu0 0.0
    %2161 = vmatpush1.xpose.msra.mxu0 0.0
    %2162 = vmatprep.subr.mxu0 0.0
    %2163 = vmatpush1.xpose.msra.mxu0 0.0
    %2164 = vmatprep.subr.mxu0 0.0
    %2165 = vmatpush1.xpose.msra.mxu0 0.0
    %2166 = vmatprep.subr.mxu0 0.0
    %2167 = vmatpush1.xpose.msra.mxu0 0.0
    %2168 = vmatprep.subr.mxu0 0.0
    %2169 = vmatpush1.xpose.msra.mxu0 0.0
    %2170 = vmatprep.subr.mxu0 0.0
    %2171 = vmatpush1.xpose.msra.mxu0 0.0
    %2172 = vmatprep.subr.mxu0 0.0
    %2173 = vmatpush1.xpose.msra.mxu0 0.0
    %2174 = vmatprep.subr.mxu0 0.0
    %2175 = vmatpush1.xpose.msra.mxu0 0.0
    %2176 = vmatprep.subr.mxu0 0.0
    %2177 = vmatpush1.xpose.msra.mxu0 0.0
    %2178 = vmatprep.subr.mxu0 0.0
    %2179 = vmatpush1.xpose.msra.mxu0 0.0
    %2180 = vmatprep.subr.mxu0 0.0
    %2181 = vmatpush1.xpose.msra.mxu0 0.0
    %2182 = vmatprep.subr.mxu0 0.0
    %2183 = vmatpush1.xpose.msra.mxu0 0.0
    %2184 = vmatprep.subr.mxu0 0.0
    %2185 = vmatpush1.xpose.msra.mxu0 0.0
    %2186 = vmatprep.subr.mxu0 0.0
    %2187 = vmatpush1.xpose.msra.mxu0 0.0
    %2188 = vmatprep.subr.mxu0 0.0
    %2189 = vmatpush1.xpose.msra.mxu0 0.0
    %2190 = vmatprep.subr.mxu0 0.0
    %2191 = vmatpush1.xpose.msra.mxu0 0.0
    %2192 = vmatprep.subr.mxu0 0.0
    %2193 = vmatpush1.xpose.msra.mxu0 0.0
    %2194 = vmatprep.subr.mxu0 0.0
    %2195 = vmatpush1.xpose.msra.mxu0 0.0
    %2196 = vmatprep.mubr.f32.mxu0 0.0
    %2197 = vmatmul.mubr.f32.gmra.mrb[0].mxu0 %v2128
    %v2198 = vpop.f32.mrb[0].mxu0
    %v2199 = vadd.f32 %v337, %v2198
    %v2200 = vpop.f32.mrb[0].mxu0
    %2201 = vdwg.mxu0
    %2202 = vrot.lane.b32.xlu0 %v469, 112
    %v2203 = vpop.permute.xlu0 %2202
    %2204 = vrot.lane.b32.xlu0 %v469, 80
    %v2205 = vpop.permute.xlu0 %2204
    %v2206 = vsel %vm485, %v2203, 0
    %v2208 = vsel %vm485, %v2205, 0
    %2210 = vmatprep.subr.mxu0 0.0
    %2211 = vmatpush1.xpose.msra.mxu0 %v2208
    %2212 = vmatprep.subr.mxu0 0.0
    %2213 = vmatpush1.xpose.msra.mxu0 0.0
    %2214 = vmatprep.subr.mxu0 0.0
    %2215 = vmatpush1.xpose.msra.mxu0 0.0
    %2216 = vmatprep.subr.mxu0 0.0
    %2217 = vmatpush1.xpose.msra.mxu0 0.0
    %2218 = vmatprep.subr.mxu0 0.0
    %2219 = vmatpush1.xpose.msra.mxu0 0.0
    %2220 = vmatprep.subr.mxu0 0.0
    %2221 = vmatpush1.xpose.msra.mxu0 0.0
    %2222 = vmatprep.subr.mxu0 0.0
    %2223 = vmatpush1.xpose.msra.mxu0 0.0
    %2224 = vmatprep.subr.mxu0 0.0
    %2225 = vmatpush1.xpose.msra.mxu0 0.0
    %2226 = vmatprep.subr.mxu0 0.0
    %2227 = vmatpush1.xpose.msra.mxu0 0.0
    %2228 = vmatprep.subr.mxu0 0.0
    %2229 = vmatpush1.xpose.msra.mxu0 0.0
    %2230 = vmatprep.subr.mxu0 0.0
    %2231 = vmatpush1.xpose.msra.mxu0 0.0
    %2232 = vmatprep.subr.mxu0 0.0
    %2233 = vmatpush1.xpose.msra.mxu0 0.0
    %2234 = vmatprep.subr.mxu0 0.0
    %2235 = vmatpush1.xpose.msra.mxu0 0.0
    %2236 = vmatprep.subr.mxu0 0.0
    %2237 = vmatpush1.xpose.msra.mxu0 0.0
    %2238 = vmatprep.subr.mxu0 0.0
    %2239 = vmatpush1.xpose.msra.mxu0 0.0
    %2240 = vmatprep.subr.mxu0 0.0
    %2241 = vmatpush1.xpose.msra.mxu0 0.0
    %2242 = vmatprep.subr.mxu0 0.0
    %2243 = vmatpush1.xpose.msra.mxu0 0.0
    %2244 = vmatprep.subr.mxu0 0.0
    %2245 = vmatpush1.xpose.msra.mxu0 0.0
    %2246 = vmatprep.subr.mxu0 0.0
    %2247 = vmatpush1.xpose.msra.mxu0 0.0
    %2248 = vmatprep.subr.mxu0 0.0
    %2249 = vmatpush1.xpose.msra.mxu0 0.0
    %2250 = vmatprep.subr.mxu0 0.0
    %2251 = vmatpush1.xpose.msra.mxu0 0.0
    %2252 = vmatprep.subr.mxu0 0.0
    %2253 = vmatpush1.xpose.msra.mxu0 0.0
    %2254 = vmatprep.subr.mxu0 0.0
    %2255 = vmatpush1.xpose.msra.mxu0 0.0
    %2256 = vmatprep.subr.mxu0 0.0
    %2257 = vmatpush1.xpose.msra.mxu0 0.0
    %2258 = vmatprep.subr.mxu0 0.0
    %2259 = vmatpush1.xpose.msra.mxu0 0.0
    %2260 = vmatprep.subr.mxu0 0.0
    %2261 = vmatpush1.xpose.msra.mxu0 0.0
    %2262 = vmatprep.subr.mxu0 0.0
    %2263 = vmatpush1.xpose.msra.mxu0 0.0
    %2264 = vmatprep.subr.mxu0 0.0
    %2265 = vmatpush1.xpose.msra.mxu0 0.0
    %2266 = vmatprep.subr.mxu0 0.0
    %2267 = vmatpush1.xpose.msra.mxu0 0.0
    %2268 = vmatprep.subr.mxu0 0.0
    %2269 = vmatpush1.xpose.msra.mxu0 0.0
    %2270 = vmatprep.subr.mxu0 0.0
    %2271 = vmatpush1.xpose.msra.mxu0 0.0
    %2272 = vmatprep.subr.mxu0 0.0
    %2273 = vmatpush1.xpose.msra.mxu0 0.0
    %2274 = vmatprep.mubr.f32.mxu0 0.0
    %2275 = vmatmul.mubr.f32.gmra.mrb[0].mxu0 %v2206
    %v2276 = vpop.f32.mrb[0].mxu0
    %v2277 = vadd.f32 %v338, %v2276
    %v2278 = vpop.f32.mrb[0].mxu0
    %2279 = vdwg.mxu0
    %2280 = vrot.lane.b32.xlu0 %v474, 112
    %v2281 = vpop.permute.xlu0 %2280
    %2282 = vrot.lane.b32.xlu0 %v474, 80
    %v2283 = vpop.permute.xlu0 %2282
    %v2284 = vsel %vm485, %v2281, 0
    %v2286 = vsel %vm485, %v2283, 0
    %2288 = vmatprep.subr.mxu0 0.0
    %2289 = vmatpush1.xpose.msra.mxu0 %v2286
    %2290 = vmatprep.subr.mxu0 0.0
    %2291 = vmatpush1.xpose.msra.mxu0 0.0
    %2292 = vmatprep.subr.mxu0 0.0
    %2293 = vmatpush1.xpose.msra.mxu0 0.0
    %2294 = vmatprep.subr.mxu0 0.0
    %2295 = vmatpush1.xpose.msra.mxu0 0.0
    %2296 = vmatprep.subr.mxu0 0.0
    %2297 = vmatpush1.xpose.msra.mxu0 0.0
    %2298 = vmatprep.subr.mxu0 0.0
    %2299 = vmatpush1.xpose.msra.mxu0 0.0
    %2300 = vmatprep.subr.mxu0 0.0
    %2301 = vmatpush1.xpose.msra.mxu0 0.0
    %2302 = vmatprep.subr.mxu0 0.0
    %2303 = vmatpush1.xpose.msra.mxu0 0.0
    %2304 = vmatprep.subr.mxu0 0.0
    %2305 = vmatpush1.xpose.msra.mxu0 0.0
    %2306 = vmatprep.subr.mxu0 0.0
    %2307 = vmatpush1.xpose.msra.mxu0 0.0
    %2308 = vmatprep.subr.mxu0 0.0
    %2309 = vmatpush1.xpose.msra.mxu0 0.0
    %2310 = vmatprep.subr.mxu0 0.0
    %2311 = vmatpush1.xpose.msra.mxu0 0.0
    %2312 = vmatprep.subr.mxu0 0.0
    %2313 = vmatpush1.xpose.msra.mxu0 0.0
    %2314 = vmatprep.subr.mxu0 0.0
    %2315 = vmatpush1.xpose.msra.mxu0 0.0
    %2316 = vmatprep.subr.mxu0 0.0
    %2317 = vmatpush1.xpose.msra.mxu0 0.0
    %2318 = vmatprep.subr.mxu0 0.0
    %2319 = vmatpush1.xpose.msra.mxu0 0.0
    %2320 = vmatprep.subr.mxu0 0.0
    %2321 = vmatpush1.xpose.msra.mxu0 0.0
    %2322 = vmatprep.subr.mxu0 0.0
    %2323 = vmatpush1.xpose.msra.mxu0 0.0
    %2324 = vmatprep.subr.mxu0 0.0
    %2325 = vmatpush1.xpose.msra.mxu0 0.0
    %2326 = vmatprep.subr.mxu0 0.0
    %2327 = vmatpush1.xpose.msra.mxu0 0.0
    %2328 = vmatprep.subr.mxu0 0.0
    %2329 = vmatpush1.xpose.msra.mxu0 0.0
    %2330 = vmatprep.subr.mxu0 0.0
    %2331 = vmatpush1.xpose.msra.mxu0 0.0
    %2332 = vmatprep.subr.mxu0 0.0
    %2333 = vmatpush1.xpose.msra.mxu0 0.0
    %2334 = vmatprep.subr.mxu0 0.0
    %2335 = vmatpush1.xpose.msra.mxu0 0.0
    %2336 = vmatprep.subr.mxu0 0.0
    %2337 = vmatpush1.xpose.msra.mxu0 0.0
    %2338 = vmatprep.subr.mxu0 0.0
    %2339 = vmatpush1.xpose.msra.mxu0 0.0
    %2340 = vmatprep.subr.mxu0 0.0
    %2341 = vmatpush1.xpose.msra.mxu0 0.0
    %2342 = vmatprep.subr.mxu0 0.0
    %2343 = vmatpush1.xpose.msra.mxu0 0.0
    %2344 = vmatprep.subr.mxu0 0.0
    %2345 = vmatpush1.xpose.msra.mxu0 0.0
    %2346 = vmatprep.subr.mxu0 0.0
    %2347 = vmatpush1.xpose.msra.mxu0 0.0
    %2348 = vmatprep.subr.mxu0 0.0
    %2349 = vmatpush1.xpose.msra.mxu0 0.0
    %2350 = vmatprep.subr.mxu0 0.0
    %2351 = vmatpush1.xpose.msra.mxu0 0.0
    %2352 = vmatprep.mubr.f32.mxu0 0.0
    %2353 = vmatmul.mubr.f32.gmra.mrb[0].mxu0 %v2284
    %v2354 = vpop.f32.mrb[0].mxu0
    %v2355 = vadd.f32 %v339, %v2354
    %v2356 = vpop.f32.mrb[0].mxu0
    %2357 = vdwg.mxu0
    %2358 = vrot.lane.b32.xlu0 %v479, 112
    %v2359 = vpop.permute.xlu0 %2358
    %2360 = vrot.lane.b32.xlu0 %v479, 80
    %v2361 = vpop.permute.xlu0 %2360
    %v2362 = vsel %vm485, %v2359, 0
    %v2364 = vsel %vm485, %v2361, 0
    %2366 = vmatprep.subr.mxu0 0.0
    %2367 = vmatpush1.xpose.msra.mxu0 %v2364
    %2368 = vmatprep.subr.mxu0 0.0
    %2369 = vmatpush1.xpose.msra.mxu0 0.0
    %2370 = vmatprep.subr.mxu0 0.0
    %2371 = vmatpush1.xpose.msra.mxu0 0.0
    %2372 = vmatprep.subr.mxu0 0.0
    %2373 = vmatpush1.xpose.msra.mxu0 0.0
    %2374 = vmatprep.subr.mxu0 0.0
    %2375 = vmatpush1.xpose.msra.mxu0 0.0
    %2376 = vmatprep.subr.mxu0 0.0
    %2377 = vmatpush1.xpose.msra.mxu0 0.0
    %2378 = vmatprep.subr.mxu0 0.0
    %2379 = vmatpush1.xpose.msra.mxu0 0.0
    %2380 = vmatprep.subr.mxu0 0.0
    %2381 = vmatpush1.xpose.msra.mxu0 0.0
    %2382 = vmatprep.subr.mxu0 0.0
    %2383 = vmatpush1.xpose.msra.mxu0 0.0
    %2384 = vmatprep.subr.mxu0 0.0
    %2385 = vmatpush1.xpose.msra.mxu0 0.0
    %2386 = vmatprep.subr.mxu0 0.0
    %2387 = vmatpush1.xpose.msra.mxu0 0.0
    %2388 = vmatprep.subr.mxu0 0.0
    %2389 = vmatpush1.xpose.msra.mxu0 0.0
    %2390 = vmatprep.subr.mxu0 0.0
    %2391 = vmatpush1.xpose.msra.mxu0 0.0
    %2392 = vmatprep.subr.mxu0 0.0
    %2393 = vmatpush1.xpose.msra.mxu0 0.0
    %2394 = vmatprep.subr.mxu0 0.0
    %2395 = vmatpush1.xpose.msra.mxu0 0.0
    %2396 = vmatprep.subr.mxu0 0.0
    %2397 = vmatpush1.xpose.msra.mxu0 0.0
    %2398 = vmatprep.subr.mxu0 0.0
    %2399 = vmatpush1.xpose.msra.mxu0 0.0
    %2400 = vmatprep.subr.mxu0 0.0
    %2401 = vmatpush1.xpose.msra.mxu0 0.0
    %2402 = vmatprep.subr.mxu0 0.0
    %2403 = vmatpush1.xpose.msra.mxu0 0.0
    %2404 = vmatprep.subr.mxu0 0.0
    %2405 = vmatpush1.xpose.msra.mxu0 0.0
    %2406 = vmatprep.subr.mxu0 0.0
    %2407 = vmatpush1.xpose.msra.mxu0 0.0
    %2408 = vmatprep.subr.mxu0 0.0
    %2409 = vmatpush1.xpose.msra.mxu0 0.0
    %2410 = vmatprep.subr.mxu0 0.0
    %2411 = vmatpush1.xpose.msra.mxu0 0.0
    %2412 = vmatprep.subr.mxu0 0.0
    %2413 = vmatpush1.xpose.msra.mxu0 0.0
    %2414 = vmatprep.subr.mxu0 0.0
    %2415 = vmatpush1.xpose.msra.mxu0 0.0
    %2416 = vmatprep.subr.mxu0 0.0
    %2417 = vmatpush1.xpose.msra.mxu0 0.0
    %2418 = vmatprep.subr.mxu0 0.0
    %2419 = vmatpush1.xpose.msra.mxu0 0.0
    %2420 = vmatprep.subr.mxu0 0.0
    %2421 = vmatpush1.xpose.msra.mxu0 0.0
    %2422 = vmatprep.subr.mxu0 0.0
    %2423 = vmatpush1.xpose.msra.mxu0 0.0
    %2424 = vmatprep.subr.mxu0 0.0
    %2425 = vmatpush1.xpose.msra.mxu0 0.0
    %2426 = vmatprep.subr.mxu0 0.0
    %2427 = vmatpush1.xpose.msra.mxu0 0.0
    %2428 = vmatprep.subr.mxu0 0.0
    %2429 = vmatpush1.xpose.msra.mxu0 0.0
    %2430 = vmatprep.mubr.f32.mxu0 0.0
    %2431 = vmatmul.mubr.f32.gmra.mrb[0].mxu0 %v2362
    %v2432 = vpop.f32.mrb[0].mxu0
    %v2433 = vadd.f32 %v340, %v2432
    %v2434 = vpop.f32.mrb[0].mxu0
    %2435 = vdwg.mxu0
    %v2436 = vsel %vm1099, %v1887, -inf
    %2437 = vmax.xlane.f32.xlu0 %v2436
    %v2438 = vpop.xlane.xlu0 %2437
    %v2439 = vsel %vm1099, %v1965, -inf
    %2440 = vmax.xlane.f32.xlu0 %v2439
    %v2441 = vpop.xlane.xlu0 %2440
    %v2442 = vsel %vm1099, %v2043, -inf
    %2443 = vmax.xlane.f32.xlu0 %v2442
    %v2444 = vpop.xlane.xlu0 %2443
    %v2445 = vsel %vm1099, %v2121, -inf
    %2446 = vmax.xlane.f32.xlu0 %v2445
    %v2447 = vpop.xlane.xlu0 %2446
    %v2448 = vsel %vm1099, %v2199, -inf
    %2449 = vmax.xlane.f32.xlu0 %v2448
    %v2450 = vpop.xlane.xlu0 %2449
    %v2451 = vsel %vm1099, %v2277, -inf
    %2452 = vmax.xlane.f32.xlu0 %v2451
    %v2453 = vpop.xlane.xlu0 %2452
    %v2454 = vsel %vm1099, %v2355, -inf
    %2455 = vmax.xlane.f32.xlu0 %v2454
    %v2456 = vpop.xlane.xlu0 %2455
    %v2457 = vsel %vm1099, %v2433, -inf
    %2458 = vmax.xlane.f32.xlu0 %v2457
    %v2459 = vpop.xlane.xlu0 %2458
    %v2460 = vsub.f32 %v1887, %v2438
    %v2461 = vsub.f32 %v1965, %v2441
    %v2462 = vsub.f32 %v2043, %v2444
    %v2463 = vsub.f32 %v2121, %v2447
    %v2464 = vsub.f32 %v2199, %v2450
    %v2465 = vsub.f32 %v2277, %v2453
    %v2466 = vsub.f32 %v2355, %v2456
    %v2467 = vsub.f32 %v2433, %v2459
    %v2468 = vmul.f32 %v2460, 1.442695
    %v2469 = vpow.pop %v2468
    %v2470 = vmul.f32 %v2461, 1.442695
    %v2471 = vpow.pop %v2470
    %v2472 = vmul.f32 %v2462, 1.442695
    %v2473 = vpow.pop %v2472
    %v2474 = vmul.f32 %v2463, 1.442695
    %v2475 = vpow.pop %v2474
    %v2476 = vmul.f32 %v2464, 1.442695
    %v2477 = vpow.pop %v2476
    %v2478 = vmul.f32 %v2465, 1.442695
    %v2479 = vpow.pop %v2478
    %v2480 = vmul.f32 %v2466, 1.442695
    %v2481 = vpow.pop %v2480
    %v2482 = vmul.f32 %v2467, 1.442695
    %v2483 = vpow.pop %v2482
    %v2484 = vsel %vm1099, %v2469, 0.0
    %2485 = vadd.xlane.f32.xlu0 %v2484
    %v2486 = vpop.xlane.xlu0 %2485
    %v2487 = vsel %vm1099, %v2471, 0.0
    %2488 = vadd.xlane.f32.xlu0 %v2487
    %v2489 = vpop.xlane.xlu0 %2488
    %v2490 = vsel %vm1099, %v2473, 0.0
    %2491 = vadd.xlane.f32.xlu0 %v2490
    %v2492 = vpop.xlane.xlu0 %2491
    %v2493 = vsel %vm1099, %v2475, 0.0
    %2494 = vadd.xlane.f32.xlu0 %v2493
    %v2495 = vpop.xlane.xlu0 %2494
    %v2496 = vsel %vm1099, %v2477, 0.0
    %2497 = vadd.xlane.f32.xlu0 %v2496
    %v2498 = vpop.xlane.xlu0 %2497
    %v2499 = vsel %vm1099, %v2479, 0.0
    %2500 = vadd.xlane.f32.xlu0 %v2499
    %v2501 = vpop.xlane.xlu0 %2500
    %v2502 = vsel %vm1099, %v2481, 0.0
    %2503 = vadd.xlane.f32.xlu0 %v2502
    %v2504 = vpop.xlane.xlu0 %2503
    %v2505 = vsel %vm1099, %v2483, 0.0
    %2506 = vadd.xlane.f32.xlu0 %v2505
    %v2507 = vpop.xlane.xlu0 %2506
    %v2508 = vrcp.pop %v2486
    %v2509 = vrcp.pop %v2489
    %v2510 = vrcp.pop %v2492
    %v2511 = vrcp.pop %v2495
    %v2512 = vrcp.pop %v2498
    %v2513 = vrcp.pop %v2501
    %v2514 = vrcp.pop %v2504
    %v2515 = vrcp.pop %v2507
    %v2516 = vmul.f32 %v2469, %v2508
    %v2517 = vmul.f32 %v2471, %v2509
    %v2518 = vmul.f32 %v2473, %v2510
    %v2519 = vmul.f32 %v2475, %v2511
    %v2520 = vmul.f32 %v2477, %v2512
    %v2521 = vmul.f32 %v2479, %v2513
    %v2522 = vmul.f32 %v2481, %v2514
    %v2523 = vmul.f32 %v2483, %v2515
    %v2524 = vmul.f32 %v2516, %v317
    %v2525 = vmul.f32 %v2517, %v318
    %v2526 = vmul.f32 %v2518, %v319
    %v2527 = vmul.f32 %v2519, %v320
    %v2528 = vmul.f32 %v2520, %v321
    %v2529 = vmul.f32 %v2521, %v322
    %v2530 = vmul.f32 %v2522, %v323
    %v2531 = vmul.f32 %v2523, %v324
    %2532 = vrot.lane.b32.xlu0 %v444, 48
    %v2533 = vpop.permute.xlu0 %2532
    %v2536 = vsel %vm1099, %v2524, 0
    %2538 = vmatprep.subr.mxu0 0.0
    %2539 = vmatpush1.msra.mxu0 %v2533
    %2540 = vmatprep.subr.mxu0 0.0
    %2541 = vmatpush1.msra.mxu0 0.0
    %2542 = vmatprep.subr.mxu0 0.0
    %2543 = vmatpush1.msra.mxu0 0.0
    %2544 = vmatprep.subr.mxu0 0.0
    %2545 = vmatpush1.msra.mxu0 0.0
    %2546 = vmatprep.subr.mxu0 0.0
    %2547 = vmatpush1.msra.mxu0 0.0
    %2548 = vmatprep.subr.mxu0 0.0
    %2549 = vmatpush1.msra.mxu0 0.0
    %2550 = vmatprep.subr.mxu0 0.0
    %2551 = vmatpush1.msra.mxu0 0.0
    %2552 = vmatprep.subr.mxu0 0.0
    %2553 = vmatpush1.msra.mxu0 0.0
    %2554 = vmatprep.subr.mxu0 0.0
    %2555 = vmatpush1.msra.mxu0 0.0
    %2556 = vmatprep.subr.mxu0 0.0
    %2557 = vmatpush1.msra.mxu0 0.0
    %2558 = vmatprep.subr.mxu0 0.0
    %2559 = vmatpush1.msra.mxu0 0.0
    %2560 = vmatprep.subr.mxu0 0.0
    %2561 = vmatpush1.msra.mxu0 0.0
    %2562 = vmatprep.subr.mxu0 0.0
    %2563 = vmatpush1.msra.mxu0 0.0
    %2564 = vmatprep.subr.mxu0 0.0
    %2565 = vmatpush1.msra.mxu0 0.0
    %2566 = vmatprep.subr.mxu0 0.0
    %2567 = vmatpush1.msra.mxu0 0.0
    %2568 = vmatprep.subr.mxu0 0.0
    %2569 = vmatpush1.msra.mxu0 0.0
    %2570 = vmatprep.subr.mxu0 0.0
    %2571 = vmatpush1.msra.mxu0 0.0
    %2572 = vmatprep.subr.mxu0 0.0
    %2573 = vmatpush1.msra.mxu0 0.0
    %2574 = vmatprep.subr.mxu0 0.0
    %2575 = vmatpush1.msra.mxu0 0.0
    %2576 = vmatprep.subr.mxu0 0.0
    %2577 = vmatpush1.msra.mxu0 0.0
    %2578 = vmatprep.subr.mxu0 0.0
    %2579 = vmatpush1.msra.mxu0 0.0
    %2580 = vmatprep.subr.mxu0 0.0
    %2581 = vmatpush1.msra.mxu0 0.0
    %2582 = vmatprep.subr.mxu0 0.0
    %2583 = vmatpush1.msra.mxu0 0.0
    %2584 = vmatprep.subr.mxu0 0.0
    %2585 = vmatpush1.msra.mxu0 0.0
    %2586 = vmatprep.subr.mxu0 0.0
    %2587 = vmatpush1.msra.mxu0 0.0
    %2588 = vmatprep.subr.mxu0 0.0
    %2589 = vmatpush1.msra.mxu0 0.0
    %2590 = vmatprep.subr.mxu0 0.0
    %2591 = vmatpush1.msra.mxu0 0.0
    %2592 = vmatprep.subr.mxu0 0.0
    %2593 = vmatpush1.msra.mxu0 0.0
    %2594 = vmatprep.subr.mxu0 0.0
    %2595 = vmatpush1.msra.mxu0 0.0
    %2596 = vmatprep.subr.mxu0 0.0
    %2597 = vmatpush1.msra.mxu0 0.0
    %2598 = vmatprep.subr.mxu0 0.0
    %2599 = vmatpush1.msra.mxu0 0.0
    %2600 = vmatprep.subr.mxu0 0.0
    %2601 = vmatpush1.msra.mxu0 0.0
    %2602 = vmatprep.mubr.f32.mxu0 0.0
    %2603 = vmatmul.mubr.f32.gmra.mrb[0].mxu0 %v2536
    %v2604 = vpop.f32.mrb[0].mxu0
    %v2605 = vadd.f32 0.0, %v2604
    %v2606 = vpop.f32.mrb[0].mxu0
    %2607 = vdwg.mxu0
    %2608 = vrot.lane.b32.xlu0 %v449, 48
    %v2609 = vpop.permute.xlu0 %2608
    %v2612 = vsel %vm1099, %v2525, 0
    %2614 = vmatprep.subr.mxu0 0.0
    %2615 = vmatpush1.msra.mxu0 %v2609
    %2616 = vmatprep.subr.mxu0 0.0
    %2617 = vmatpush1.msra.mxu0 0.0
    %2618 = vmatprep.subr.mxu0 0.0
    %2619 = vmatpush1.msra.mxu0 0.0
    %2620 = vmatprep.subr.mxu0 0.0
    %2621 = vmatpush1.msra.mxu0 0.0
    %2622 = vmatprep.subr.mxu0 0.0
    %2623 = vmatpush1.msra.mxu0 0.0
    %2624 = vmatprep.subr.mxu0 0.0
    %2625 = vmatpush1.msra.mxu0 0.0
    %2626 = vmatprep.subr.mxu0 0.0
    %2627 = vmatpush1.msra.mxu0 0.0
    %2628 = vmatprep.subr.mxu0 0.0
    %2629 = vmatpush1.msra.mxu0 0.0
    %2630 = vmatprep.subr.mxu0 0.0
    %2631 = vmatpush1.msra.mxu0 0.0
    %2632 = vmatprep.subr.mxu0 0.0
    %2633 = vmatpush1.msra.mxu0 0.0
    %2634 = vmatprep.subr.mxu0 0.0
    %2635 = vmatpush1.msra.mxu0 0.0
    %2636 = vmatprep.subr.mxu0 0.0
    %2637 = vmatpush1.msra.mxu0 0.0
    %2638 = vmatprep.subr.mxu0 0.0
    %2639 = vmatpush1.msra.mxu0 0.0
    %2640 = vmatprep.subr.mxu0 0.0
    %2641 = vmatpush1.msra.mxu0 0.0
    %2642 = vmatprep.subr.mxu0 0.0
    %2643 = vmatpush1.msra.mxu0 0.0
    %2644 = vmatprep.subr.mxu0 0.0
    %2645 = vmatpush1.msra.mxu0 0.0
    %2646 = vmatprep.subr.mxu0 0.0
    %2647 = vmatpush1.msra.mxu0 0.0
    %2648 = vmatprep.subr.mxu0 0.0
    %2649 = vmatpush1.msra.mxu0 0.0
    %2650 = vmatprep.subr.mxu0 0.0
    %2651 = vmatpush1.msra.mxu0 0.0
    %2652 = vmatprep.subr.mxu0 0.0
    %2653 = vmatpush1.msra.mxu0 0.0
    %2654 = vmatprep.subr.mxu0 0.0
    %2655 = vmatpush1.msra.mxu0 0.0
    %2656 = vmatprep.subr.mxu0 0.0
    %2657 = vmatpush1.msra.mxu0 0.0
    %2658 = vmatprep.subr.mxu0 0.0
    %2659 = vmatpush1.msra.mxu0 0.0
    %2660 = vmatprep.subr.mxu0 0.0
    %2661 = vmatpush1.msra.mxu0 0.0
    %2662 = vmatprep.subr.mxu0 0.0
    %2663 = vmatpush1.msra.mxu0 0.0
    %2664 = vmatprep.subr.mxu0 0.0
    %2665 = vmatpush1.msra.mxu0 0.0
    %2666 = vmatprep.subr.mxu0 0.0
    %2667 = vmatpush1.msra.mxu0 0.0
    %2668 = vmatprep.subr.mxu0 0.0
    %2669 = vmatpush1.msra.mxu0 0.0
    %2670 = vmatprep.subr.mxu0 0.0
    %2671 = vmatpush1.msra.mxu0 0.0
    %2672 = vmatprep.subr.mxu0 0.0
    %2673 = vmatpush1.msra.mxu0 0.0
    %2674 = vmatprep.subr.mxu0 0.0
    %2675 = vmatpush1.msra.mxu0 0.0
    %2676 = vmatprep.subr.mxu0 0.0
    %2677 = vmatpush1.msra.mxu0 0.0
    %2678 = vmatprep.mubr.f32.mxu0 0.0
    %2679 = vmatmul.mubr.f32.gmra.mrb[0].mxu0 %v2612
    %v2680 = vpop.f32.mrb[0].mxu0
    %v2681 = vadd.f32 0.0, %v2680
    %v2682 = vpop.f32.mrb[0].mxu0
    %2683 = vdwg.mxu0
    %2684 = vrot.lane.b32.xlu0 %v454, 48
    %v2685 = vpop.permute.xlu0 %2684
    %v2688 = vsel %vm1099, %v2526, 0
    %2690 = vmatprep.subr.mxu0 0.0
    %2691 = vmatpush1.msra.mxu0 %v2685
    %2692 = vmatprep.subr.mxu0 0.0
    %2693 = vmatpush1.msra.mxu0 0.0
    %2694 = vmatprep.subr.mxu0 0.0
    %2695 = vmatpush1.msra.mxu0 0.0
    %2696 = vmatprep.subr.mxu0 0.0
    %2697 = vmatpush1.msra.mxu0 0.0
    %2698 = vmatprep.subr.mxu0 0.0
    %2699 = vmatpush1.msra.mxu0 0.0
    %2700 = vmatprep.subr.mxu0 0.0
    %2701 = vmatpush1.msra.mxu0 0.0
    %2702 = vmatprep.subr.mxu0 0.0
    %2703 = vmatpush1.msra.mxu0 0.0
    %2704 = vmatprep.subr.mxu0 0.0
    %2705 = vmatpush1.msra.mxu0 0.0
    %2706 = vmatprep.subr.mxu0 0.0
    %2707 = vmatpush1.msra.mxu0 0.0
    %2708 = vmatprep.subr.mxu0 0.0
    %2709 = vmatpush1.msra.mxu0 0.0
    %2710 = vmatprep.subr.mxu0 0.0
    %2711 = vmatpush1.msra.mxu0 0.0
    %2712 = vmatprep.subr.mxu0 0.0
    %2713 = vmatpush1.msra.mxu0 0.0
    %2714 = vmatprep.subr.mxu0 0.0
    %2715 = vmatpush1.msra.mxu0 0.0
    %2716 = vmatprep.subr.mxu0 0.0
    %2717 = vmatpush1.msra.mxu0 0.0
    %2718 = vmatprep.subr.mxu0 0.0
    %2719 = vmatpush1.msra.mxu0 0.0
    %2720 = vmatprep.subr.mxu0 0.0
    %2721 = vmatpush1.msra.mxu0 0.0
    %2722 = vmatprep.subr.mxu0 0.0
    %2723 = vmatpush1.msra.mxu0 0.0
    %2724 = vmatprep.subr.mxu0 0.0
    %2725 = vmatpush1.msra.mxu0 0.0
    %2726 = vmatprep.subr.mxu0 0.0
    %2727 = vmatpush1.msra.mxu0 0.0
    %2728 = vmatprep.subr.mxu0 0.0
    %2729 = vmatpush1.msra.mxu0 0.0
    %2730 = vmatprep.subr.mxu0 0.0
    %2731 = vmatpush1.msra.mxu0 0.0
    %2732 = vmatprep.subr.mxu0 0.0
    %2733 = vmatpush1.msra.mxu0 0.0
    %2734 = vmatprep.subr.mxu0 0.0
    %2735 = vmatpush1.msra.mxu0 0.0
    %2736 = vmatprep.subr.mxu0 0.0
    %2737 = vmatpush1.msra.mxu0 0.0
    %2738 = vmatprep.subr.mxu0 0.0
    %2739 = vmatpush1.msra.mxu0 0.0
    %2740 = vmatprep.subr.mxu0 0.0
    %2741 = vmatpush1.msra.mxu0 0.0
    %2742 = vmatprep.subr.mxu0 0.0
    %2743 = vmatpush1.msra.mxu0 0.0
    %2744 = vmatprep.subr.mxu0 0.0
    %2745 = vmatpush1.msra.mxu0 0.0
    %2746 = vmatprep.subr.mxu0 0.0
    %2747 = vmatpush1.msra.mxu0 0.0
    %2748 = vmatprep.subr.mxu0 0.0
    %2749 = vmatpush1.msra.mxu0 0.0
    %2750 = vmatprep.subr.mxu0 0.0
    %2751 = vmatpush1.msra.mxu0 0.0
    %2752 = vmatprep.subr.mxu0 0.0
    %2753 = vmatpush1.msra.mxu0 0.0
    %2754 = vmatprep.mubr.f32.mxu0 0.0
    %2755 = vmatmul.mubr.f32.gmra.mrb[0].mxu0 %v2688
    %v2756 = vpop.f32.mrb[0].mxu0
    %v2757 = vadd.f32 0.0, %v2756
    %v2758 = vpop.f32.mrb[0].mxu0
    %2759 = vdwg.mxu0
    %2760 = vrot.lane.b32.xlu0 %v459, 48
    %v2761 = vpop.permute.xlu0 %2760
    %v2764 = vsel %vm1099, %v2527, 0
    %2766 = vmatprep.subr.mxu0 0.0
    %2767 = vmatpush1.msra.mxu0 %v2761
    %2768 = vmatprep.subr.mxu0 0.0
    %2769 = vmatpush1.msra.mxu0 0.0
    %2770 = vmatprep.subr.mxu0 0.0
    %2771 = vmatpush1.msra.mxu0 0.0
    %2772 = vmatprep.subr.mxu0 0.0
    %2773 = vmatpush1.msra.mxu0 0.0
    %2774 = vmatprep.subr.mxu0 0.0
    %2775 = vmatpush1.msra.mxu0 0.0
    %2776 = vmatprep.subr.mxu0 0.0
    %2777 = vmatpush1.msra.mxu0 0.0
    %2778 = vmatprep.subr.mxu0 0.0
    %2779 = vmatpush1.msra.mxu0 0.0
    %2780 = vmatprep.subr.mxu0 0.0
    %2781 = vmatpush1.msra.mxu0 0.0
    %2782 = vmatprep.subr.mxu0 0.0
    %2783 = vmatpush1.msra.mxu0 0.0
    %2784 = vmatprep.subr.mxu0 0.0
    %2785 = vmatpush1.msra.mxu0 0.0
    %2786 = vmatprep.subr.mxu0 0.0
    %2787 = vmatpush1.msra.mxu0 0.0
    %2788 = vmatprep.subr.mxu0 0.0
    %2789 = vmatpush1.msra.mxu0 0.0
    %2790 = vmatprep.subr.mxu0 0.0
    %2791 = vmatpush1.msra.mxu0 0.0
    %2792 = vmatprep.subr.mxu0 0.0
    %2793 = vmatpush1.msra.mxu0 0.0
    %2794 = vmatprep.subr.mxu0 0.0
    %2795 = vmatpush1.msra.mxu0 0.0
    %2796 = vmatprep.subr.mxu0 0.0
    %2797 = vmatpush1.msra.mxu0 0.0
    %2798 = vmatprep.subr.mxu0 0.0
    %2799 = vmatpush1.msra.mxu0 0.0
    %2800 = vmatprep.subr.mxu0 0.0
    %2801 = vmatpush1.msra.mxu0 0.0
    %2802 = vmatprep.subr.mxu0 0.0
    %2803 = vmatpush1.msra.mxu0 0.0
    %2804 = vmatprep.subr.mxu0 0.0
    %2805 = vmatpush1.msra.mxu0 0.0
    %2806 = vmatprep.subr.mxu0 0.0
    %2807 = vmatpush1.msra.mxu0 0.0
    %2808 = vmatprep.subr.mxu0 0.0
    %2809 = vmatpush1.msra.mxu0 0.0
    %2810 = vmatprep.subr.mxu0 0.0
    %2811 = vmatpush1.msra.mxu0 0.0
    %2812 = vmatprep.subr.mxu0 0.0
    %2813 = vmatpush1.msra.mxu0 0.0
    %2814 = vmatprep.subr.mxu0 0.0
    %2815 = vmatpush1.msra.mxu0 0.0
    %2816 = vmatprep.subr.mxu0 0.0
    %2817 = vmatpush1.msra.mxu0 0.0
    %2818 = vmatprep.subr.mxu0 0.0
    %2819 = vmatpush1.msra.mxu0 0.0
    %2820 = vmatprep.subr.mxu0 0.0
    %2821 = vmatpush1.msra.mxu0 0.0
    %2822 = vmatprep.subr.mxu0 0.0
    %2823 = vmatpush1.msra.mxu0 0.0
    %2824 = vmatprep.subr.mxu0 0.0
    %2825 = vmatpush1.msra.mxu0 0.0
    %2826 = vmatprep.subr.mxu0 0.0
    %2827 = vmatpush1.msra.mxu0 0.0
    %2828 = vmatprep.subr.mxu0 0.0
    %2829 = vmatpush1.msra.mxu0 0.0
    %2830 = vmatprep.mubr.f32.mxu0 0.0
    %2831 = vmatmul.mubr.f32.gmra.mrb[0].mxu0 %v2764
    %v2832 = vpop.f32.mrb[0].mxu0
    %v2833 = vadd.f32 0.0, %v2832
    %v2834 = vpop.f32.mrb[0].mxu0
    %2835 = vdwg.mxu0
    %2836 = vrot.lane.b32.xlu0 %v464, 48
    %v2837 = vpop.permute.xlu0 %2836
    %v2840 = vsel %vm1099, %v2528, 0
    %2842 = vmatprep.subr.mxu0 0.0
    %2843 = vmatpush1.msra.mxu0 %v2837
    %2844 = vmatprep.subr.mxu0 0.0
    %2845 = vmatpush1.msra.mxu0 0.0
    %2846 = vmatprep.subr.mxu0 0.0
    %2847 = vmatpush1.msra.mxu0 0.0
    %2848 = vmatprep.subr.mxu0 0.0
    %2849 = vmatpush1.msra.mxu0 0.0
    %2850 = vmatprep.subr.mxu0 0.0
    %2851 = vmatpush1.msra.mxu0 0.0
    %2852 = vmatprep.subr.mxu0 0.0
    %2853 = vmatpush1.msra.mxu0 0.0
    %2854 = vmatprep.subr.mxu0 0.0
    %2855 = vmatpush1.msra.mxu0 0.0
    %2856 = vmatprep.subr.mxu0 0.0
    %2857 = vmatpush1.msra.mxu0 0.0
    %2858 = vmatprep.subr.mxu0 0.0
    %2859 = vmatpush1.msra.mxu0 0.0
    %2860 = vmatprep.subr.mxu0 0.0
    %2861 = vmatpush1.msra.mxu0 0.0
    %2862 = vmatprep.subr.mxu0 0.0
    %2863 = vmatpush1.msra.mxu0 0.0
    %2864 = vmatprep.subr.mxu0 0.0
    %2865 = vmatpush1.msra.mxu0 0.0
    %2866 = vmatprep.subr.mxu0 0.0
    %2867 = vmatpush1.msra.mxu0 0.0
    %2868 = vmatprep.subr.mxu0 0.0
    %2869 = vmatpush1.msra.mxu0 0.0
    %2870 = vmatprep.subr.mxu0 0.0
    %2871 = vmatpush1.msra.mxu0 0.0
    %2872 = vmatprep.subr.mxu0 0.0
    %2873 = vmatpush1.msra.mxu0 0.0
    %2874 = vmatprep.subr.mxu0 0.0
    %2875 = vmatpush1.msra.mxu0 0.0
    %2876 = vmatprep.subr.mxu0 0.0
    %2877 = vmatpush1.msra.mxu0 0.0
    %2878 = vmatprep.subr.mxu0 0.0
    %2879 = vmatpush1.msra.mxu0 0.0
    %2880 = vmatprep.subr.mxu0 0.0
    %2881 = vmatpush1.msra.mxu0 0.0
    %2882 = vmatprep.subr.mxu0 0.0
    %2883 = vmatpush1.msra.mxu0 0.0
    %2884 = vmatprep.subr.mxu0 0.0
    %2885 = vmatpush1.msra.mxu0 0.0
    %2886 = vmatprep.subr.mxu0 0.0
    %2887 = vmatpush1.msra.mxu0 0.0
    %2888 = vmatprep.subr.mxu0 0.0
    %2889 = vmatpush1.msra.mxu0 0.0
    %2890 = vmatprep.subr.mxu0 0.0
    %2891 = vmatpush1.msra.mxu0 0.0
    %2892 = vmatprep.subr.mxu0 0.0
    %2893 = vmatpush1.msra.mxu0 0.0
    %2894 = vmatprep.subr.mxu0 0.0
    %2895 = vmatpush1.msra.mxu0 0.0
    %2896 = vmatprep.subr.mxu0 0.0
    %2897 = vmatpush1.msra.mxu0 0.0
    %2898 = vmatprep.subr.mxu0 0.0
    %2899 = vmatpush1.msra.mxu0 0.0
    %2900 = vmatprep.subr.mxu0 0.0
    %2901 = vmatpush1.msra.mxu0 0.0
    %2902 = vmatprep.subr.mxu0 0.0
    %2903 = vmatpush1.msra.mxu0 0.0
    %2904 = vmatprep.subr.mxu0 0.0
    %2905 = vmatpush1.msra.mxu0 0.0
    %2906 = vmatprep.mubr.f32.mxu0 0.0
    %2907 = vmatmul.mubr.f32.gmra.mrb[0].mxu0 %v2840
    %v2908 = vpop.f32.mrb[0].mxu0
    %v2909 = vadd.f32 0.0, %v2908
    %v2910 = vpop.f32.mrb[0].mxu0
    %2911 = vdwg.mxu0
    %2912 = vrot.lane.b32.xlu0 %v469, 48
    %v2913 = vpop.permute.xlu0 %2912
    %v2916 = vsel %vm1099, %v2529, 0
    %2918 = vmatprep.subr.mxu0 0.0
    %2919 = vmatpush1.msra.mxu0 %v2913
    %2920 = vmatprep.subr.mxu0 0.0
    %2921 = vmatpush1.msra.mxu0 0.0
    %2922 = vmatprep.subr.mxu0 0.0
    %2923 = vmatpush1.msra.mxu0 0.0
    %2924 = vmatprep.subr.mxu0 0.0
    %2925 = vmatpush1.msra.mxu0 0.0
    %2926 = vmatprep.subr.mxu0 0.0
    %2927 = vmatpush1.msra.mxu0 0.0
    %2928 = vmatprep.subr.mxu0 0.0
    %2929 = vmatpush1.msra.mxu0 0.0
    %2930 = vmatprep.subr.mxu0 0.0
    %2931 = vmatpush1.msra.mxu0 0.0
    %2932 = vmatprep.subr.mxu0 0.0
    %2933 = vmatpush1.msra.mxu0 0.0
    %2934 = vmatprep.subr.mxu0 0.0
    %2935 = vmatpush1.msra.mxu0 0.0
    %2936 = vmatprep.subr.mxu0 0.0
    %2937 = vmatpush1.msra.mxu0 0.0
    %2938 = vmatprep.subr.mxu0 0.0
    %2939 = vmatpush1.msra.mxu0 0.0
    %2940 = vmatprep.subr.mxu0 0.0
    %2941 = vmatpush1.msra.mxu0 0.0
    %2942 = vmatprep.subr.mxu0 0.0
    %2943 = vmatpush1.msra.mxu0 0.0
    %2944 = vmatprep.subr.mxu0 0.0
    %2945 = vmatpush1.msra.mxu0 0.0
    %2946 = vmatprep.subr.mxu0 0.0
    %2947 = vmatpush1.msra.mxu0 0.0
    %2948 = vmatprep.subr.mxu0 0.0
    %2949 = vmatpush1.msra.mxu0 0.0
    %2950 = vmatprep.subr.mxu0 0.0
    %2951 = vmatpush1.msra.mxu0 0.0
    %2952 = vmatprep.subr.mxu0 0.0
    %2953 = vmatpush1.msra.mxu0 0.0
    %2954 = vmatprep.subr.mxu0 0.0
    %2955 = vmatpush1.msra.mxu0 0.0
    %2956 = vmatprep.subr.mxu0 0.0
    %2957 = vmatpush1.msra.mxu0 0.0
    %2958 = vmatprep.subr.mxu0 0.0
    %2959 = vmatpush1.msra.mxu0 0.0
    %2960 = vmatprep.subr.mxu0 0.0
    %2961 = vmatpush1.msra.mxu0 0.0
    %2962 = vmatprep.subr.mxu0 0.0
    %2963 = vmatpush1.msra.mxu0 0.0
    %2964 = vmatprep.subr.mxu0 0.0
    %2965 = vmatpush1.msra.mxu0 0.0
    %2966 = vmatprep.subr.mxu0 0.0
    %2967 = vmatpush1.msra.mxu0 0.0
    %2968 = vmatprep.subr.mxu0 0.0
    %2969 = vmatpush1.msra.mxu0 0.0
    %2970 = vmatprep.subr.mxu0 0.0
    %2971 = vmatpush1.msra.mxu0 0.0
    %2972 = vmatprep.subr.mxu0 0.0
    %2973 = vmatpush1.msra.mxu0 0.0
    %2974 = vmatprep.subr.mxu0 0.0
    %2975 = vmatpush1.msra.mxu0 0.0
    %2976 = vmatprep.subr.mxu0 0.0
    %2977 = vmatpush1.msra.mxu0 0.0
    %2978 = vmatprep.subr.mxu0 0.0
    %2979 = vmatpush1.msra.mxu0 0.0
    %2980 = vmatprep.subr.mxu0 0.0
    %2981 = vmatpush1.msra.mxu0 0.0
    %2982 = vmatprep.mubr.f32.mxu0 0.0
    %2983 = vmatmul.mubr.f32.gmra.mrb[0].mxu0 %v2916
    %v2984 = vpop.f32.mrb[0].mxu0
    %v2985 = vadd.f32 0.0, %v2984
    %v2986 = vpop.f32.mrb[0].mxu0
    %2987 = vdwg.mxu0
    %2988 = vrot.lane.b32.xlu0 %v474, 48
    %v2989 = vpop.permute.xlu0 %2988
    %v2992 = vsel %vm1099, %v2530, 0
    %2994 = vmatprep.subr.mxu0 0.0
    %2995 = vmatpush1.msra.mxu0 %v2989
    %2996 = vmatprep.subr.mxu0 0.0
    %2997 = vmatpush1.msra.mxu0 0.0
    %2998 = vmatprep.subr.mxu0 0.0
    %2999 = vmatpush1.msra.mxu0 0.0
    %3000 = vmatprep.subr.mxu0 0.0
    %3001 = vmatpush1.msra.mxu0 0.0
    %3002 = vmatprep.subr.mxu0 0.0
    %3003 = vmatpush1.msra.mxu0 0.0
    %3004 = vmatprep.subr.mxu0 0.0
    %3005 = vmatpush1.msra.mxu0 0.0
    %3006 = vmatprep.subr.mxu0 0.0
    %3007 = vmatpush1.msra.mxu0 0.0
    %3008 = vmatprep.subr.mxu0 0.0
    %3009 = vmatpush1.msra.mxu0 0.0
    %3010 = vmatprep.subr.mxu0 0.0
    %3011 = vmatpush1.msra.mxu0 0.0
    %3012 = vmatprep.subr.mxu0 0.0
    %3013 = vmatpush1.msra.mxu0 0.0
    %3014 = vmatprep.subr.mxu0 0.0
    %3015 = vmatpush1.msra.mxu0 0.0
    %3016 = vmatprep.subr.mxu0 0.0
    %3017 = vmatpush1.msra.mxu0 0.0
    %3018 = vmatprep.subr.mxu0 0.0
    %3019 = vmatpush1.msra.mxu0 0.0
    %3020 = vmatprep.subr.mxu0 0.0
    %3021 = vmatpush1.msra.mxu0 0.0
    %3022 = vmatprep.subr.mxu0 0.0
    %3023 = vmatpush1.msra.mxu0 0.0
    %3024 = vmatprep.subr.mxu0 0.0
    %3025 = vmatpush1.msra.mxu0 0.0
    %3026 = vmatprep.subr.mxu0 0.0
    %3027 = vmatpush1.msra.mxu0 0.0
    %3028 = vmatprep.subr.mxu0 0.0
    %3029 = vmatpush1.msra.mxu0 0.0
    %3030 = vmatprep.subr.mxu0 0.0
    %3031 = vmatpush1.msra.mxu0 0.0
    %3032 = vmatprep.subr.mxu0 0.0
    %3033 = vmatpush1.msra.mxu0 0.0
    %3034 = vmatprep.subr.mxu0 0.0
    %3035 = vmatpush1.msra.mxu0 0.0
    %3036 = vmatprep.subr.mxu0 0.0
    %3037 = vmatpush1.msra.mxu0 0.0
    %3038 = vmatprep.subr.mxu0 0.0
    %3039 = vmatpush1.msra.mxu0 0.0
    %3040 = vmatprep.subr.mxu0 0.0
    %3041 = vmatpush1.msra.mxu0 0.0
    %3042 = vmatprep.subr.mxu0 0.0
    %3043 = vmatpush1.msra.mxu0 0.0
    %3044 = vmatprep.subr.mxu0 0.0
    %3045 = vmatpush1.msra.mxu0 0.0
    %3046 = vmatprep.subr.mxu0 0.0
    %3047 = vmatpush1.msra.mxu0 0.0
    %3048 = vmatprep.subr.mxu0 0.0
    %3049 = vmatpush1.msra.mxu0 0.0
    %3050 = vmatprep.subr.mxu0 0.0
    %3051 = vmatpush1.msra.mxu0 0.0
    %3052 = vmatprep.subr.mxu0 0.0
    %3053 = vmatpush1.msra.mxu0 0.0
    %3054 = vmatprep.subr.mxu0 0.0
    %3055 = vmatpush1.msra.mxu0 0.0
    %3056 = vmatprep.subr.mxu0 0.0
    %3057 = vmatpush1.msra.mxu0 0.0
    %3058 = vmatprep.mubr.f32.mxu0 0.0
    %3059 = vmatmul.mubr.f32.gmra.mrb[0].mxu0 %v2992
    %v3060 = vpop.f32.mrb[0].mxu0
    %v3061 = vadd.f32 0.0, %v3060
    %v3062 = vpop.f32.mrb[0].mxu0
    %3063 = vdwg.mxu0
    %3064 = vrot.lane.b32.xlu0 %v479, 48
    %v3065 = vpop.permute.xlu0 %3064
    %v3068 = vsel %vm1099, %v2531, 0
    %3070 = vmatprep.subr.mxu0 0.0
    %3071 = vmatpush1.msra.mxu0 %v3065
    %3072 = vmatprep.subr.mxu0 0.0
    %3073 = vmatpush1.msra.mxu0 0.0
    %3074 = vmatprep.subr.mxu0 0.0
    %3075 = vmatpush1.msra.mxu0 0.0
    %3076 = vmatprep.subr.mxu0 0.0
    %3077 = vmatpush1.msra.mxu0 0.0
    %3078 = vmatprep.subr.mxu0 0.0
    %3079 = vmatpush1.msra.mxu0 0.0
    %3080 = vmatprep.subr.mxu0 0.0
    %3081 = vmatpush1.msra.mxu0 0.0
    %3082 = vmatprep.subr.mxu0 0.0
    %3083 = vmatpush1.msra.mxu0 0.0
    %3084 = vmatprep.subr.mxu0 0.0
    %3085 = vmatpush1.msra.mxu0 0.0
    %3086 = vmatprep.subr.mxu0 0.0
    %3087 = vmatpush1.msra.mxu0 0.0
    %3088 = vmatprep.subr.mxu0 0.0
    %3089 = vmatpush1.msra.mxu0 0.0
    %3090 = vmatprep.subr.mxu0 0.0
    %3091 = vmatpush1.msra.mxu0 0.0
    %3092 = vmatprep.subr.mxu0 0.0
    %3093 = vmatpush1.msra.mxu0 0.0
    %3094 = vmatprep.subr.mxu0 0.0
    %3095 = vmatpush1.msra.mxu0 0.0
    %3096 = vmatprep.subr.mxu0 0.0
    %3097 = vmatpush1.msra.mxu0 0.0
    %3098 = vmatprep.subr.mxu0 0.0
    %3099 = vmatpush1.msra.mxu0 0.0
    %3100 = vmatprep.subr.mxu0 0.0
    %3101 = vmatpush1.msra.mxu0 0.0
    %3102 = vmatprep.subr.mxu0 0.0
    %3103 = vmatpush1.msra.mxu0 0.0
    %3104 = vmatprep.subr.mxu0 0.0
    %3105 = vmatpush1.msra.mxu0 0.0
    %3106 = vmatprep.subr.mxu0 0.0
    %3107 = vmatpush1.msra.mxu0 0.0
    %3108 = vmatprep.subr.mxu0 0.0
    %3109 = vmatpush1.msra.mxu0 0.0
    %3110 = vmatprep.subr.mxu0 0.0
    %3111 = vmatpush1.msra.mxu0 0.0
    %3112 = vmatprep.subr.mxu0 0.0
    %3113 = vmatpush1.msra.mxu0 0.0
    %3114 = vmatprep.subr.mxu0 0.0
    %3115 = vmatpush1.msra.mxu0 0.0
    %3116 = vmatprep.subr.mxu0 0.0
    %3117 = vmatpush1.msra.mxu0 0.0
    %3118 = vmatprep.subr.mxu0 0.0
    %3119 = vmatpush1.msra.mxu0 0.0
    %3120 = vmatprep.subr.mxu0 0.0
    %3121 = vmatpush1.msra.mxu0 0.0
    %3122 = vmatprep.subr.mxu0 0.0
    %3123 = vmatpush1.msra.mxu0 0.0
    %3124 = vmatprep.subr.mxu0 0.0
    %3125 = vmatpush1.msra.mxu0 0.0
    %3126 = vmatprep.subr.mxu0 0.0
    %3127 = vmatpush1.msra.mxu0 0.0
    %3128 = vmatprep.subr.mxu0 0.0
    %3129 = vmatpush1.msra.mxu0 0.0
    %3130 = vmatprep.subr.mxu0 0.0
    %3131 = vmatpush1.msra.mxu0 0.0
    %3132 = vmatprep.subr.mxu0 0.0
    %3133 = vmatpush1.msra.mxu0 0.0
    %3134 = vmatprep.mubr.f32.mxu0 0.0
    %3135 = vmatmul.mubr.f32.gmra.mrb[0].mxu0 %v3068
    %v3136 = vpop.f32.mrb[0].mxu0
    %v3137 = vadd.f32 0.0, %v3136
    %v3138 = vpop.f32.mrb[0].mxu0
    %3139 = vdwg.mxu0
    %3148 = vrot.lane.b32.xlu0 %v2605, 16
    %v3149 = vpop.permute.xlu0 %3148
    %3150 = vrot.lane.b32.xlu0 %v2681, 16
    %v3151 = vpop.permute.xlu0 %3150
    %3152 = vrot.lane.b32.xlu0 %v2757, 16
    %v3153 = vpop.permute.xlu0 %3152
    %3154 = vrot.lane.b32.xlu0 %v2833, 16
    %v3155 = vpop.permute.xlu0 %3154
    %3156 = vrot.lane.b32.xlu0 %v2909, 16
    %v3157 = vpop.permute.xlu0 %3156
    %3158 = vrot.lane.b32.xlu0 %v2985, 16
    %v3159 = vpop.permute.xlu0 %3158
    %3160 = vrot.lane.b32.xlu0 %v3061, 16
    %v3161 = vpop.permute.xlu0 %3160
    %3162 = vrot.lane.b32.xlu0 %v3137, 16
    %v3163 = vpop.permute.xlu0 %3162
    %vm3172 = vcmask 261248
    %3173 = vst.msk [vmem:[#allocation6] sm:$0xff] %vm3172, %v3149
    %3174 = vst.msk [vmem:[#allocation6 + $0x8] sm:$0xff] %vm3172, %v3151
    %3175 = vst.msk [vmem:[#allocation6 + $0x10] sm:$0xff] %vm3172, %v3153
    %3176 = vst.msk [vmem:[#allocation6 + $0x18] sm:$0xff] %vm3172, %v3155
    %3177 = vst.msk [vmem:[#allocation6 + $0x20] sm:$0xff] %vm3172, %v3157
    %3178 = vst.msk [vmem:[#allocation6 + $0x28] sm:$0xff] %vm3172, %v3159
    %3179 = vst.msk [vmem:[#allocation6 + $0x30] sm:$0xff] %vm3172, %v3161
    %3180 = vst.msk [vmem:[#allocation6 + $0x38] sm:$0xff] %vm3172, %v3163
    %v3181 = vld [vmem:[#allocation6] sm:$0xff]
    %v3182 = vld [vmem:[#allocation6 + $0x8] sm:$0xff]
    %v3183 = vld [vmem:[#allocation6 + $0x10] sm:$0xff]
    %v3184 = vld [vmem:[#allocation6 + $0x18] sm:$0xff]
    %v3185 = vld [vmem:[#allocation6 + $0x20] sm:$0xff]
    %v3186 = vld [vmem:[#allocation6 + $0x28] sm:$0xff]
    %v3187 = vld [vmem:[#allocation6 + $0x30] sm:$0xff]
    %v3188 = vld [vmem:[#allocation6 + $0x38] sm:$0xff]
    %v3189 = vld [vmem:[#allocation3] sm:$0xff]
    %v3190 = vld [vmem:[#allocation3 + $0x8] sm:$0xff]
    %v3191 = vld [vmem:[#allocation3 + $0x10] sm:$0xff]
    %v3192 = vld [vmem:[#allocation3 + $0x18] sm:$0xff]
    %v3193 = vld [vmem:[%s3] sm:$0x1]
    %v3195 = vlaneseq
    %v3196 = vshrl.u32 %v3195, 7
    %v3197 = vsub.s32 0, %v3196
    %v3198 = vrot.slane %v3193, %v3197
    %v3201 = vsel %vm352, %v3181, 0
    %v3204 = vsel %vm352, %v3182, 0
    %v3207 = vsel %vm352, %v3183, 0
    %v3210 = vsel %vm352, %v3184, 0
    %v3213 = vsel %vm352, %v3185, 0
    %v3216 = vsel %vm352, %v3186, 0
    %v3219 = vsel %vm352, %v3187, 0
    %v3222 = vsel %vm352, %v3188, 0
    %3224 = vmatprep.subr.mxu0 0.0
    %3225 = vmatpush1.msra.mxu0 %v3189
    %3226 = vmatprep.subr.mxu0 0.0
    %3227 = vmatpush1.msra.mxu0 %v3190
    %3228 = vmatprep.subr.mxu0 0.0
    %3229 = vmatpush1.msra.mxu0 %v3191
    %3230 = vmatprep.subr.mxu0 0.0
    %3231 = vmatpush1.msra.mxu0 %v3192
    %3232 = vmatprep.subr.mxu0 0.0
    %3233 = vmatpush1.msra.mxu0 0.0
    %3234 = vmatprep.subr.mxu0 0.0
    %3235 = vmatpush1.msra.mxu0 0.0
    %3236 = vmatprep.subr.mxu0 0.0
    %3237 = vmatpush1.msra.mxu0 0.0
    %3238 = vmatprep.subr.mxu0 0.0
    %3239 = vmatpush1.msra.mxu0 0.0
    %3240 = vmatprep.subr.mxu0 0.0
    %3241 = vmatpush1.msra.mxu0 0.0
    %3242 = vmatprep.subr.mxu0 0.0
    %3243 = vmatpush1.msra.mxu0 0.0
    %3244 = vmatprep.subr.mxu0 0.0
    %3245 = vmatpush1.msra.mxu0 0.0
    %3246 = vmatprep.subr.mxu0 0.0
    %3247 = vmatpush1.msra.mxu0 0.0
    %3248 = vmatprep.subr.mxu0 0.0
    %3249 = vmatpush1.msra.mxu0 0.0
    %3250 = vmatprep.subr.mxu0 0.0
    %3251 = vmatpush1.msra.mxu0 0.0
    %3252 = vmatprep.subr.mxu0 0.0
    %3253 = vmatpush1.msra.mxu0 0.0
    %3254 = vmatprep.subr.mxu0 0.0
    %3255 = vmatpush1.msra.mxu0 0.0
    %3256 = vmatprep.subr.mxu0 0.0
    %3257 = vmatpush1.msra.mxu0 0.0
    %3258 = vmatprep.subr.mxu0 0.0
    %3259 = vmatpush1.msra.mxu0 0.0
    %3260 = vmatprep.subr.mxu0 0.0
    %3261 = vmatpush1.msra.mxu0 0.0
    %3262 = vmatprep.subr.mxu0 0.0
    %3263 = vmatpush1.msra.mxu0 0.0
    %3264 = vmatprep.subr.mxu0 0.0
    %3265 = vmatpush1.msra.mxu0 0.0
    %3266 = vmatprep.subr.mxu0 0.0
    %3267 = vmatpush1.msra.mxu0 0.0
    %3268 = vmatprep.subr.mxu0 0.0
    %3269 = vmatpush1.msra.mxu0 0.0
    %3270 = vmatprep.subr.mxu0 0.0
    %3271 = vmatpush1.msra.mxu0 0.0
    %3272 = vmatprep.subr.mxu0 0.0
    %3273 = vmatpush1.msra.mxu0 0.0
    %3274 = vmatprep.subr.mxu0 0.0
    %3275 = vmatpush1.msra.mxu0 0.0
    %3276 = vmatprep.subr.mxu0 0.0
    %3277 = vmatpush1.msra.mxu0 0.0
    %3278 = vmatprep.subr.mxu0 0.0
    %3279 = vmatpush1.msra.mxu0 0.0
    %3280 = vmatprep.subr.mxu0 0.0
    %3281 = vmatpush1.msra.mxu0 0.0
    %3282 = vmatprep.subr.mxu0 0.0
    %3283 = vmatpush1.msra.mxu0 0.0
    %3284 = vmatprep.subr.mxu0 0.0
    %3285 = vmatpush1.msra.mxu0 0.0
    %3286 = vmatprep.subr.mxu0 0.0
    %3287 = vmatpush1.msra.mxu0 0.0
    %3288 = vmatprep.mubr.f32.mxu0 0.0
    %3289 = vmatmul.mubr.f32.gmra.mrb[0].mxu0 %v3201
    %v3290 = vpop.f32.mrb[0].mxu0
    %v3291 = vadd.f32 %v3198, %v3290
    %v3292 = vpop.f32.mrb[0].mxu0
    %3293 = vmatprep.mubr.f32.mxu0 0.0
    %3294 = vmatmul.mubr.f32.gmra.mrb[0].mxu0 %v3204
    %v3295 = vpop.f32.mrb[0].mxu0
    %v3296 = vadd.f32 %v3198, %v3295
    %v3297 = vpop.f32.mrb[0].mxu0
    %3298 = vmatprep.mubr.f32.mxu0 0.0
    %3299 = vmatmul.mubr.f32.gmra.mrb[0].mxu0 %v3207
    %v3300 = vpop.f32.mrb[0].mxu0
    %v3301 = vadd.f32 %v3198, %v3300
    %v3302 = vpop.f32.mrb[0].mxu0
    %3303 = vmatprep.mubr.f32.mxu0 0.0
    %3304 = vmatmul.mubr.f32.gmra.mrb[0].mxu0 %v3210
    %v3305 = vpop.f32.mrb[0].mxu0
    %v3306 = vadd.f32 %v3198, %v3305
    %v3307 = vpop.f32.mrb[0].mxu0
    %3308 = vmatprep.mubr.f32.mxu0 0.0
    %3309 = vmatmul.mubr.f32.gmra.mrb[0].mxu0 %v3213
    %v3310 = vpop.f32.mrb[0].mxu0
    %v3311 = vadd.f32 %v3198, %v3310
    %v3312 = vpop.f32.mrb[0].mxu0
    %3313 = vmatprep.mubr.f32.mxu0 0.0
    %3314 = vmatmul.mubr.f32.gmra.mrb[0].mxu0 %v3216
    %v3315 = vpop.f32.mrb[0].mxu0
    %v3316 = vadd.f32 %v3198, %v3315
    %v3317 = vpop.f32.mrb[0].mxu0
    %3318 = vmatprep.mubr.f32.mxu0 0.0
    %3319 = vmatmul.mubr.f32.gmra.mrb[0].mxu0 %v3219
    %v3320 = vpop.f32.mrb[0].mxu0
    %v3321 = vadd.f32 %v3198, %v3320
    %v3322 = vpop.f32.mrb[0].mxu0
    %3323 = vmatprep.mubr.f32.mxu0 0.0
    %3324 = vmatmul.mubr.f32.gmra.mrb[0].mxu0 %v3222
    %v3325 = vpop.f32.mrb[0].mxu0
    %v3326 = vadd.f32 %v3198, %v3325
    %v3327 = vpop.f32.mrb[0].mxu0
    %3328 = vdwg.mxu0
    %v3329 = vadd.f32 %v197, %v3291
    %v3330 = vadd.f32 %v198, %v3296
    %v3331 = vadd.f32 %v199, %v3301
    %v3332 = vadd.f32 %v200, %v3306
    %v3333 = vadd.f32 %v201, %v3311
    %v3334 = vadd.f32 %v202, %v3316
    %v3335 = vadd.f32 %v203, %v3321
    %v3336 = vadd.f32 %v204, %v3326
    %v3337 = vld [vmem:[%s4] sm:$0x1]
    %v3338 = vld [vmem:[%s5] sm:$0x1]
    %v3339 = vsel %vm352, %v3329, 0.0
    %3340 = vadd.xlane.f32.xlu0 %v3339
    %v3341 = vpop.xlane.xlu0 %3340
    %v3342 = vsel %vm352, %v3330, 0.0
    %3343 = vadd.xlane.f32.xlu0 %v3342
    %v3344 = vpop.xlane.xlu0 %3343
    %v3345 = vsel %vm352, %v3331, 0.0
    %3346 = vadd.xlane.f32.xlu0 %v3345
    %v3347 = vpop.xlane.xlu0 %3346
    %v3348 = vsel %vm352, %v3332, 0.0
    %3349 = vadd.xlane.f32.xlu0 %v3348
    %v3350 = vpop.xlane.xlu0 %3349
    %v3351 = vsel %vm352, %v3333, 0.0
    %3352 = vadd.xlane.f32.xlu0 %v3351
    %v3353 = vpop.xlane.xlu0 %3352
    %v3354 = vsel %vm352, %v3334, 0.0
    %3355 = vadd.xlane.f32.xlu0 %v3354
    %v3356 = vpop.xlane.xlu0 %3355
    %v3357 = vsel %vm352, %v3335, 0.0
    %3358 = vadd.xlane.f32.xlu0 %v3357
    %v3359 = vpop.xlane.xlu0 %3358
    %v3360 = vsel %vm352, %v3336, 0.0
    %3361 = vadd.xlane.f32.xlu0 %v3360
    %v3362 = vpop.xlane.xlu0 %3361
    %v3363 = vrcp.pop 32.0
    %v3364 = vmul.f32 %v3341, %v3363
    %v3365 = vmul.f32 %v3344, %v3363
    %v3366 = vmul.f32 %v3347, %v3363
    %v3367 = vmul.f32 %v3350, %v3363
    %v3368 = vmul.f32 %v3353, %v3363
    %v3369 = vmul.f32 %v3356, %v3363
    %v3370 = vmul.f32 %v3359, %v3363
    %v3371 = vmul.f32 %v3362, %v3363
    %v3372 = vsub.f32 %v3329, %v3364
    %v3373 = vsub.f32 %v3330, %v3365
    %v3374 = vsub.f32 %v3331, %v3366
    %v3375 = vsub.f32 %v3332, %v3367
    %v3376 = vsub.f32 %v3333, %v3368
    %v3377 = vsub.f32 %v3334, %v3369
    %v3378 = vsub.f32 %v3335, %v3370
    %v3379 = vsub.f32 %v3336, %v3371
    %v3380 = vmul.f32 %v3372, %v3372
    %v3381 = vmul.f32 %v3373, %v3373
    %v3382 = vmul.f32 %v3374, %v3374
    %v3383 = vmul.f32 %v3375, %v3375
    %v3384 = vmul.f32 %v3376, %v3376
    %v3385 = vmul.f32 %v3377, %v3377
    %v3386 = vmul.f32 %v3378, %v3378
    %v3387 = vmul.f32 %v3379, %v3379
    %v3388 = vsel %vm352, %v3380, 0.0
    %3389 = vadd.xlane.f32.xlu0 %v3388
    %v3390 = vpop.xlane.xlu0 %3389
    %v3391 = vsel %vm352, %v3381, 0.0
    %3392 = vadd.xlane.f32.xlu0 %v3391
    %v3393 = vpop.xlane.xlu0 %3392
    %v3394 = vsel %vm352, %v3382, 0.0
    %3395 = vadd.xlane.f32.xlu0 %v3394
    %v3396 = vpop.xlane.xlu0 %3395
    %v3397 = vsel %vm352, %v3383, 0.0
    %3398 = vadd.xlane.f32.xlu0 %v3397
    %v3399 = vpop.xlane.xlu0 %3398
    %v3400 = vsel %vm352, %v3384, 0.0
    %3401 = vadd.xlane.f32.xlu0 %v3400
    %v3402 = vpop.xlane.xlu0 %3401
    %v3403 = vsel %vm352, %v3385, 0.0
    %3404 = vadd.xlane.f32.xlu0 %v3403
    %v3405 = vpop.xlane.xlu0 %3404
    %v3406 = vsel %vm352, %v3386, 0.0
    %3407 = vadd.xlane.f32.xlu0 %v3406
    %v3408 = vpop.xlane.xlu0 %3407
    %v3409 = vsel %vm352, %v3387, 0.0
    %3410 = vadd.xlane.f32.xlu0 %v3409
    %v3411 = vpop.xlane.xlu0 %3410
    %v3412 = vmul.f32 %v3390, %v3363
    %v3413 = vmul.f32 %v3393, %v3363
    %v3414 = vmul.f32 %v3396, %v3363
    %v3415 = vmul.f32 %v3399, %v3363
    %v3416 = vmul.f32 %v3402, %v3363
    %v3417 = vmul.f32 %v3405, %v3363
    %v3418 = vmul.f32 %v3408, %v3363
    %v3419 = vmul.f32 %v3411, %v3363
    %v3420 = vadd.f32 %v3412, 1e-07
    %v3421 = vadd.f32 %v3413, 1e-07
    %v3422 = vadd.f32 %v3414, 1e-07
    %v3423 = vadd.f32 %v3415, 1e-07
    %v3424 = vadd.f32 %v3416, 1e-07
    %v3425 = vadd.f32 %v3417, 1e-07
    %v3426 = vadd.f32 %v3418, 1e-07
    %v3427 = vadd.f32 %v3419, 1e-07
    %v3428 = vrsqrt.pop %v3420
    %v3429 = vrsqrt.pop %v3421
    %v3430 = vrsqrt.pop %v3422
    %v3431 = vrsqrt.pop %v3423
    %v3432 = vrsqrt.pop %v3424
    %v3433 = vrsqrt.pop %v3425
    %v3434 = vrsqrt.pop %v3426
    %v3435 = vrsqrt.pop %v3427
    %v3436 = vmul.f32 %v3372, %v3428
    %v3437 = vmul.f32 %v3373, %v3429
    %v3438 = vmul.f32 %v3374, %v3430
    %v3439 = vmul.f32 %v3375, %v3431
    %v3440 = vmul.f32 %v3376, %v3432
    %v3441 = vmul.f32 %v3377, %v3433
    %v3442 = vmul.f32 %v3378, %v3434
    %v3443 = vmul.f32 %v3379, %v3435
    %v3445 = vlaneseq
    %v3446 = vshrl.u32 %v3445, 7
    %v3447 = vsub.s32 0, %v3446
    %v3448 = vrot.slane %v3337, %v3447
    %v3450 = vmul.f32 %v3436, %v3448
    %v3451 = vmul.f32 %v3437, %v3448
    %v3452 = vmul.f32 %v3438, %v3448
    %v3453 = vmul.f32 %v3439, %v3448
    %v3454 = vmul.f32 %v3440, %v3448
    %v3455 = vmul.f32 %v3441, %v3448
    %v3456 = vmul.f32 %v3442, %v3448
    %v3457 = vmul.f32 %v3443, %v3448
    %v3459 = vlaneseq
    %v3460 = vshrl.u32 %v3459, 7
    %v3461 = vsub.s32 0, %v3460
    %v3462 = vrot.slane %v3338, %v3461
    %v3464 = vadd.f32 %v3450, %v3462
    %v3465 = vadd.f32 %v3451, %v3462
    %v3466 = vadd.f32 %v3452, %v3462
    %v3467 = vadd.f32 %v3453, %v3462
    %v3468 = vadd.f32 %v3454, %v3462
    %v3469 = vadd.f32 %v3455, %v3462
    %v3470 = vadd.f32 %v3456, %v3462
    %v3471 = vadd.f32 %v3457, %v3462
    %v3472 = vld [vmem:[#allocation4] sm:$0xff]
    %v3473 = vld [vmem:[#allocation4 + $0x8] sm:$0xff]
    %v3474 = vld [vmem:[#allocation4 + $0x10] sm:$0xff]
    %v3475 = vld [vmem:[#allocation4 + $0x18] sm:$0xff]
    %v3476 = vld [vmem:[%s6] sm:$0x1]
    %v3478 = vlaneseq
    %v3479 = vshrl.u32 %v3478, 7
    %v3480 = vsub.s32 0, %v3479
    %v3481 = vrot.slane %v3476, %v3480
    %v3484 = vsel %vm352, %v3464, 0
    %v3487 = vsel %vm352, %v3465, 0
    %v3490 = vsel %vm352, %v3466, 0
    %v3493 = vsel %vm352, %v3467, 0
    %v3496 = vsel %vm352, %v3468, 0
    %v3499 = vsel %vm352, %v3469, 0
    %v3502 = vsel %vm352, %v3470, 0
    %v3505 = vsel %vm352, %v3471, 0
    %3507 = vmatprep.subr.mxu0 0.0
    %3508 = vmatpush1.msra.mxu0 %v3472
    %3509 = vmatprep.subr.mxu0 0.0
    %3510 = vmatpush1.msra.mxu0 %v3473
    %3511 = vmatprep.subr.mxu0 0.0
    %3512 = vmatpush1.msra.mxu0 %v3474
    %3513 = vmatprep.subr.mxu0 0.0
    %3514 = vmatpush1.msra.mxu0 %v3475
    %3515 = vmatprep.subr.mxu0 0.0
    %3516 = vmatpush1.msra.mxu0 0.0
    %3517 = vmatprep.subr.mxu0 0.0
    %3518 = vmatpush1.msra.mxu0 0.0
    %3519 = vmatprep.subr.mxu0 0.0
    %3520 = vmatpush1.msra.mxu0 0.0
    %3521 = vmatprep.subr.mxu0 0.0
    %3522 = vmatpush1.msra.mxu0 0.0
    %3523 = vmatprep.subr.mxu0 0.0
    %3524 = vmatpush1.msra.mxu0 0.0
    %3525 = vmatprep.subr.mxu0 0.0
    %3526 = vmatpush1.msra.mxu0 0.0
    %3527 = vmatprep.subr.mxu0 0.0
    %3528 = vmatpush1.msra.mxu0 0.0
    %3529 = vmatprep.subr.mxu0 0.0
    %3530 = vmatpush1.msra.mxu0 0.0
    %3531 = vmatprep.subr.mxu0 0.0
    %3532 = vmatpush1.msra.mxu0 0.0
    %3533 = vmatprep.subr.mxu0 0.0
    %3534 = vmatpush1.msra.mxu0 0.0
    %3535 = vmatprep.subr.mxu0 0.0
    %3536 = vmatpush1.msra.mxu0 0.0
    %3537 = vmatprep.subr.mxu0 0.0
    %3538 = vmatpush1.msra.mxu0 0.0
    %3539 = vmatprep.subr.mxu0 0.0
    %3540 = vmatpush1.msra.mxu0 0.0
    %3541 = vmatprep.subr.mxu0 0.0
    %3542 = vmatpush1.msra.mxu0 0.0
    %3543 = vmatprep.subr.mxu0 0.0
    %3544 = vmatpush1.msra.mxu0 0.0
    %3545 = vmatprep.subr.mxu0 0.0
    %3546 = vmatpush1.msra.mxu0 0.0
    %3547 = vmatprep.subr.mxu0 0.0
    %3548 = vmatpush1.msra.mxu0 0.0
    %3549 = vmatprep.subr.mxu0 0.0
    %3550 = vmatpush1.msra.mxu0 0.0
    %3551 = vmatprep.subr.mxu0 0.0
    %3552 = vmatpush1.msra.mxu0 0.0
    %3553 = vmatprep.subr.mxu0 0.0
    %3554 = vmatpush1.msra.mxu0 0.0
    %3555 = vmatprep.subr.mxu0 0.0
    %3556 = vmatpush1.msra.mxu0 0.0
    %3557 = vmatprep.subr.mxu0 0.0
    %3558 = vmatpush1.msra.mxu0 0.0
    %3559 = vmatprep.subr.mxu0 0.0
    %3560 = vmatpush1.msra.mxu0 0.0
    %3561 = vmatprep.subr.mxu0 0.0
    %3562 = vmatpush1.msra.mxu0 0.0
    %3563 = vmatprep.subr.mxu0 0.0
    %3564 = vmatpush1.msra.mxu0 0.0
    %3565 = vmatprep.subr.mxu0 0.0
    %3566 = vmatpush1.msra.mxu0 0.0
    %3567 = vmatprep.subr.mxu0 0.0
    %3568 = vmatpush1.msra.mxu0 0.0
    %3569 = vmatprep.subr.mxu0 0.0
    %3570 = vmatpush1.msra.mxu0 0.0
    %3571 = vmatprep.mubr.f32.mxu0 0.0
    %3572 = vmatmul.mubr.f32.gmra.mrb[0].mxu0 %v3484
    %v3573 = vpop.f32.mrb[0].mxu0
    %v3574 = vadd.f32 %v3481, %v3573
    %v3575 = vpop.f32.mrb[0].mxu0
    %3576 = vmatprep.mubr.f32.mxu0 0.0
    %3577 = vmatmul.mubr.f32.gmra.mrb[0].mxu0 %v3487
    %v3578 = vpop.f32.mrb[0].mxu0
    %v3579 = vadd.f32 %v3481, %v3578
    %v3580 = vpop.f32.mrb[0].mxu0
    %3581 = vmatprep.mubr.f32.mxu0 0.0
    %3582 = vmatmul.mubr.f32.gmra.mrb[0].mxu0 %v3490
    %v3583 = vpop.f32.mrb[0].mxu0
    %v3584 = vadd.f32 %v3481, %v3583
    %v3585 = vpop.f32.mrb[0].mxu0
    %3586 = vmatprep.mubr.f32.mxu0 0.0
    %3587 = vmatmul.mubr.f32.gmra.mrb[0].mxu0 %v3493
    %v3588 = vpop.f32.mrb[0].mxu0
    %v3589 = vadd.f32 %v3481, %v3588
    %v3590 = vpop.f32.mrb[0].mxu0
    %3591 = vmatprep.mubr.f32.mxu0 0.0
    %3592 = vmatmul.mubr.f32.gmra.mrb[0].mxu0 %v3496
    %v3593 = vpop.f32.mrb[0].mxu0
    %v3594 = vadd.f32 %v3481, %v3593
    %v3595 = vpop.f32.mrb[0].mxu0
    %3596 = vmatprep.mubr.f32.mxu0 0.0
    %3597 = vmatmul.mubr.f32.gmra.mrb[0].mxu0 %v3499
    %v3598 = vpop.f32.mrb[0].mxu0
    %v3599 = vadd.f32 %v3481, %v3598
    %v3600 = vpop.f32.mrb[0].mxu0
    %3601 = vmatprep.mubr.f32.mxu0 0.0
    %3602 = vmatmul.mubr.f32.gmra.mrb[0].mxu0 %v3502
    %v3603 = vpop.f32.mrb[0].mxu0
    %v3604 = vadd.f32 %v3481, %v3603
    %v3605 = vpop.f32.mrb[0].mxu0
    %3606 = vmatprep.mubr.f32.mxu0 0.0
    %3607 = vmatmul.mubr.f32.gmra.mrb[0].mxu0 %v3505
    %v3608 = vpop.f32.mrb[0].mxu0
    %v3609 = vadd.f32 %v3481, %v3608
    %v3610 = vpop.f32.mrb[0].mxu0
    %3611 = vdwg.mxu0
    %v3612 = vmul.f32 %v3574, 0.5
    %v3613 = vmul.f32 %v3579, 0.5
    %v3614 = vmul.f32 %v3584, 0.5
    %v3615 = vmul.f32 %v3589, 0.5
    %v3616 = vmul.f32 %v3594, 0.5
    %v3617 = vmul.f32 %v3599, 0.5
    %v3618 = vmul.f32 %v3604, 0.5
    %v3619 = vmul.f32 %v3609, 0.5
    %v3620 = vmul.f32 %v3574, 0.044715
    %v3621 = vmul.f32 %v3579, 0.044715
    %v3622 = vmul.f32 %v3584, 0.044715
    %v3623 = vmul.f32 %v3589, 0.044715
    %v3624 = vmul.f32 %v3594, 0.044715
    %v3625 = vmul.f32 %v3599, 0.044715
    %v3626 = vmul.f32 %v3604, 0.044715
    %v3627 = vmul.f32 %v3609, 0.044715
    %v3628 = vmul.f32 %v3620, %v3574
    %v3629 = vmul.f32 %v3621, %v3579
    %v3630 = vmul.f32 %v3622, %v3584
    %v3631 = vmul.f32 %v3623, %v3589
    %v3632 = vmul.f32 %v3624, %v3594
    %v3633 = vmul.f32 %v3625, %v3599
    %v3634 = vmul.f32 %v3626, %v3604
    %v3635 = vmul.f32 %v3627, %v3609
    %v3636 = vmul.f32 %v3628, %v3574
    %v3637 = vmul.f32 %v3629, %v3579
    %v3638 = vmul.f32 %v3630, %v3584
    %v3639 = vmul.f32 %v3631, %v3589
    %v3640 = vmul.f32 %v3632, %v3594
    %v3641 = vmul.f32 %v3633, %v3599
    %v3642 = vmul.f32 %v3634, %v3604
    %v3643 = vmul.f32 %v3635, %v3609
    %v3644 = vadd.f32 %v3574, %v3636
    %v3645 = vadd.f32 %v3579, %v3637
    %v3646 = vadd.f32 %v3584, %v3638
    %v3647 = vadd.f32 %v3589, %v3639
    %v3648 = vadd.f32 %v3594, %v3640
    %v3649 = vadd.f32 %v3599, %v3641
    %v3650 = vadd.f32 %v3604, %v3642
    %v3651 = vadd.f32 %v3609, %v3643
    %v3652 = vmul.f32 %v3644, 0.7978846
    %v3653 = vmul.f32 %v3645, 0.7978846
    %v3654 = vmul.f32 %v3646, 0.7978846
    %v3655 = vmul.f32 %v3647, 0.7978846
    %v3656 = vmul.f32 %v3648, 0.7978846
    %v3657 = vmul.f32 %v3649, 0.7978846
    %v3658 = vmul.f32 %v3650, 0.7978846
    %v3659 = vmul.f32 %v3651, 0.7978846
    %v3660 = vtanh.pop %v3652
    %v3661 = vtanh.pop %v3653
    %v3662 = vtanh.pop %v3654
    %v3663 = vtanh.pop %v3655
    %v3664 = vtanh.pop %v3656
    %v3665 = vtanh.pop %v3657
    %v3666 = vtanh.pop %v3658
    %v3667 = vtanh.pop %v3659
    %v3668 = vadd.f32 %v3660, 1.0
    %v3669 = vadd.f32 %v3661, 1.0
    %v3670 = vadd.f32 %v3662, 1.0
    %v3671 = vadd.f32 %v3663, 1.0
    %v3672 = vadd.f32 %v3664, 1.0
    %v3673 = vadd.f32 %v3665, 1.0
    %v3674 = vadd.f32 %v3666, 1.0
    %v3675 = vadd.f32 %v3667, 1.0
    %v3676 = vmul.f32 %v3612, %v3668
    %v3677 = vmul.f32 %v3613, %v3669
    %v3678 = vmul.f32 %v3614, %v3670
    %v3679 = vmul.f32 %v3615, %v3671
    %v3680 = vmul.f32 %v3616, %v3672
    %v3681 = vmul.f32 %v3617, %v3673
    %v3682 = vmul.f32 %v3618, %v3674
    %v3683 = vmul.f32 %v3619, %v3675
    %v3684 = vld [vmem:[#allocation5] sm:$0xff]
    %v3685 = vld [vmem:[#allocation5 + $0x8] sm:$0xff]
    %v3686 = vld [vmem:[#allocation5 + $0x10] sm:$0xff]
    %v3687 = vld [vmem:[#allocation5 + $0x18] sm:$0xff]
    %v3688 = vld [vmem:[#allocation5 + $0x20] sm:$0xff]
    %v3689 = vld [vmem:[#allocation5 + $0x28] sm:$0xff]
    %v3690 = vld [vmem:[#allocation5 + $0x30] sm:$0xff]
    %v3691 = vld [vmem:[#allocation5 + $0x38] sm:$0xff]
    %v3692 = vld [vmem:[%s7] sm:$0x1]
    %v3694 = vlaneseq
    %v3695 = vshrl.u32 %v3694, 7
    %v3696 = vsub.s32 0, %v3695
    %v3697 = vrot.slane %v3692, %v3696
    %vm3699 = vcmask 523264
    %v3701 = vsel %vm3699, %v3676, 0
    %v3704 = vsel %vm3699, %v3677, 0
    %v3707 = vsel %vm3699, %v3678, 0
    %v3710 = vsel %vm3699, %v3679, 0
    %v3713 = vsel %vm3699, %v3680, 0
    %v3716 = vsel %vm3699, %v3681, 0
    %v3719 = vsel %vm3699, %v3682, 0
    %v3722 = vsel %vm3699, %v3683, 0
    %3724 = vmatprep.subr.mxu0 0.0
    %3725 = vmatpush1.msra.mxu0 %v3684
    %3726 = vmatprep.subr.mxu0 0.0
    %3727 = vmatpush1.msra.mxu0 %v3685
    %3728 = vmatprep.subr.mxu0 0.0
    %3729 = vmatpush1.msra.mxu0 %v3686
    %3730 = vmatprep.subr.mxu0 0.0
    %3731 = vmatpush1.msra.mxu0 %v3687
    %3732 = vmatprep.subr.mxu0 0.0
    %3733 = vmatpush1.msra.mxu0 %v3688
    %3734 = vmatprep.subr.mxu0 0.0
    %3735 = vmatpush1.msra.mxu0 %v3689
    %3736 = vmatprep.subr.mxu0 0.0
    %3737 = vmatpush1.msra.mxu0 %v3690
    %3738 = vmatprep.subr.mxu0 0.0
    %3739 = vmatpush1.msra.mxu0 %v3691
    %3740 = vmatprep.subr.mxu0 0.0
    %3741 = vmatpush1.msra.mxu0 0.0
    %3742 = vmatprep.subr.mxu0 0.0
    %3743 = vmatpush1.msra.mxu0 0.0
    %3744 = vmatprep.subr.mxu0 0.0
    %3745 = vmatpush1.msra.mxu0 0.0
    %3746 = vmatprep.subr.mxu0 0.0
    %3747 = vmatpush1.msra.mxu0 0.0
    %3748 = vmatprep.subr.mxu0 0.0
    %3749 = vmatpush1.msra.mxu0 0.0
    %3750 = vmatprep.subr.mxu0 0.0
    %3751 = vmatpush1.msra.mxu0 0.0
    %3752 = vmatprep.subr.mxu0 0.0
    %3753 = vmatpush1.msra.mxu0 0.0
    %3754 = vmatprep.subr.mxu0 0.0
    %3755 = vmatpush1.msra.mxu0 0.0
    %3756 = vmatprep.subr.mxu0 0.0
    %3757 = vmatpush1.msra.mxu0 0.0
    %3758 = vmatprep.subr.mxu0 0.0
    %3759 = vmatpush1.msra.mxu0 0.0
    %3760 = vmatprep.subr.mxu0 0.0
    %3761 = vmatpush1.msra.mxu0 0.0
    %3762 = vmatprep.subr.mxu0 0.0
    %3763 = vmatpush1.msra.mxu0 0.0
    %3764 = vmatprep.subr.mxu0 0.0
    %3765 = vmatpush1.msra.mxu0 0.0
    %3766 = vmatprep.subr.mxu0 0.0
    %3767 = vmatpush1.msra.mxu0 0.0
    %3768 = vmatprep.subr.mxu0 0.0
    %3769 = vmatpush1.msra.mxu0 0.0
    %3770 = vmatprep.subr.mxu0 0.0
    %3771 = vmatpush1.msra.mxu0 0.0
    %3772 = vmatprep.subr.mxu0 0.0
    %3773 = vmatpush1.msra.mxu0 0.0
    %3774 = vmatprep.subr.mxu0 0.0
    %3775 = vmatpush1.msra.mxu0 0.0
    %3776 = vmatprep.subr.mxu0 0.0
    %3777 = vmatpush1.msra.mxu0 0.0
    %3778 = vmatprep.subr.mxu0 0.0
    %3779 = vmatpush1.msra.mxu0 0.0
    %3780 = vmatprep.subr.mxu0 0.0
    %3781 = vmatpush1.msra.mxu0 0.0
    %3782 = vmatprep.subr.mxu0 0.0
    %3783 = vmatpush1.msra.mxu0 0.0
    %3784 = vmatprep.subr.mxu0 0.0
    %3785 = vmatpush1.msra.mxu0 0.0
    %3786 = vmatprep.subr.mxu0 0.0
    %3787 = vmatpush1.msra.mxu0 0.0
    %3788 = vmatprep.mubr.f32.mxu0 0.0
    %3789 = vmatmul.mubr.f32.gmra.mrb[0].mxu0 %v3701
    %v3790 = vpop.f32.mrb[0].mxu0
    %v3791 = vadd.f32 %v3697, %v3790
    %v3792 = vpop.f32.mrb[0].mxu0
    %3793 = vmatprep.mubr.f32.mxu0 0.0
    %3794 = vmatmul.mubr.f32.gmra.mrb[0].mxu0 %v3704
    %v3795 = vpop.f32.mrb[0].mxu0
    %v3796 = vadd.f32 %v3697, %v3795
    %v3797 = vpop.f32.mrb[0].mxu0
    %3798 = vmatprep.mubr.f32.mxu0 0.0
    %3799 = vmatmul.mubr.f32.gmra.mrb[0].mxu0 %v3707
    %v3800 = vpop.f32.mrb[0].mxu0
    %v3801 = vadd.f32 %v3697, %v3800
    %v3802 = vpop.f32.mrb[0].mxu0
    %3803 = vmatprep.mubr.f32.mxu0 0.0
    %3804 = vmatmul.mubr.f32.gmra.mrb[0].mxu0 %v3710
    %v3805 = vpop.f32.mrb[0].mxu0
    %v3806 = vadd.f32 %v3697, %v3805
    %v3807 = vpop.f32.mrb[0].mxu0
    %3808 = vmatprep.mubr.f32.mxu0 0.0
    %3809 = vmatmul.mubr.f32.gmra.mrb[0].mxu0 %v3713
    %v3810 = vpop.f32.mrb[0].mxu0
    %v3811 = vadd.f32 %v3697, %v3810
    %v3812 = vpop.f32.mrb[0].mxu0
    %3813 = vmatprep.mubr.f32.mxu0 0.0
    %3814 = vmatmul.mubr.f32.gmra.mrb[0].mxu0 %v3716
    %v3815 = vpop.f32.mrb[0].mxu0
    %v3816 = vadd.f32 %v3697, %v3815
    %v3817 = vpop.f32.mrb[0].mxu0
    %3818 = vmatprep.mubr.f32.mxu0 0.0
    %3819 = vmatmul.mubr.f32.gmra.mrb[0].mxu0 %v3719
    %v3820 = vpop.f32.mrb[0].mxu0
    %v3821 = vadd.f32 %v3697, %v3820
    %v3822 = vpop.f32.mrb[0].mxu0
    %3823 = vmatprep.mubr.f32.mxu0 0.0
    %3824 = vmatmul.mubr.f32.gmra.mrb[0].mxu0 %v3722
    %v3825 = vpop.f32.mrb[0].mxu0
    %v3826 = vadd.f32 %v3697, %v3825
    %v3827 = vpop.f32.mrb[0].mxu0
    %3828 = vdwg.mxu0
    %v3829 = vadd.f32 %v3464, %v3791
    %v3830 = vadd.f32 %v3465, %v3796
    %v3831 = vadd.f32 %v3466, %v3801
    %v3832 = vadd.f32 %v3467, %v3806
    %v3833 = vadd.f32 %v3468, %v3811
    %v3834 = vadd.f32 %v3469, %v3816
    %v3835 = vadd.f32 %v3470, %v3821
    %v3836 = vadd.f32 %v3471, %v3826
    %v3837 = vld [vmem:[%s8] sm:$0x1]
    %v3838 = vld [vmem:[%s9] sm:$0x1]
    %v3839 = vsel %vm352, %v3829, 0.0
    %3840 = vadd.xlane.f32.xlu0 %v3839
    %v3841 = vpop.xlane.xlu0 %3840
    %v3842 = vsel %vm352, %v3830, 0.0
    %3843 = vadd.xlane.f32.xlu0 %v3842
    %v3844 = vpop.xlane.xlu0 %3843
    %v3845 = vsel %vm352, %v3831, 0.0
    %3846 = vadd.xlane.f32.xlu0 %v3845
    %v3847 = vpop.xlane.xlu0 %3846
    %v3848 = vsel %vm352, %v3832, 0.0
    %3849 = vadd.xlane.f32.xlu0 %v3848
    %v3850 = vpop.xlane.xlu0 %3849
    %v3851 = vsel %vm352, %v3833, 0.0
    %3852 = vadd.xlane.f32.xlu0 %v3851
    %v3853 = vpop.xlane.xlu0 %3852
    %v3854 = vsel %vm352, %v3834, 0.0
    %3855 = vadd.xlane.f32.xlu0 %v3854
    %v3856 = vpop.xlane.xlu0 %3855
    %v3857 = vsel %vm352, %v3835, 0.0
    %3858 = vadd.xlane.f32.xlu0 %v3857
    %v3859 = vpop.xlane.xlu0 %3858
    %v3860 = vsel %vm352, %v3836, 0.0
    %3861 = vadd.xlane.f32.xlu0 %v3860
    %v3862 = vpop.xlane.xlu0 %3861
    %v3863 = vmul.f32 %v3841, %v3363
    %v3864 = vmul.f32 %v3844, %v3363
    %v3865 = vmul.f32 %v3847, %v3363
    %v3866 = vmul.f32 %v3850, %v3363
    %v3867 = vmul.f32 %v3853, %v3363
    %v3868 = vmul.f32 %v3856, %v3363
    %v3869 = vmul.f32 %v3859, %v3363
    %v3870 = vmul.f32 %v3862, %v3363
    %v3871 = vsub.f32 %v3829, %v3863
    %v3872 = vsub.f32 %v3830, %v3864
    %v3873 = vsub.f32 %v3831, %v3865
    %v3874 = vsub.f32 %v3832, %v3866
    %v3875 = vsub.f32 %v3833, %v3867
    %v3876 = vsub.f32 %v3834, %v3868
    %v3877 = vsub.f32 %v3835, %v3869
    %v3878 = vsub.f32 %v3836, %v3870
    %v3879 = vmul.f32 %v3871, %v3871
    %v3880 = vmul.f32 %v3872, %v3872
    %v3881 = vmul.f32 %v3873, %v3873
    %v3882 = vmul.f32 %v3874, %v3874
    %v3883 = vmul.f32 %v3875, %v3875
    %v3884 = vmul.f32 %v3876, %v3876
    %v3885 = vmul.f32 %v3877, %v3877
    %v3886 = vmul.f32 %v3878, %v3878
    %v3887 = vsel %vm352, %v3879, 0.0
    %3888 = vadd.xlane.f32.xlu0 %v3887
    %v3889 = vpop.xlane.xlu0 %3888
    %v3890 = vsel %vm352, %v3880, 0.0
    %3891 = vadd.xlane.f32.xlu0 %v3890
    %v3892 = vpop.xlane.xlu0 %3891
    %v3893 = vsel %vm352, %v3881, 0.0
    %3894 = vadd.xlane.f32.xlu0 %v3893
    %v3895 = vpop.xlane.xlu0 %3894
    %v3896 = vsel %vm352, %v3882, 0.0
    %3897 = vadd.xlane.f32.xlu0 %v3896
    %v3898 = vpop.xlane.xlu0 %3897
    %v3899 = vsel %vm352, %v3883, 0.0
    %3900 = vadd.xlane.f32.xlu0 %v3899
    %v3901 = vpop.xlane.xlu0 %3900
    %v3902 = vsel %vm352, %v3884, 0.0
    %3903 = vadd.xlane.f32.xlu0 %v3902
    %v3904 = vpop.xlane.xlu0 %3903
    %v3905 = vsel %vm352, %v3885, 0.0
    %3906 = vadd.xlane.f32.xlu0 %v3905
    %v3907 = vpop.xlane.xlu0 %3906
    %v3908 = vsel %vm352, %v3886, 0.0
    %3909 = vadd.xlane.f32.xlu0 %v3908
    %v3910 = vpop.xlane.xlu0 %3909
    %v3911 = vmul.f32 %v3889, %v3363
    %v3912 = vmul.f32 %v3892, %v3363
    %v3913 = vmul.f32 %v3895, %v3363
    %v3914 = vmul.f32 %v3898, %v3363
    %v3915 = vmul.f32 %v3901, %v3363
    %v3916 = vmul.f32 %v3904, %v3363
    %v3917 = vmul.f32 %v3907, %v3363
    %v3918 = vmul.f32 %v3910, %v3363
    %v3919 = vadd.f32 %v3911, 1e-07
    %v3920 = vadd.f32 %v3912, 1e-07
    %v3921 = vadd.f32 %v3913, 1e-07
    %v3922 = vadd.f32 %v3914, 1e-07
    %v3923 = vadd.f32 %v3915, 1e-07
    %v3924 = vadd.f32 %v3916, 1e-07
    %v3925 = vadd.f32 %v3917, 1e-07
    %v3926 = vadd.f32 %v3918, 1e-07
    %v3927 = vrsqrt.pop %v3919
    %v3928 = vrsqrt.pop %v3920
    %v3929 = vrsqrt.pop %v3921
    %v3930 = vrsqrt.pop %v3922
    %v3931 = vrsqrt.pop %v3923
    %v3932 = vrsqrt.pop %v3924
    %v3933 = vrsqrt.pop %v3925
    %v3934 = vrsqrt.pop %v3926
    %v3935 = vmul.f32 %v3871, %v3927
    %v3936 = vmul.f32 %v3872, %v3928
    %v3937 = vmul.f32 %v3873, %v3929
    %v3938 = vmul.f32 %v3874, %v3930
    %v3939 = vmul.f32 %v3875, %v3931
    %v3940 = vmul.f32 %v3876, %v3932
    %v3941 = vmul.f32 %v3877, %v3933
    %v3942 = vmul.f32 %v3878, %v3934
    %v3944 = vlaneseq
    %v3945 = vshrl.u32 %v3944, 7
    %v3946 = vsub.s32 0, %v3945
    %v3947 = vrot.slane %v3837, %v3946
    %v3949 = vmul.f32 %v3935, %v3947
    %v3950 = vmul.f32 %v3936, %v3947
    %v3951 = vmul.f32 %v3937, %v3947
    %v3952 = vmul.f32 %v3938, %v3947
    %v3953 = vmul.f32 %v3939, %v3947
    %v3954 = vmul.f32 %v3940, %v3947
    %v3955 = vmul.f32 %v3941, %v3947
    %v3956 = vmul.f32 %v3942, %v3947
    %v3958 = vlaneseq
    %v3959 = vshrl.u32 %v3958, 7
    %v3960 = vsub.s32 0, %v3959
    %v3961 = vrot.slane %v3838, %v3960
    %v3963 = vadd.f32 %v3949, %v3961
    %v3964 = vadd.f32 %v3950, %v3961
    %v3965 = vadd.f32 %v3951, %v3961
    %v3966 = vadd.f32 %v3952, %v3961
    %v3967 = vadd.f32 %v3953, %v3961
    %v3968 = vadd.f32 %v3954, %v3961
    %v3969 = vadd.f32 %v3955, %v3961
    %v3970 = vadd.f32 %v3956, %v3961
    %3971 = vst.msk [vmem:[#allocation11] sm:$0xff] %vm352, %v3963
    %3972 = vst.msk [vmem:[#allocation11 + $0x8] sm:$0xff] %vm352, %v3964
    %3973 = vst.msk [vmem:[#allocation11 + $0x10] sm:$0xff] %vm352, %v3965
    %3974 = vst.msk [vmem:[#allocation11 + $0x18] sm:$0xff] %vm352, %v3966
    %3975 = vst.msk [vmem:[#allocation11 + $0x20] sm:$0xff] %vm352, %v3967
    %3976 = vst.msk [vmem:[#allocation11 + $0x28] sm:$0xff] %vm352, %v3968
    %3977 = vst.msk [vmem:[#allocation11 + $0x30] sm:$0xff] %vm352, %v3969
    %3978 = vst.msk [vmem:[#allocation11 + $0x38] sm:$0xff] %vm352, %v3970
    // Predicated region
    $region126: #{tpu_custom_call.1} parent=1 // pred_check
      _
    $region127: #{tpu_custom_call.1} parent=1 // pred_check_branch
      %3980 = sbr.rel (0) target = $region129
    $region128: #{tpu_custom_call.1} parent=1 // pred_region
      %s3982 = ssub.s32 1024, 1024
      %3983 = vsyncadd [#allocation10], %s3982
      %s3984 = sshll.u32 [#allocation11], 4
      %s3985 = int_to_ptr.vmem [resolvable:$true] %s3984
      %3990 = dma.vmem_to_hbm [thread:$0]  %s3985, 1024, %s14, [#allocation10], 128, 128, 8
    $region129: #{tpu_custom_call.1} parent=1 // pred_fallthru
      _
    // Predicated region
    $region130: #{tpu_custom_call.1} parent=1 // pred_check
      _
    $region131: #{tpu_custom_call.1} parent=1 // pred_check_branch
      %3992 = sbr.rel (0) target = $region133
    $region132: #{tpu_custom_call.1} parent=1 // pred_region
      %3993 = dma.done [#allocation10], 1024
    $region133: #{tpu_custom_call.1} parent=1 // pred_fallthru
      _
    %3994 = vsyncpa [#allocation9], 1
    %3995 = vsyncpa [#allocation10], 1
  %3996 = vsyncmov [#allocation7]
  %s3997 = vpop.sfrf %3996
  %p3998 = scmp.eq.s32.totalorder %s3997, 0
  %p3999 = pneg %p3998
  %4001 = shalt.err (%p3999)
  %s4002 = scalar_lea.sflag [#allocation7], 1
  %4003 = vsyncmov %s4002
  %s4004 = vpop.sfrf %4003
  %p4005 = scmp.eq.s32.totalorder %s4004, 0
  %p4006 = pneg %p4005
  %4008 = shalt.err (%p4006)
  %s4009 = scalar_lea.sflag [#allocation7], 2
  %4010 = vsyncmov %s4009
  %s4011 = vpop.sfrf %4010
  %p4012 = scmp.eq.s32.totalorder %s4011, 0
  %p4013 = pneg %p4012
  %4015 = shalt.err (%p4013)
  %s4016 = scalar_lea.sflag [#allocation7], 3
  %4017 = vsyncmov %s4016
  %s4018 = vpop.sfrf %4017
  %p4019 = scmp.eq.s32.totalorder %s4018, 0
  %p4020 = pneg %p4019
  %4022 = shalt.err (%p4020)

</llo_original>
